<compile_context>
chip_gen: v7x
topology: tpu7x:2x2x1
jax: 0.10.0
libtpu: 0.0.40
codegen_flags: <defaults>
</compile_context>

<pallas_src>
import functools

import jax
import jax.numpy as jnp
from jax import lax
from jax.experimental import pallas as pl
from jax.experimental.pallas import tpu as pltpu


# ----------------------------------------------------------------------------
# Fused forward kernel builder
# ----------------------------------------------------------------------------
def _build_fused_kernel(n_layers, T, Bp, H):
    """Build the fused IcuModel forward kernel for a static configuration."""

    def lstm_pass(gin_ref, whh, reverse, hseq_ref, h_sc, c_sc):
        """One LSTM direction over the full sequence.

        gin_ref : (T*Bp, 4H) f32 VMEM ref with the x-side gate pre-activations
                  (input projection + folded bias), already computed.
        whh     : (H, 4H) bf16 value (recurrent weights, pre-transposed).
        Returns the final hidden state (Bp, H) f32.
        """
        h_sc[...] = jnp.zeros_like(h_sc)
        c_sc[...] = jnp.zeros_like(c_sc)

        def step(i, carry):
            t = (T - 1 - i) if reverse else i          # reversed indexing for bwd dir
            row = pl.multiple_of(t * Bp, Bp)
            gates = gin_ref[pl.ds(row, Bp), :] + jnp.dot(
                h_sc[...].astype(jnp.bfloat16), whh,
                preferred_element_type=jnp.float32)
            # Nonlinearities on the full (Bp, 4H) lane-wide value, slice after.
            # PyTorch gate order: i, f, g, o.
            sig = jax.nn.sigmoid(gates)
            tnh = jnp.tanh(gates)
            i_g = sig[:, 0 * H:1 * H]
            f_g = sig[:, 1 * H:2 * H]
            g_g = tnh[:, 2 * H:3 * H]
            o_g = sig[:, 3 * H:4 * H]
            c_new = f_g * c_sc[...] + i_g * g_g
            h_new = o_g * jnp.tanh(c_new)
            c_sc[...] = c_new
            h_sc[...] = h_new
            if hseq_ref is not None:
                hseq_ref[pl.ds(row, Bp), :] = h_new
            return carry

        lax.fori_loop(0, T, step, 0, unroll=True)
        return h_sc[...]

    def kernel(*refs):
        # ---- parse the flat ref list --------------------------------------
        pos = 0
        x_ref = refs[pos]; pos += 1
        layers = []
        for l in range(n_layers):
            n_per_dir = 3 if l == 0 else 4
            fwd = refs[pos:pos + n_per_dir]; pos += n_per_dir
            bwd = refs[pos:pos + n_per_dir]; pos += n_per_dir
            layers.append((fwd, bwd))
        wcf_ref, wcb_ref, bc_ref = refs[pos:pos + 3]; pos += 3
        out_ref = refs[pos]; pos += 1
        gin_sc, h_sc, c_sc = refs[pos:pos + 3]; pos += 3
        hs_bufs = refs[pos:]

        if n_layers == 1:
            cur, nxt = (None, None), (None, None)
        elif n_layers == 2:
            cur, nxt = (hs_bufs[0], hs_bufs[1]), (None, None)
        else:
            cur, nxt = (hs_bufs[0], hs_bufs[1]), (hs_bufs[2], hs_bufs[3])

        prev_f = prev_b = None        # previous layer's hidden sequences
        h_last_f = h_last_b = None

        # ---- stacked bidirectional LSTM ------------------------------------
        # TODO(synk): inter-layer dropout omitted (inference / dropout=0.0 -> identity).
        for l, (fwd_p, bwd_p) in enumerate(layers):
            is_last = l == n_layers - 1
            for d, par in enumerate((fwd_p, bwd_p)):
                if l == 0:
                    wih, whh, b = par
                    # batched input projection for all T steps at once
                    gin_sc[...] = jnp.dot(
                        x_ref[...], wih[...],
                        preferred_element_type=jnp.float32) + b[...]
                else:
                    w_top, w_bot, whh, b = par
                    # concat([h_fwd, h_bwd]) @ W_ih folded into two half-matmuls
                    gin_sc[...] = (
                        jnp.dot(prev_f[...].astype(jnp.bfloat16), w_top[...],
                                preferred_element_type=jnp.float32)
                        + jnp.dot(prev_b[...].astype(jnp.bfloat16), w_bot[...],
                                  preferred_element_type=jnp.float32)
                        + b[...])
                hseq_ref = None if is_last else cur[d]
                h_last = lstm_pass(gin_sc, whh[...], d == 1, hseq_ref, h_sc, c_sc)
                if d == 0:
                    h_last_f = h_last
                else:
                    h_last_b = h_last
            prev_f, prev_b = cur
            cur, nxt = nxt, cur

        # ---- classifier on cat(hidden[-2], hidden[-1]) ----------------------
        out_ref[...] = (
            jnp.dot(h_last_f.astype(jnp.bfloat16), wcf_ref[...],
                    preferred_element_type=jnp.float32)
            + jnp.dot(h_last_b.astype(jnp.bfloat16), wcb_ref[...],
                      preferred_element_type=jnp.float32)
            + bc_ref[...])

    return kernel


# ----------------------------------------------------------------------------
# Forward wrapper
# ----------------------------------------------------------------------------
def icu_model_forward(x, params, n_classes):
    """x: (B, T, F) float32 -> logits (B, n_classes)."""
    # nn.LSTM.flatten_parameters(): CUDA memory-layout hint, no-op here.
    B, T, F = x.shape
    layers = params["layers"]
    n_layers = len(layers)
    H = layers[0]["fwd"][1].shape[0]        # whh_t is (H, 4H)
    Cp = params["cls"][2].shape[1]          # lane-padded class dim
    Bp = ((B + 7) // 8) * 8                 # pad batch to a full sublane group

    # time-major, batch-padded, flattened to (T*Bp, F) rows, bf16 MXU operand
    x_tm = jnp.transpose(x, (1, 0, 2))
    x_tm = jnp.pad(x_tm, ((0, 0), (0, Bp - B), (0, 0)))
    x_flat = x_tm.reshape(T * Bp, F).astype(jnp.bfloat16)

    flat_inputs = [x_flat]
    for layer in layers:
        flat_inputs.extend(layer["fwd"])
        flat_inputs.extend(layer["bwd"])
    flat_inputs.extend(params["cls"])

    num_hs = 0 if n_layers == 1 else (2 if n_layers == 2 else 4)
    scratch_shapes = [
        pltpu.VMEM((T * Bp, 4 * H), jnp.float32),   # gate pre-activations (reused)
        pltpu.VMEM((Bp, H), jnp.float32),           # h state
        pltpu.VMEM((Bp, H), jnp.float32),           # c state
    ] + [pltpu.VMEM((T * Bp, H), jnp.float32)] * num_hs  # layer hidden sequences

    out = pl.pallas_call(
        _build_fused_kernel(n_layers, T, Bp, H),
        out_shape=jax.ShapeDtypeStruct((Bp, Cp), jnp.float32),
        scratch_shapes=scratch_shapes,
    )(*flat_inputs)
    return out[:B, :n_classes]


# ----------------------------------------------------------------------------
# Parameter init (PyTorch-style raw params) + one-time kernel-ready prep
# ----------------------------------------------------------------------------
def init_params(key, n_features, n_hidden, n_layers, n_classes):
    """PyTorch-style raw parameters, U(-1/sqrt(H), 1/sqrt(H))."""
    H = n_hidden
    k = 1.0 / jnp.sqrt(jnp.float32(H))

    def uni(kk, shape, bound):
        return jax.random.uniform(kk, shape, jnp.float32, -bound, bound)

    layers = []
    for l in range(n_layers):
        fin = n_features if l == 0 else 2 * H
        dirs = {}
        for d in ("fwd", "bwd"):
            key, k1, k2, k3, k4 = jax.random.split(key, 5)
            dirs[d] = (uni(k1, (4 * H, fin), k),   # w_ih
                       uni(k2, (4 * H, H), k),     # w_hh
                       uni(k3, (4 * H,), k),       # b_ih
                       uni(k4, (4 * H,), k))       # b_hh
        layers.append(dirs)
    key, kw, kb = jax.random.split(key, 3)
    kc = 1.0 / jnp.sqrt(jnp.float32(2 * H))
    cls_w = uni(kw, (n_classes, 2 * H), kc)
    cls_b = uni(kb, (n_classes,), kc)
    return {"lstm": layers, "cls_w": cls_w, "cls_b": cls_b}, key


def prepare_params(raw):
    """One-time conversion to the kernel-ready layout: transpose weights, fold
    biases, split layer>0 input weights into fwd/bwd halves, pad the classifier
    to 128 lanes, and cast MXU operands to bf16."""
    H = raw["lstm"][0]["fwd"][1].shape[1]   # w_hh is (4H, H)
    layers = []
    for l, layer in enumerate(raw["lstm"]):
        entry = {}
        for d in ("fwd", "bwd"):
            w_ih, w_hh, b_ih, b_hh = layer[d]
            wih_t = jnp.transpose(w_ih).astype(jnp.bfloat16)      # (F_in, 4H)
            whh_t = jnp.transpose(w_hh).astype(jnp.bfloat16)      # (H, 4H)
            bias = (b_ih + b_hh)[None, :].astype(jnp.float32)     # (1, 4H)
            if l == 0:
                entry[d] = (wih_t, whh_t, bias)
            else:  # split so the kernel never concatenates [h_fwd, h_bwd]
                entry[d] = (wih_t[:H], wih_t[H:], whh_t, bias)
        layers.append(entry)
    C = raw["cls_w"].shape[0]
    Cp = ((C + 127) // 128) * 128
    wc_t = jnp.transpose(raw["cls_w"])                            # (2H, C)
    wc_t = jnp.pad(wc_t, ((0, 0), (0, Cp - C))).astype(jnp.bfloat16)
    bc = jnp.pad(raw["cls_b"], (0, Cp - C))[None, :].astype(jnp.float32)
    return {"layers": layers, "cls": (wc_t[:H], wc_t[H:], bc)}


# ----------------------------------------------------------------------------
# Pure-JAX reference (same math, lax.scan) for a correctness sanity check.
# ----------------------------------------------------------------------------
def _ref_lstm_dir(x_tm, w_ih, w_hh, b_ih, b_hh):
    T, B, _ = x_tm.shape
    H = w_hh.shape[1]

    def step(carry, x_t):
        h, c = carry
        gates = (jnp.dot(x_t, w_ih.T, precision=lax.Precision.HIGHEST)
                 + jnp.dot(h, w_hh.T, precision=lax.Precision.HIGHEST)
                 + b_ih + b_hh)
        i = jax.nn.sigmoid(gates[:, :H])
        f = jax.nn.sigmoid(gates[:, H:2 * H])
        g = jnp.tanh(gates[:, 2 * H:3 * H])
        o = jax.nn.sigmoid(gates[:, 3 * H:])
        c = f * c + i * g
        h = o * jnp.tanh(c)
        return (h, c), h

    init = (jnp.zeros((B, H), jnp.float32), jnp.zeros((B, H), jnp.float32))
    (h, _), hseq = lax.scan(step, init, x_tm)
    return hseq, h


def reference_forward(x, raw):
    inp = jnp.transpose(x, (1, 0, 2))
    h_f = h_b = None
    for layer in raw["lstm"]:
        hseq_f, h_f = _ref_lstm_dir(inp, *layer["fwd"])
        hseq_b_r, h_b = _ref_lstm_dir(inp[::-1], *layer["bwd"])
        inp = jnp.concatenate([hseq_f, hseq_b_r[::-1]], axis=-1)
    out = jnp.concatenate([h_f, h_b], axis=1)
    return jnp.dot(out, raw["cls_w"].T, precision=lax.Precision.HIGHEST) + raw["cls_b"]


if __name__ == "__main__":
    # ModelConfig: n_features=8, n_hidden=32, n_layers=2, dropout=0.0,
    #              bidirectional=True, n_classes=4
    B, T, F, H, L, C = 2, 8, 8, 32, 2, 4

    key = jax.random.PRNGKey(0)
    raw, key = init_params(key, F, H, L, C)
    params = prepare_params(raw)
    key, xk = jax.random.split(key)
    x = jax.random.normal(xk, (B, T, F), jnp.float32)

    fwd = jax.jit(functools.partial(icu_model_forward, n_classes=C))
    logits = jax.block_until_ready(fwd(x, params))

    assert logits.shape == (B, C), logits.shape
    ref = reference_forward(x, raw)
    # bf16 MXU operands vs. f32 HIGHEST-precision reference -> loose tolerance.
    if not jnp.allclose(logits, ref, atol=2e-2, rtol=2e-2):
        raise RuntimeError(f"mismatch vs reference:\n{logits}\nvs\n{ref}")

    print("KERNEL_OK")
</pallas_src>

<mosaic_0001>
module attributes {stable_mosaic.version = 11 : i64} {
  func.func @kernel(%arg0: memref<64x8xbf16, #tpu.memory_space<vmem>>, %arg1: memref<8x128xbf16, #tpu.memory_space<vmem>>, %arg2: memref<32x128xbf16, #tpu.memory_space<vmem>>, %arg3: memref<1x128xf32, #tpu.memory_space<vmem>>, %arg4: memref<8x128xbf16, #tpu.memory_space<vmem>>, %arg5: memref<32x128xbf16, #tpu.memory_space<vmem>>, %arg6: memref<1x128xf32, #tpu.memory_space<vmem>>, %arg7: memref<32x128xbf16, #tpu.memory_space<vmem>>, %arg8: memref<32x128xbf16, #tpu.memory_space<vmem>>, %arg9: memref<32x128xbf16, #tpu.memory_space<vmem>>, %arg10: memref<1x128xf32, #tpu.memory_space<vmem>>, %arg11: memref<32x128xbf16, #tpu.memory_space<vmem>>, %arg12: memref<32x128xbf16, #tpu.memory_space<vmem>>, %arg13: memref<32x128xbf16, #tpu.memory_space<vmem>>, %arg14: memref<1x128xf32, #tpu.memory_space<vmem>>, %arg15: memref<32x128xbf16, #tpu.memory_space<vmem>>, %arg16: memref<32x128xbf16, #tpu.memory_space<vmem>>, %arg17: memref<1x128xf32, #tpu.memory_space<vmem>>, %arg18: memref<8x128xf32, #tpu.memory_space<vmem>>, %arg19: memref<64x128xf32, #tpu.memory_space<vmem>>, %arg20: memref<8x32xf32, #tpu.memory_space<vmem>>, %arg21: memref<8x32xf32, #tpu.memory_space<vmem>>, %arg22: memref<64x32xf32, #tpu.memory_space<vmem>>, %arg23: memref<64x32xf32, #tpu.memory_space<vmem>>) attributes {dimension_semantics = [], scalar_prefetch = 0 : i64, scratch_operands = 5 : i64, tpu.core_type = #tpu.core_type<tc>} {
    %c0 = arith.constant 0 : index
    %c0_0 = arith.constant 0 : index
    %0 = vector.load %arg0[%c0, %c0_0] : memref<64x8xbf16, #tpu.memory_space<vmem>>, vector<64x8xbf16>
    %c0_1 = arith.constant 0 : index
    %c0_2 = arith.constant 0 : index
    %1 = vector.load %arg1[%c0_1, %c0_2] : memref<8x128xbf16, #tpu.memory_space<vmem>>, vector<8x128xbf16>
    %cst = arith.constant dense<0.000000e+00> : vector<64x128xf32>
    %2 = tpu.matmul %0, %1, %cst {dimension_numbers = #tpu.dot_dimension_numbers<[1], [0], [0], [1], [0, 0, 1, 1], [], []>} : vector<64x8xbf16>, vector<8x128xbf16>, vector<64x128xf32> -> vector<64x128xf32>
    %c0_3 = arith.constant 0 : index
    %c0_4 = arith.constant 0 : index
    %3 = vector.load %arg3[%c0_3, %c0_4] : memref<1x128xf32, #tpu.memory_space<vmem>>, vector<1x128xf32>
    %4 = vector.broadcast %3 : vector<1x128xf32> to vector<64x128xf32>
    %5 = arith.addf %2, %4 : vector<64x128xf32>
    %c0_5 = arith.constant 0 : index
    %c0_6 = arith.constant 0 : index
    %6 = vector.load %arg19[%c0_5, %c0_6] : memref<64x128xf32, #tpu.memory_space<vmem>>, vector<64x128xf32>
    tpu.vector_store %arg19[%c0_5, %c0_6], %5 {strides = array<i32>} : memref<64x128xf32, #tpu.memory_space<vmem>>, vector<64x128xf32>,
    %c0_7 = arith.constant 0 : index
    %c0_8 = arith.constant 0 : index
    %7 = vector.load %arg2[%c0_7, %c0_8] : memref<32x128xbf16, #tpu.memory_space<vmem>>, vector<32x128xbf16>
    %cst_9 = arith.constant 0.000000e+00 : f32
    %8 = vector.broadcast %cst_9 : f32 to vector<8x32xf32>
    %c0_10 = arith.constant 0 : index
    %c0_11 = arith.constant 0 : index
    %9 = vector.load %arg20[%c0_10, %c0_11] : memref<8x32xf32, #tpu.memory_space<vmem>>, vector<8x32xf32>
    tpu.vector_store %arg20[%c0_10, %c0_11], %8 {strides = array<i32>} : memref<8x32xf32, #tpu.memory_space<vmem>>, vector<8x32xf32>,
    %cst_12 = arith.constant 0.000000e+00 : f32
    %10 = vector.broadcast %cst_12 : f32 to vector<8x32xf32>
    %c0_13 = arith.constant 0 : index
    %c0_14 = arith.constant 0 : index
    %11 = vector.load %arg21[%c0_13, %c0_14] : memref<8x32xf32, #tpu.memory_space<vmem>>, vector<8x32xf32>
    tpu.vector_store %arg21[%c0_13, %c0_14], %10 {strides = array<i32>} : memref<8x32xf32, #tpu.memory_space<vmem>>, vector<8x32xf32>,
    %c0_i32 = arith.constant 0 : i32
    %c8_i32 = arith.constant 8 : i32
    %12 = arith.muli %c0_i32, %c8_i32 : i32
    %13 = tpu.assume_multiple %12, 8 : i32
    %14 = arith.index_cast %13 : i32 to index
    %c0_15 = arith.constant 0 : index
    %15 = vector.load %arg19[%14, %c0_15] : memref<64x128xf32, #tpu.memory_space<vmem>>, vector<8x128xf32>
    %c0_16 = arith.constant 0 : index
    %c0_17 = arith.constant 0 : index
    %16 = vector.load %arg20[%c0_16, %c0_17] : memref<8x32xf32, #tpu.memory_space<vmem>>, vector<8x32xf32>
    %17 = arith.truncf %16 : vector<8x32xf32> to vector<8x32xbf16>
    %cst_18 = arith.constant dense<0.000000e+00> : vector<8x128xf32>
    %18 = tpu.matmul %17, %7, %cst_18 {dimension_numbers = #tpu.dot_dimension_numbers<[1], [0], [0], [1], [0, 0, 1, 1], [], []>} : vector<8x32xbf16>, vector<32x128xbf16>, vector<8x128xf32> -> vector<8x128xf32>
    %19 = arith.addf %15, %18 : vector<8x128xf32>
    %20 = arith.negf %19 : vector<8x128xf32>
    %21 = math.exp %20 : vector<8x128xf32>
    %cst_19 = arith.constant 1.000000e+00 : f32
    %22 = vector.broadcast %cst_19 : f32 to vector<8x128xf32>
    %23 = arith.addf %22, %21 : vector<8x128xf32>
    %24 = arith.divf %22, %23 : vector<8x128xf32>
    %25 = math.tanh %19 : vector<8x128xf32>
    %26 = vector.extract_strided_slice %24 {offsets = [0, 0], sizes = [8, 32], strides = [1, 1]} : vector<8x128xf32> to vector<8x32xf32>
    %27 = vector.extract_strided_slice %24 {offsets = [0, 32], sizes = [8, 32], strides = [1, 1]} : vector<8x128xf32> to vector<8x32xf32>
    %28 = vector.extract_strided_slice %25 {offsets = [0, 64], sizes = [8, 32], strides = [1, 1]} : vector<8x128xf32> to vector<8x32xf32>
    %29 = vector.extract_strided_slice %24 {offsets = [0, 96], sizes = [8, 32], strides = [1, 1]} : vector<8x128xf32> to vector<8x32xf32>
    %c0_20 = arith.constant 0 : index
    %c0_21 = arith.constant 0 : index
    %30 = vector.load %arg21[%c0_20, %c0_21] : memref<8x32xf32, #tpu.memory_space<vmem>>, vector<8x32xf32>
    %31 = arith.mulf %27, %30 : vector<8x32xf32>
    %32 = arith.mulf %26, %28 : vector<8x32xf32>
    %33 = arith.addf %31, %32 : vector<8x32xf32>
    %34 = math.tanh %33 : vector<8x32xf32>
    %35 = arith.mulf %29, %34 : vector<8x32xf32>
    %c0_22 = arith.constant 0 : index
    %c0_23 = arith.constant 0 : index
    %36 = vector.load %arg21[%c0_22, %c0_23] : memref<8x32xf32, #tpu.memory_space<vmem>>, vector<8x32xf32>
    tpu.vector_store %arg21[%c0_22, %c0_23], %33 {strides = array<i32>} : memref<8x32xf32, #tpu.memory_space<vmem>>, vector<8x32xf32>,
    %c0_24 = arith.constant 0 : index
    %c0_25 = arith.constant 0 : index
    %37 = vector.load %arg20[%c0_24, %c0_25] : memref<8x32xf32, #tpu.memory_space<vmem>>, vector<8x32xf32>
    tpu.vector_store %arg20[%c0_24, %c0_25], %35 {strides = array<i32>} : memref<8x32xf32, #tpu.memory_space<vmem>>, vector<8x32xf32>,
    %38 = arith.index_cast %13 : i32 to index
    %c0_26 = arith.constant 0 : index
    %39 = vector.load %arg22[%38, %c0_26] : memref<64x32xf32, #tpu.memory_space<vmem>>, vector<8x32xf32>
    tpu.vector_store %arg22[%38, %c0_26], %35 {strides = array<i32>} : memref<64x32xf32, #tpu.memory_space<vmem>>, vector<8x32xf32>,
    %c1_i32 = arith.constant 1 : i32
    %c8_i32_27 = arith.constant 8 : i32
    %40 = arith.muli %c1_i32, %c8_i32_27 : i32
    %41 = tpu.assume_multiple %40, 8 : i32
    %42 = arith.index_cast %41 : i32 to index
    %c0_28 = arith.constant 0 : index
    %43 = vector.load %arg19[%42, %c0_28] : memref<64x128xf32, #tpu.memory_space<vmem>>, vector<8x128xf32>
    %c0_29 = arith.constant 0 : index
    %c0_30 = arith.constant 0 : index
    %44 = vector.load %arg20[%c0_29, %c0_30] : memref<8x32xf32, #tpu.memory_space<vmem>>, vector<8x32xf32>
    %45 = arith.truncf %44 : vector<8x32xf32> to vector<8x32xbf16>
    %cst_31 = arith.constant dense<0.000000e+00> : vector<8x128xf32>
    %46 = tpu.matmul %45, %7, %cst_31 {dimension_numbers = #tpu.dot_dimension_numbers<[1], [0], [0], [1], [0, 0, 1, 1], [], []>} : vector<8x32xbf16>, vector<32x128xbf16>, vector<8x128xf32> -> vector<8x128xf32>
    %47 = arith.addf %43, %46 : vector<8x128xf32>
    %48 = arith.negf %47 : vector<8x128xf32>
    %49 = math.exp %48 : vector<8x128xf32>
    %cst_32 = arith.constant 1.000000e+00 : f32
    %50 = vector.broadcast %cst_32 : f32 to vector<8x128xf32>
    %51 = arith.addf %50, %49 : vector<8x128xf32>
    %52 = arith.divf %50, %51 : vector<8x128xf32>
    %53 = math.tanh %47 : vector<8x128xf32>
    %54 = vector.extract_strided_slice %52 {offsets = [0, 0], sizes = [8, 32], strides = [1, 1]} : vector<8x128xf32> to vector<8x32xf32>
    %55 = vector.extract_strided_slice %52 {offsets = [0, 32], sizes = [8, 32], strides = [1, 1]} : vector<8x128xf32> to vector<8x32xf32>
    %56 = vector.extract_strided_slice %53 {offsets = [0, 64], sizes = [8, 32], strides = [1, 1]} : vector<8x128xf32> to vector<8x32xf32>
    %57 = vector.extract_strided_slice %52 {offsets = [0, 96], sizes = [8, 32], strides = [1, 1]} : vector<8x128xf32> to vector<8x32xf32>
    %c0_33 = arith.constant 0 : index
    %c0_34 = arith.constant 0 : index
    %58 = vector.load %arg21[%c0_33, %c0_34] : memref<8x32xf32, #tpu.memory_space<vmem>>, vector<8x32xf32>
    %59 = arith.mulf %55, %58 : vector<8x32xf32>
    %60 = arith.mulf %54, %56 : vector<8x32xf32>
    %61 = arith.addf %59, %60 : vector<8x32xf32>
    %62 = math.tanh %61 : vector<8x32xf32>
    %63 = arith.mulf %57, %62 : vector<8x32xf32>
    %c0_35 = arith.constant 0 : index
    %c0_36 = arith.constant 0 : index
    %64 = vector.load %arg21[%c0_35, %c0_36] : memref<8x32xf32, #tpu.memory_space<vmem>>, vector<8x32xf32>
    tpu.vector_store %arg21[%c0_35, %c0_36], %61 {strides = array<i32>} : memref<8x32xf32, #tpu.memory_space<vmem>>, vector<8x32xf32>,
    %c0_37 = arith.constant 0 : index
    %c0_38 = arith.constant 0 : index
    %65 = vector.load %arg20[%c0_37, %c0_38] : memref<8x32xf32, #tpu.memory_space<vmem>>, vector<8x32xf32>
    tpu.vector_store %arg20[%c0_37, %c0_38], %63 {strides = array<i32>} : memref<8x32xf32, #tpu.memory_space<vmem>>, vector<8x32xf32>,
    %66 = arith.index_cast %41 : i32 to index
    %c0_39 = arith.constant 0 : index
    %67 = vector.load %arg22[%66, %c0_39] : memref<64x32xf32, #tpu.memory_space<vmem>>, vector<8x32xf32>
    tpu.vector_store %arg22[%66, %c0_39], %63 {strides = array<i32>} : memref<64x32xf32, #tpu.memory_space<vmem>>, vector<8x32xf32>,
    %c2_i32 = arith.constant 2 : i32
    %c8_i32_40 = arith.constant 8 : i32
    %68 = arith.muli %c2_i32, %c8_i32_40 : i32
    %69 = tpu.assume_multiple %68, 8 : i32
    %70 = arith.index_cast %69 : i32 to index
    %c0_41 = arith.constant 0 : index
    %71 = vector.load %arg19[%70, %c0_41] : memref<64x128xf32, #tpu.memory_space<vmem>>, vector<8x128xf32>
    %c0_42 = arith.constant 0 : index
    %c0_43 = arith.constant 0 : index
    %72 = vector.load %arg20[%c0_42, %c0_43] : memref<8x32xf32, #tpu.memory_space<vmem>>, vector<8x32xf32>
    %73 = arith.truncf %72 : vector<8x32xf32> to vector<8x32xbf16>
    %cst_44 = arith.constant dense<0.000000e+00> : vector<8x128xf32>
    %74 = tpu.matmul %73, %7, %cst_44 {dimension_numbers = #tpu.dot_dimension_numbers<[1], [0], [0], [1], [0, 0, 1, 1], [], []>} : vector<8x32xbf16>, vector<32x128xbf16>, vector<8x128xf32> -> vector<8x128xf32>
    %75 = arith.addf %71, %74 : vector<8x128xf32>
    %76 = arith.negf %75 : vector<8x128xf32>
    %77 = math.exp %76 : vector<8x128xf32>
    %cst_45 = arith.constant 1.000000e+00 : f32
    %78 = vector.broadcast %cst_45 : f32 to vector<8x128xf32>
    %79 = arith.addf %78, %77 : vector<8x128xf32>
    %80 = arith.divf %78, %79 : vector<8x128xf32>
    %81 = math.tanh %75 : vector<8x128xf32>
    %82 = vector.extract_strided_slice %80 {offsets = [0, 0], sizes = [8, 32], strides = [1, 1]} : vector<8x128xf32> to vector<8x32xf32>
    %83 = vector.extract_strided_slice %80 {offsets = [0, 32], sizes = [8, 32], strides = [1, 1]} : vector<8x128xf32> to vector<8x32xf32>
    %84 = vector.extract_strided_slice %81 {offsets = [0, 64], sizes = [8, 32], strides = [1, 1]} : vector<8x128xf32> to vector<8x32xf32>
    %85 = vector.extract_strided_slice %80 {offsets = [0, 96], sizes = [8, 32], strides = [1, 1]} : vector<8x128xf32> to vector<8x32xf32>
    %c0_46 = arith.constant 0 : index
    %c0_47 = arith.constant 0 : index
    %86 = vector.load %arg21[%c0_46, %c0_47] : memref<8x32xf32, #tpu.memory_space<vmem>>, vector<8x32xf32>
    %87 = arith.mulf %83, %86 : vector<8x32xf32>
    %88 = arith.mulf %82, %84 : vector<8x32xf32>
    %89 = arith.addf %87, %88 : vector<8x32xf32>
    %90 = math.tanh %89 : vector<8x32xf32>
    %91 = arith.mulf %85, %90 : vector<8x32xf32>
    %c0_48 = arith.constant 0 : index
    %c0_49 = arith.constant 0 : index
    %92 = vector.load %arg21[%c0_48, %c0_49] : memref<8x32xf32, #tpu.memory_space<vmem>>, vector<8x32xf32>
    tpu.vector_store %arg21[%c0_48, %c0_49], %89 {strides = array<i32>} : memref<8x32xf32, #tpu.memory_space<vmem>>, vector<8x32xf32>,
    %c0_50 = arith.constant 0 : index
    %c0_51 = arith.constant 0 : index
    %93 = vector.load %arg20[%c0_50, %c0_51] : memref<8x32xf32, #tpu.memory_space<vmem>>, vector<8x32xf32>
    tpu.vector_store %arg20[%c0_50, %c0_51], %91 {strides = array<i32>} : memref<8x32xf32, #tpu.memory_space<vmem>>, vector<8x32xf32>,
    %94 = arith.index_cast %69 : i32 to index
    %c0_52 = arith.constant 0 : index
    %95 = vector.load %arg22[%94, %c0_52] : memref<64x32xf32, #tpu.memory_space<vmem>>, vector<8x32xf32>
    tpu.vector_store %arg22[%94, %c0_52], %91 {strides = array<i32>} : memref<64x32xf32, #tpu.memory_space<vmem>>, vector<8x32xf32>,
    %c3_i32 = arith.constant 3 : i32
    %c8_i32_53 = arith.constant 8 : i32
    %96 = arith.muli %c3_i32, %c8_i32_53 : i32
    %97 = tpu.assume_multiple %96, 8 : i32
    %98 = arith.index_cast %97 : i32 to index
    %c0_54 = arith.constant 0 : index
    %99 = vector.load %arg19[%98, %c0_54] : memref<64x128xf32, #tpu.memory_space<vmem>>, vector<8x128xf32>
    %c0_55 = arith.constant 0 : index
    %c0_56 = arith.constant 0 : index
    %100 = vector.load %arg20[%c0_55, %c0_56] : memref<8x32xf32, #tpu.memory_space<vmem>>, vector<8x32xf32>
    %101 = arith.truncf %100 : vector<8x32xf32> to vector<8x32xbf16>
    %cst_57 = arith.constant dense<0.000000e+00> : vector<8x128xf32>
    %102 = tpu.matmul %101, %7, %cst_57 {dimension_numbers = #tpu.dot_dimension_numbers<[1], [0], [0], [1], [0, 0, 1, 1], [], []>} : vector<8x32xbf16>, vector<32x128xbf16>, vector<8x128xf32> -> vector<8x128xf32>
    %103 = arith.addf %99, %102 : vector<8x128xf32>
    %104 = arith.negf %103 : vector<8x128xf32>
    %105 = math.exp %104 : vector<8x128xf32>
    %cst_58 = arith.constant 1.000000e+00 : f32
    %106 = vector.broadcast %cst_58 : f32 to vector<8x128xf32>
    %107 = arith.addf %106, %105 : vector<8x128xf32>
    %108 = arith.divf %106, %107 : vector<8x128xf32>
    %109 = math.tanh %103 : vector<8x128xf32>
    %110 = vector.extract_strided_slice %108 {offsets = [0, 0], sizes = [8, 32], strides = [1, 1]} : vector<8x128xf32> to vector<8x32xf32>
    %111 = vector.extract_strided_slice %108 {offsets = [0, 32], sizes = [8, 32], strides = [1, 1]} : vector<8x128xf32> to vector<8x32xf32>
    %112 = vector.extract_strided_slice %109 {offsets = [0, 64], sizes = [8, 32], strides = [1, 1]} : vector<8x128xf32> to vector<8x32xf32>
    %113 = vector.extract_strided_slice %108 {offsets = [0, 96], sizes = [8, 32], strides = [1, 1]} : vector<8x128xf32> to vector<8x32xf32>
    %c0_59 = arith.constant 0 : index
    %c0_60 = arith.constant 0 : index
    %114 = vector.load %arg21[%c0_59, %c0_60] : memref<8x32xf32, #tpu.memory_space<vmem>>, vector<8x32xf32>
    %115 = arith.mulf %111, %114 : vector<8x32xf32>
    %116 = arith.mulf %110, %112 : vector<8x32xf32>
    %117 = arith.addf %115, %116 : vector<8x32xf32>
    %118 = math.tanh %117 : vector<8x32xf32>
    %119 = arith.mulf %113, %118 : vector<8x32xf32>
    %c0_61 = arith.constant 0 : index
    %c0_62 = arith.constant 0 : index
    %120 = vector.load %arg21[%c0_61, %c0_62] : memref<8x32xf32, #tpu.memory_space<vmem>>, vector<8x32xf32>
    tpu.vector_store %arg21[%c0_61, %c0_62], %117 {strides = array<i32>} : memref<8x32xf32, #tpu.memory_space<vmem>>, vector<8x32xf32>,
    %c0_63 = arith.constant 0 : index
    %c0_64 = arith.constant 0 : index
    %121 = vector.load %arg20[%c0_63, %c0_64] : memref<8x32xf32, #tpu.memory_space<vmem>>, vector<8x32xf32>
    tpu.vector_store %arg20[%c0_63, %c0_64], %119 {strides = array<i32>} : memref<8x32xf32, #tpu.memory_space<vmem>>, vector<8x32xf32>,
    %122 = arith.index_cast %97 : i32 to index
    %c0_65 = arith.constant 0 : index
    %123 = vector.load %arg22[%122, %c0_65] : memref<64x32xf32, #tpu.memory_space<vmem>>, vector<8x32xf32>
    tpu.vector_store %arg22[%122, %c0_65], %119 {strides = array<i32>} : memref<64x32xf32, #tpu.memory_space<vmem>>, vector<8x32xf32>,
    %c4_i32 = arith.constant 4 : i32
    %c8_i32_66 = arith.constant 8 : i32
    %124 = arith.muli %c4_i32, %c8_i32_66 : i32
    %125 = tpu.assume_multiple %124, 8 : i32
    %126 = arith.index_cast %125 : i32 to index
    %c0_67 = arith.constant 0 : index
    %127 = vector.load %arg19[%126, %c0_67] : memref<64x128xf32, #tpu.memory_space<vmem>>, vector<8x128xf32>
    %c0_68 = arith.constant 0 : index
    %c0_69 = arith.constant 0 : index
    %128 = vector.load %arg20[%c0_68, %c0_69] : memref<8x32xf32, #tpu.memory_space<vmem>>, vector<8x32xf32>
    %129 = arith.truncf %128 : vector<8x32xf32> to vector<8x32xbf16>
    %cst_70 = arith.constant dense<0.000000e+00> : vector<8x128xf32>
    %130 = tpu.matmul %129, %7, %cst_70 {dimension_numbers = #tpu.dot_dimension_numbers<[1], [0], [0], [1], [0, 0, 1, 1], [], []>} : vector<8x32xbf16>, vector<32x128xbf16>, vector<8x128xf32> -> vector<8x128xf32>
    %131 = arith.addf %127, %130 : vector<8x128xf32>
    %132 = arith.negf %131 : vector<8x128xf32>
    %133 = math.exp %132 : vector<8x128xf32>
    %cst_71 = arith.constant 1.000000e+00 : f32
    %134 = vector.broadcast %cst_71 : f32 to vector<8x128xf32>
    %135 = arith.addf %134, %133 : vector<8x128xf32>
    %136 = arith.divf %134, %135 : vector<8x128xf32>
    %137 = math.tanh %131 : vector<8x128xf32>
    %138 = vector.extract_strided_slice %136 {offsets = [0, 0], sizes = [8, 32], strides = [1, 1]} : vector<8x128xf32> to vector<8x32xf32>
    %139 = vector.extract_strided_slice %136 {offsets = [0, 32], sizes = [8, 32], strides = [1, 1]} : vector<8x128xf32> to vector<8x32xf32>
    %140 = vector.extract_strided_slice %137 {offsets = [0, 64], sizes = [8, 32], strides = [1, 1]} : vector<8x128xf32> to vector<8x32xf32>
    %141 = vector.extract_strided_slice %136 {offsets = [0, 96], sizes = [8, 32], strides = [1, 1]} : vector<8x128xf32> to vector<8x32xf32>
    %c0_72 = arith.constant 0 : index
    %c0_73 = arith.constant 0 : index
    %142 = vector.load %arg21[%c0_72, %c0_73] : memref<8x32xf32, #tpu.memory_space<vmem>>, vector<8x32xf32>
    %143 = arith.mulf %139, %142 : vector<8x32xf32>
    %144 = arith.mulf %138, %140 : vector<8x32xf32>
    %145 = arith.addf %143, %144 : vector<8x32xf32>
    %146 = math.tanh %145 : vector<8x32xf32>
    %147 = arith.mulf %141, %146 : vector<8x32xf32>
    %c0_74 = arith.constant 0 : index
    %c0_75 = arith.constant 0 : index
    %148 = vector.load %arg21[%c0_74, %c0_75] : memref<8x32xf32, #tpu.memory_space<vmem>>, vector<8x32xf32>
    tpu.vector_store %arg21[%c0_74, %c0_75], %145 {strides = array<i32>} : memref<8x32xf32, #tpu.memory_space<vmem>>, vector<8x32xf32>,
    %c0_76 = arith.constant 0 : index
    %c0_77 = arith.constant 0 : index
    %149 = vector.load %arg20[%c0_76, %c0_77] : memref<8x32xf32, #tpu.memory_space<vmem>>, vector<8x32xf32>
    tpu.vector_store %arg20[%c0_76, %c0_77], %147 {strides = array<i32>} : memref<8x32xf32, #tpu.memory_space<vmem>>, vector<8x32xf32>,
    %150 = arith.index_cast %125 : i32 to index
    %c0_78 = arith.constant 0 : index
    %151 = vector.load %arg22[%150, %c0_78] : memref<64x32xf32, #tpu.memory_space<vmem>>, vector<8x32xf32>
    tpu.vector_store %arg22[%150, %c0_78], %147 {strides = array<i32>} : memref<64x32xf32, #tpu.memory_space<vmem>>, vector<8x32xf32>,
    %c5_i32 = arith.constant 5 : i32
    %c8_i32_79 = arith.constant 8 : i32
    %152 = arith.muli %c5_i32, %c8_i32_79 : i32
    %153 = tpu.assume_multiple %152, 8 : i32
    %154 = arith.index_cast %153 : i32 to index
    %c0_80 = arith.constant 0 : index
    %155 = vector.load %arg19[%154, %c0_80] : memref<64x128xf32, #tpu.memory_space<vmem>>, vector<8x128xf32>
    %c0_81 = arith.constant 0 : index
    %c0_82 = arith.constant 0 : index
    %156 = vector.load %arg20[%c0_81, %c0_82] : memref<8x32xf32, #tpu.memory_space<vmem>>, vector<8x32xf32>
    %157 = arith.truncf %156 : vector<8x32xf32> to vector<8x32xbf16>
    %cst_83 = arith.constant dense<0.000000e+00> : vector<8x128xf32>
    %158 = tpu.matmul %157, %7, %cst_83 {dimension_numbers = #tpu.dot_dimension_numbers<[1], [0], [0], [1], [0, 0, 1, 1], [], []>} : vector<8x32xbf16>, vector<32x128xbf16>, vector<8x128xf32> -> vector<8x128xf32>
    %159 = arith.addf %155, %158 : vector<8x128xf32>
    %160 = arith.negf %159 : vector<8x128xf32>
    %161 = math.exp %160 : vector<8x128xf32>
    %cst_84 = arith.constant 1.000000e+00 : f32
    %162 = vector.broadcast %cst_84 : f32 to vector<8x128xf32>
    %163 = arith.addf %162, %161 : vector<8x128xf32>
    %164 = arith.divf %162, %163 : vector<8x128xf32>
    %165 = math.tanh %159 : vector<8x128xf32>
    %166 = vector.extract_strided_slice %164 {offsets = [0, 0], sizes = [8, 32], strides = [1, 1]} : vector<8x128xf32> to vector<8x32xf32>
    %167 = vector.extract_strided_slice %164 {offsets = [0, 32], sizes = [8, 32], strides = [1, 1]} : vector<8x128xf32> to vector<8x32xf32>
    %168 = vector.extract_strided_slice %165 {offsets = [0, 64], sizes = [8, 32], strides = [1, 1]} : vector<8x128xf32> to vector<8x32xf32>
    %169 = vector.extract_strided_slice %164 {offsets = [0, 96], sizes = [8, 32], strides = [1, 1]} : vector<8x128xf32> to vector<8x32xf32>
    %c0_85 = arith.constant 0 : index
    %c0_86 = arith.constant 0 : index
    %170 = vector.load %arg21[%c0_85, %c0_86] : memref<8x32xf32, #tpu.memory_space<vmem>>, vector<8x32xf32>
    %171 = arith.mulf %167, %170 : vector<8x32xf32>
    %172 = arith.mulf %166, %168 : vector<8x32xf32>
    %173 = arith.addf %171, %172 : vector<8x32xf32>
    %174 = math.tanh %173 : vector<8x32xf32>
    %175 = arith.mulf %169, %174 : vector<8x32xf32>
    %c0_87 = arith.constant 0 : index
    %c0_88 = arith.constant 0 : index
    %176 = vector.load %arg21[%c0_87, %c0_88] : memref<8x32xf32, #tpu.memory_space<vmem>>, vector<8x32xf32>
    tpu.vector_store %arg21[%c0_87, %c0_88], %173 {strides = array<i32>} : memref<8x32xf32, #tpu.memory_space<vmem>>, vector<8x32xf32>,
    %c0_89 = arith.constant 0 : index
    %c0_90 = arith.constant 0 : index
    %177 = vector.load %arg20[%c0_89, %c0_90] : memref<8x32xf32, #tpu.memory_space<vmem>>, vector<8x32xf32>
    tpu.vector_store %arg20[%c0_89, %c0_90], %175 {strides = array<i32>} : memref<8x32xf32, #tpu.memory_space<vmem>>, vector<8x32xf32>,
    %178 = arith.index_cast %153 : i32 to index
    %c0_91 = arith.constant 0 : index
    %179 = vector.load %arg22[%178, %c0_91] : memref<64x32xf32, #tpu.memory_space<vmem>>, vector<8x32xf32>
    tpu.vector_store %arg22[%178, %c0_91], %175 {strides = array<i32>} : memref<64x32xf32, #tpu.memory_space<vmem>>, vector<8x32xf32>,
    %c6_i32 = arith.constant 6 : i32
    %c8_i32_92 = arith.constant 8 : i32
    %180 = arith.muli %c6_i32, %c8_i32_92 : i32
    %181 = tpu.assume_multiple %180, 8 : i32
    %182 = arith.index_cast %181 : i32 to index
    %c0_93 = arith.constant 0 : index
    %183 = vector.load %arg19[%182, %c0_93] : memref<64x128xf32, #tpu.memory_space<vmem>>, vector<8x128xf32>
    %c0_94 = arith.constant 0 : index
    %c0_95 = arith.constant 0 : index
    %184 = vector.load %arg20[%c0_94, %c0_95] : memref<8x32xf32, #tpu.memory_space<vmem>>, vector<8x32xf32>
    %185 = arith.truncf %184 : vector<8x32xf32> to vector<8x32xbf16>
    %cst_96 = arith.constant dense<0.000000e+00> : vector<8x128xf32>
    %186 = tpu.matmul %185, %7, %cst_96 {dimension_numbers = #tpu.dot_dimension_numbers<[1], [0], [0], [1], [0, 0, 1, 1], [], []>} : vector<8x32xbf16>, vector<32x128xbf16>, vector<8x128xf32> -> vector<8x128xf32>
    %187 = arith.addf %183, %186 : vector<8x128xf32>
    %188 = arith.negf %187 : vector<8x128xf32>
    %189 = math.exp %188 : vector<8x128xf32>
    %cst_97 = arith.constant 1.000000e+00 : f32
    %190 = vector.broadcast %cst_97 : f32 to vector<8x128xf32>
    %191 = arith.addf %190, %189 : vector<8x128xf32>
    %192 = arith.divf %190, %191 : vector<8x128xf32>
    %193 = math.tanh %187 : vector<8x128xf32>
    %194 = vector.extract_strided_slice %192 {offsets = [0, 0], sizes = [8, 32], strides = [1, 1]} : vector<8x128xf32> to vector<8x32xf32>
    %195 = vector.extract_strided_slice %192 {offsets = [0, 32], sizes = [8, 32], strides = [1, 1]} : vector<8x128xf32> to vector<8x32xf32>
    %196 = vector.extract_strided_slice %193 {offsets = [0, 64], sizes = [8, 32], strides = [1, 1]} : vector<8x128xf32> to vector<8x32xf32>
    %197 = vector.extract_strided_slice %192 {offsets = [0, 96], sizes = [8, 32], strides = [1, 1]} : vector<8x128xf32> to vector<8x32xf32>
    %c0_98 = arith.constant 0 : index
    %c0_99 = arith.constant 0 : index
    %198 = vector.load %arg21[%c0_98, %c0_99] : memref<8x32xf32, #tpu.memory_space<vmem>>, vector<8x32xf32>
    %199 = arith.mulf %195, %198 : vector<8x32xf32>
    %200 = arith.mulf %194, %196 : vector<8x32xf32>
    %201 = arith.addf %199, %200 : vector<8x32xf32>
    %202 = math.tanh %201 : vector<8x32xf32>
    %203 = arith.mulf %197, %202 : vector<8x32xf32>
    %c0_100 = arith.constant 0 : index
    %c0_101 = arith.constant 0 : index
    %204 = vector.load %arg21[%c0_100, %c0_101] : memref<8x32xf32, #tpu.memory_space<vmem>>, vector<8x32xf32>
    tpu.vector_store %arg21[%c0_100, %c0_101], %201 {strides = array<i32>} : memref<8x32xf32, #tpu.memory_space<vmem>>, vector<8x32xf32>,
    %c0_102 = arith.constant 0 : index
    %c0_103 = arith.constant 0 : index
    %205 = vector.load %arg20[%c0_102, %c0_103] : memref<8x32xf32, #tpu.memory_space<vmem>>, vector<8x32xf32>
    tpu.vector_store %arg20[%c0_102, %c0_103], %203 {strides = array<i32>} : memref<8x32xf32, #tpu.memory_space<vmem>>, vector<8x32xf32>,
    %206 = arith.index_cast %181 : i32 to index
    %c0_104 = arith.constant 0 : index
    %207 = vector.load %arg22[%206, %c0_104] : memref<64x32xf32, #tpu.memory_space<vmem>>, vector<8x32xf32>
    tpu.vector_store %arg22[%206, %c0_104], %203 {strides = array<i32>} : memref<64x32xf32, #tpu.memory_space<vmem>>, vector<8x32xf32>,
    %c7_i32 = arith.constant 7 : i32
    %c8_i32_105 = arith.constant 8 : i32
    %208 = arith.muli %c7_i32, %c8_i32_105 : i32
    %209 = tpu.assume_multiple %208, 8 : i32
    %210 = arith.index_cast %209 : i32 to index
    %c0_106 = arith.constant 0 : index
    %211 = vector.load %arg19[%210, %c0_106] : memref<64x128xf32, #tpu.memory_space<vmem>>, vector<8x128xf32>
    %c0_107 = arith.constant 0 : index
    %c0_108 = arith.constant 0 : index
    %212 = vector.load %arg20[%c0_107, %c0_108] : memref<8x32xf32, #tpu.memory_space<vmem>>, vector<8x32xf32>
    %213 = arith.truncf %212 : vector<8x32xf32> to vector<8x32xbf16>
    %cst_109 = arith.constant dense<0.000000e+00> : vector<8x128xf32>
    %214 = tpu.matmul %213, %7, %cst_109 {dimension_numbers = #tpu.dot_dimension_numbers<[1], [0], [0], [1], [0, 0, 1, 1], [], []>} : vector<8x32xbf16>, vector<32x128xbf16>, vector<8x128xf32> -> vector<8x128xf32>
    %215 = arith.addf %211, %214 : vector<8x128xf32>
    %216 = arith.negf %215 : vector<8x128xf32>
    %217 = math.exp %216 : vector<8x128xf32>
    %cst_110 = arith.constant 1.000000e+00 : f32
    %218 = vector.broadcast %cst_110 : f32 to vector<8x128xf32>
    %219 = arith.addf %218, %217 : vector<8x128xf32>
    %220 = arith.divf %218, %219 : vector<8x128xf32>
    %221 = math.tanh %215 : vector<8x128xf32>
    %222 = vector.extract_strided_slice %220 {offsets = [0, 0], sizes = [8, 32], strides = [1, 1]} : vector<8x128xf32> to vector<8x32xf32>
    %223 = vector.extract_strided_slice %220 {offsets = [0, 32], sizes = [8, 32], strides = [1, 1]} : vector<8x128xf32> to vector<8x32xf32>
    %224 = vector.extract_strided_slice %221 {offsets = [0, 64], sizes = [8, 32], strides = [1, 1]} : vector<8x128xf32> to vector<8x32xf32>
    %225 = vector.extract_strided_slice %220 {offsets = [0, 96], sizes = [8, 32], strides = [1, 1]} : vector<8x128xf32> to vector<8x32xf32>
    %c0_111 = arith.constant 0 : index
    %c0_112 = arith.constant 0 : index
    %226 = vector.load %arg21[%c0_111, %c0_112] : memref<8x32xf32, #tpu.memory_space<vmem>>, vector<8x32xf32>
    %227 = arith.mulf %223, %226 : vector<8x32xf32>
    %228 = arith.mulf %222, %224 : vector<8x32xf32>
    %229 = arith.addf %227, %228 : vector<8x32xf32>
    %230 = math.tanh %229 : vector<8x32xf32>
    %231 = arith.mulf %225, %230 : vector<8x32xf32>
    %c0_113 = arith.constant 0 : index
    %c0_114 = arith.constant 0 : index
    %232 = vector.load %arg21[%c0_113, %c0_114] : memref<8x32xf32, #tpu.memory_space<vmem>>, vector<8x32xf32>
    tpu.vector_store %arg21[%c0_113, %c0_114], %229 {strides = array<i32>} : memref<8x32xf32, #tpu.memory_space<vmem>>, vector<8x32xf32>,
    %c0_115 = arith.constant 0 : index
    %c0_116 = arith.constant 0 : index
    %233 = vector.load %arg20[%c0_115, %c0_116] : memref<8x32xf32, #tpu.memory_space<vmem>>, vector<8x32xf32>
    tpu.vector_store %arg20[%c0_115, %c0_116], %231 {strides = array<i32>} : memref<8x32xf32, #tpu.memory_space<vmem>>, vector<8x32xf32>,
    %234 = arith.index_cast %209 : i32 to index
    %c0_117 = arith.constant 0 : index
    %235 = vector.load %arg22[%234, %c0_117] : memref<64x32xf32, #tpu.memory_space<vmem>>, vector<8x32xf32>
    tpu.vector_store %arg22[%234, %c0_117], %231 {strides = array<i32>} : memref<64x32xf32, #tpu.memory_space<vmem>>, vector<8x32xf32>,
    %c8_i32_118 = arith.constant 8 : i32
    %c0_119 = arith.constant 0 : index
    %c0_120 = arith.constant 0 : index
    %236 = vector.load %arg0[%c0_119, %c0_120] : memref<64x8xbf16, #tpu.memory_space<vmem>>, vector<64x8xbf16>
    %c0_121 = arith.constant 0 : index
    %c0_122 = arith.constant 0 : index
    %237 = vector.load %arg4[%c0_121, %c0_122] : memref<8x128xbf16, #tpu.memory_space<vmem>>, vector<8x128xbf16>
    %cst_123 = arith.constant dense<0.000000e+00> : vector<64x128xf32>
    %238 = tpu.matmul %236, %237, %cst_123 {dimension_numbers = #tpu.dot_dimension_numbers<[1], [0], [0], [1], [0, 0, 1, 1], [], []>} : vector<64x8xbf16>, vector<8x128xbf16>, vector<64x128xf32> -> vector<64x128xf32>
    %c0_124 = arith.constant 0 : index
    %c0_125 = arith.constant 0 : index
    %239 = vector.load %arg6[%c0_124, %c0_125] : memref<1x128xf32, #tpu.memory_space<vmem>>, vector<1x128xf32>
    %240 = vector.broadcast %239 : vector<1x128xf32> to vector<64x128xf32>
    %241 = arith.addf %238, %240 : vector<64x128xf32>
    %c0_126 = arith.constant 0 : index
    %c0_127 = arith.constant 0 : index
    %242 = vector.load %arg19[%c0_126, %c0_127] : memref<64x128xf32, #tpu.memory_space<vmem>>, vector<64x128xf32>
    tpu.vector_store %arg19[%c0_126, %c0_127], %241 {strides = array<i32>} : memref<64x128xf32, #tpu.memory_space<vmem>>, vector<64x128xf32>,
    %c0_128 = arith.constant 0 : index
    %c0_129 = arith.constant 0 : index
    %243 = vector.load %arg5[%c0_128, %c0_129] : memref<32x128xbf16, #tpu.memory_space<vmem>>, vector<32x128xbf16>
    %cst_130 = arith.constant 0.000000e+00 : f32
    %244 = vector.broadcast %cst_130 : f32 to vector<8x32xf32>
    %c0_131 = arith.constant 0 : index
    %c0_132 = arith.constant 0 : index
    %245 = vector.load %arg20[%c0_131, %c0_132] : memref<8x32xf32, #tpu.memory_space<vmem>>, vector<8x32xf32>
    tpu.vector_store %arg20[%c0_131, %c0_132], %244 {strides = array<i32>} : memref<8x32xf32, #tpu.memory_space<vmem>>, vector<8x32xf32>,
    %cst_133 = arith.constant 0.000000e+00 : f32
    %246 = vector.broadcast %cst_133 : f32 to vector<8x32xf32>
    %c0_134 = arith.constant 0 : index
    %c0_135 = arith.constant 0 : index
    %247 = vector.load %arg21[%c0_134, %c0_135] : memref<8x32xf32, #tpu.memory_space<vmem>>, vector<8x32xf32>
    tpu.vector_store %arg21[%c0_134, %c0_135], %246 {strides = array<i32>} : memref<8x32xf32, #tpu.memory_space<vmem>>, vector<8x32xf32>,
    %c0_i32_136 = arith.constant 0 : i32
    %c7_i32_137 = arith.constant 7 : i32
    %248 = arith.subi %c7_i32_137, %c0_i32_136 : i32
    %c8_i32_138 = arith.constant 8 : i32
    %249 = arith.muli %248, %c8_i32_138 : i32
    %250 = tpu.assume_multiple %249, 8 : i32
    %251 = arith.index_cast %250 : i32 to index
    %c0_139 = arith.constant 0 : index
    %252 = vector.load %arg19[%251, %c0_139] : memref<64x128xf32, #tpu.memory_space<vmem>>, vector<8x128xf32>
    %c0_140 = arith.constant 0 : index
    %c0_141 = arith.constant 0 : index
    %253 = vector.load %arg20[%c0_140, %c0_141] : memref<8x32xf32, #tpu.memory_space<vmem>>, vector<8x32xf32>
    %254 = arith.truncf %253 : vector<8x32xf32> to vector<8x32xbf16>
    %cst_142 = arith.constant dense<0.000000e+00> : vector<8x128xf32>
    %255 = tpu.matmul %254, %243, %cst_142 {dimension_numbers = #tpu.dot_dimension_numbers<[1], [0], [0], [1], [0, 0, 1, 1], [], []>} : vector<8x32xbf16>, vector<32x128xbf16>, vector<8x128xf32> -> vector<8x128xf32>
    %256 = arith.addf %252, %255 : vector<8x128xf32>
    %257 = arith.negf %256 : vector<8x128xf32>
    %258 = math.exp %257 : vector<8x128xf32>
    %cst_143 = arith.constant 1.000000e+00 : f32
    %259 = vector.broadcast %cst_143 : f32 to vector<8x128xf32>
    %260 = arith.addf %259, %258 : vector<8x128xf32>
    %261 = arith.divf %259, %260 : vector<8x128xf32>
    %262 = math.tanh %256 : vector<8x128xf32>
    %263 = vector.extract_strided_slice %261 {offsets = [0, 0], sizes = [8, 32], strides = [1, 1]} : vector<8x128xf32> to vector<8x32xf32>
    %264 = vector.extract_strided_slice %261 {offsets = [0, 32], sizes = [8, 32], strides = [1, 1]} : vector<8x128xf32> to vector<8x32xf32>
    %265 = vector.extract_strided_slice %262 {offsets = [0, 64], sizes = [8, 32], strides = [1, 1]} : vector<8x128xf32> to vector<8x32xf32>
    %266 = vector.extract_strided_slice %261 {offsets = [0, 96], sizes = [8, 32], strides = [1, 1]} : vector<8x128xf32> to vector<8x32xf32>
    %c0_144 = arith.constant 0 : index
    %c0_145 = arith.constant 0 : index
    %267 = vector.load %arg21[%c0_144, %c0_145] : memref<8x32xf32, #tpu.memory_space<vmem>>, vector<8x32xf32>
    %268 = arith.mulf %264, %267 : vector<8x32xf32>
    %269 = arith.mulf %263, %265 : vector<8x32xf32>
    %270 = arith.addf %268, %269 : vector<8x32xf32>
    %271 = math.tanh %270 : vector<8x32xf32>
    %272 = arith.mulf %266, %271 : vector<8x32xf32>
    %c0_146 = arith.constant 0 : index
    %c0_147 = arith.constant 0 : index
    %273 = vector.load %arg21[%c0_146, %c0_147] : memref<8x32xf32, #tpu.memory_space<vmem>>, vector<8x32xf32>
    tpu.vector_store %arg21[%c0_146, %c0_147], %270 {strides = array<i32>} : memref<8x32xf32, #tpu.memory_space<vmem>>, vector<8x32xf32>,
    %c0_148 = arith.constant 0 : index
    %c0_149 = arith.constant 0 : index
    %274 = vector.load %arg20[%c0_148, %c0_149] : memref<8x32xf32, #tpu.memory_space<vmem>>, vector<8x32xf32>
    tpu.vector_store %arg20[%c0_148, %c0_149], %272 {strides = array<i32>} : memref<8x32xf32, #tpu.memory_space<vmem>>, vector<8x32xf32>,
    %275 = arith.index_cast %250 : i32 to index
    %c0_150 = arith.constant 0 : index
    %276 = vector.load %arg23[%275, %c0_150] : memref<64x32xf32, #tpu.memory_space<vmem>>, vector<8x32xf32>
    tpu.vector_store %arg23[%275, %c0_150], %272 {strides = array<i32>} : memref<64x32xf32, #tpu.memory_space<vmem>>, vector<8x32xf32>,
    %c1_i32_151 = arith.constant 1 : i32
    %c7_i32_152 = arith.constant 7 : i32
    %277 = arith.subi %c7_i32_152, %c1_i32_151 : i32
    %c8_i32_153 = arith.constant 8 : i32
    %278 = arith.muli %277, %c8_i32_153 : i32
    %279 = tpu.assume_multiple %278, 8 : i32
    %280 = arith.index_cast %279 : i32 to index
    %c0_154 = arith.constant 0 : index
    %281 = vector.load %arg19[%280, %c0_154] : memref<64x128xf32, #tpu.memory_space<vmem>>, vector<8x128xf32>
    %c0_155 = arith.constant 0 : index
    %c0_156 = arith.constant 0 : index
    %282 = vector.load %arg20[%c0_155, %c0_156] : memref<8x32xf32, #tpu.memory_space<vmem>>, vector<8x32xf32>
    %283 = arith.truncf %282 : vector<8x32xf32> to vector<8x32xbf16>
    %cst_157 = arith.constant dense<0.000000e+00> : vector<8x128xf32>
    %284 = tpu.matmul %283, %243, %cst_157 {dimension_numbers = #tpu.dot_dimension_numbers<[1], [0], [0], [1], [0, 0, 1, 1], [], []>} : vector<8x32xbf16>, vector<32x128xbf16>, vector<8x128xf32> -> vector<8x128xf32>
    %285 = arith.addf %281, %284 : vector<8x128xf32>
    %286 = arith.negf %285 : vector<8x128xf32>
    %287 = math.exp %286 : vector<8x128xf32>
    %cst_158 = arith.constant 1.000000e+00 : f32
    %288 = vector.broadcast %cst_158 : f32 to vector<8x128xf32>
    %289 = arith.addf %288, %287 : vector<8x128xf32>
    %290 = arith.divf %288, %289 : vector<8x128xf32>
    %291 = math.tanh %285 : vector<8x128xf32>
    %292 = vector.extract_strided_slice %290 {offsets = [0, 0], sizes = [8, 32], strides = [1, 1]} : vector<8x128xf32> to vector<8x32xf32>
    %293 = vector.extract_strided_slice %290 {offsets = [0, 32], sizes = [8, 32], strides = [1, 1]} : vector<8x128xf32> to vector<8x32xf32>
    %294 = vector.extract_strided_slice %291 {offsets = [0, 64], sizes = [8, 32], strides = [1, 1]} : vector<8x128xf32> to vector<8x32xf32>
    %295 = vector.extract_strided_slice %290 {offsets = [0, 96], sizes = [8, 32], strides = [1, 1]} : vector<8x128xf32> to vector<8x32xf32>
    %c0_159 = arith.constant 0 : index
    %c0_160 = arith.constant 0 : index
    %296 = vector.load %arg21[%c0_159, %c0_160] : memref<8x32xf32, #tpu.memory_space<vmem>>, vector<8x32xf32>
    %297 = arith.mulf %293, %296 : vector<8x32xf32>
    %298 = arith.mulf %292, %294 : vector<8x32xf32>
    %299 = arith.addf %297, %298 : vector<8x32xf32>
    %300 = math.tanh %299 : vector<8x32xf32>
    %301 = arith.mulf %295, %300 : vector<8x32xf32>
    %c0_161 = arith.constant 0 : index
    %c0_162 = arith.constant 0 : index
    %302 = vector.load %arg21[%c0_161, %c0_162] : memref<8x32xf32, #tpu.memory_space<vmem>>, vector<8x32xf32>
    tpu.vector_store %arg21[%c0_161, %c0_162], %299 {strides = array<i32>} : memref<8x32xf32, #tpu.memory_space<vmem>>, vector<8x32xf32>,
    %c0_163 = arith.constant 0 : index
    %c0_164 = arith.constant 0 : index
    %303 = vector.load %arg20[%c0_163, %c0_164] : memref<8x32xf32, #tpu.memory_space<vmem>>, vector<8x32xf32>
    tpu.vector_store %arg20[%c0_163, %c0_164], %301 {strides = array<i32>} : memref<8x32xf32, #tpu.memory_space<vmem>>, vector<8x32xf32>,
    %304 = arith.index_cast %279 : i32 to index
    %c0_165 = arith.constant 0 : index
    %305 = vector.load %arg23[%304, %c0_165] : memref<64x32xf32, #tpu.memory_space<vmem>>, vector<8x32xf32>
    tpu.vector_store %arg23[%304, %c0_165], %301 {strides = array<i32>} : memref<64x32xf32, #tpu.memory_space<vmem>>, vector<8x32xf32>,
    %c2_i32_166 = arith.constant 2 : i32
    %c7_i32_167 = arith.constant 7 : i32
    %306 = arith.subi %c7_i32_167, %c2_i32_166 : i32
    %c8_i32_168 = arith.constant 8 : i32
    %307 = arith.muli %306, %c8_i32_168 : i32
    %308 = tpu.assume_multiple %307, 8 : i32
    %309 = arith.index_cast %308 : i32 to index
    %c0_169 = arith.constant 0 : index
    %310 = vector.load %arg19[%309, %c0_169] : memref<64x128xf32, #tpu.memory_space<vmem>>, vector<8x128xf32>
    %c0_170 = arith.constant 0 : index
    %c0_171 = arith.constant 0 : index
    %311 = vector.load %arg20[%c0_170, %c0_171] : memref<8x32xf32, #tpu.memory_space<vmem>>, vector<8x32xf32>
    %312 = arith.truncf %311 : vector<8x32xf32> to vector<8x32xbf16>
    %cst_172 = arith.constant dense<0.000000e+00> : vector<8x128xf32>
    %313 = tpu.matmul %312, %243, %cst_172 {dimension_numbers = #tpu.dot_dimension_numbers<[1], [0], [0], [1], [0, 0, 1, 1], [], []>} : vector<8x32xbf16>, vector<32x128xbf16>, vector<8x128xf32> -> vector<8x128xf32>
    %314 = arith.addf %310, %313 : vector<8x128xf32>
    %315 = arith.negf %314 : vector<8x128xf32>
    %316 = math.exp %315 : vector<8x128xf32>
    %cst_173 = arith.constant 1.000000e+00 : f32
    %317 = vector.broadcast %cst_173 : f32 to vector<8x128xf32>
    %318 = arith.addf %317, %316 : vector<8x128xf32>
    %319 = arith.divf %317, %318 : vector<8x128xf32>
    %320 = math.tanh %314 : vector<8x128xf32>
    %321 = vector.extract_strided_slice %319 {offsets = [0, 0], sizes = [8, 32], strides = [1, 1]} : vector<8x128xf32> to vector<8x32xf32>
    %322 = vector.extract_strided_slice %319 {offsets = [0, 32], sizes = [8, 32], strides = [1, 1]} : vector<8x128xf32> to vector<8x32xf32>
    %323 = vector.extract_strided_slice %320 {offsets = [0, 64], sizes = [8, 32], strides = [1, 1]} : vector<8x128xf32> to vector<8x32xf32>
    %324 = vector.extract_strided_slice %319 {offsets = [0, 96], sizes = [8, 32], strides = [1, 1]} : vector<8x128xf32> to vector<8x32xf32>
    %c0_174 = arith.constant 0 : index
    %c0_175 = arith.constant 0 : index
    %325 = vector.load %arg21[%c0_174, %c0_175] : memref<8x32xf32, #tpu.memory_space<vmem>>, vector<8x32xf32>
    %326 = arith.mulf %322, %325 : vector<8x32xf32>
    %327 = arith.mulf %321, %323 : vector<8x32xf32>
    %328 = arith.addf %326, %327 : vector<8x32xf32>
    %329 = math.tanh %328 : vector<8x32xf32>
    %330 = arith.mulf %324, %329 : vector<8x32xf32>
    %c0_176 = arith.constant 0 : index
    %c0_177 = arith.constant 0 : index
    %331 = vector.load %arg21[%c0_176, %c0_177] : memref<8x32xf32, #tpu.memory_space<vmem>>, vector<8x32xf32>
    tpu.vector_store %arg21[%c0_176, %c0_177], %328 {strides = array<i32>} : memref<8x32xf32, #tpu.memory_space<vmem>>, vector<8x32xf32>,
    %c0_178 = arith.constant 0 : index
    %c0_179 = arith.constant 0 : index
    %332 = vector.load %arg20[%c0_178, %c0_179] : memref<8x32xf32, #tpu.memory_space<vmem>>, vector<8x32xf32>
    tpu.vector_store %arg20[%c0_178, %c0_179], %330 {strides = array<i32>} : memref<8x32xf32, #tpu.memory_space<vmem>>, vector<8x32xf32>,
    %333 = arith.index_cast %308 : i32 to index
    %c0_180 = arith.constant 0 : index
    %334 = vector.load %arg23[%333, %c0_180] : memref<64x32xf32, #tpu.memory_space<vmem>>, vector<8x32xf32>
    tpu.vector_store %arg23[%333, %c0_180], %330 {strides = array<i32>} : memref<64x32xf32, #tpu.memory_space<vmem>>, vector<8x32xf32>,
    %c3_i32_181 = arith.constant 3 : i32
    %c7_i32_182 = arith.constant 7 : i32
    %335 = arith.subi %c7_i32_182, %c3_i32_181 : i32
    %c8_i32_183 = arith.constant 8 : i32
    %336 = arith.muli %335, %c8_i32_183 : i32
    %337 = tpu.assume_multiple %336, 8 : i32
    %338 = arith.index_cast %337 : i32 to index
    %c0_184 = arith.constant 0 : index
    %339 = vector.load %arg19[%338, %c0_184] : memref<64x128xf32, #tpu.memory_space<vmem>>, vector<8x128xf32>
    %c0_185 = arith.constant 0 : index
    %c0_186 = arith.constant 0 : index
    %340 = vector.load %arg20[%c0_185, %c0_186] : memref<8x32xf32, #tpu.memory_space<vmem>>, vector<8x32xf32>
    %341 = arith.truncf %340 : vector<8x32xf32> to vector<8x32xbf16>
    %cst_187 = arith.constant dense<0.000000e+00> : vector<8x128xf32>
    %342 = tpu.matmul %341, %243, %cst_187 {dimension_numbers = #tpu.dot_dimension_numbers<[1], [0], [0], [1], [0, 0, 1, 1], [], []>} : vector<8x32xbf16>, vector<32x128xbf16>, vector<8x128xf32> -> vector<8x128xf32>
    %343 = arith.addf %339, %342 : vector<8x128xf32>
    %344 = arith.negf %343 : vector<8x128xf32>
    %345 = math.exp %344 : vector<8x128xf32>
    %cst_188 = arith.constant 1.000000e+00 : f32
    %346 = vector.broadcast %cst_188 : f32 to vector<8x128xf32>
    %347 = arith.addf %346, %345 : vector<8x128xf32>
    %348 = arith.divf %346, %347 : vector<8x128xf32>
    %349 = math.tanh %343 : vector<8x128xf32>
    %350 = vector.extract_strided_slice %348 {offsets = [0, 0], sizes = [8, 32], strides = [1, 1]} : vector<8x128xf32> to vector<8x32xf32>
    %351 = vector.extract_strided_slice %348 {offsets = [0, 32], sizes = [8, 32], strides = [1, 1]} : vector<8x128xf32> to vector<8x32xf32>
    %352 = vector.extract_strided_slice %349 {offsets = [0, 64], sizes = [8, 32], strides = [1, 1]} : vector<8x128xf32> to vector<8x32xf32>
    %353 = vector.extract_strided_slice %348 {offsets = [0, 96], sizes = [8, 32], strides = [1, 1]} : vector<8x128xf32> to vector<8x32xf32>
    %c0_189 = arith.constant 0 : index
    %c0_190 = arith.constant 0 : index
    %354 = vector.load %arg21[%c0_189, %c0_190] : memref<8x32xf32, #tpu.memory_space<vmem>>, vector<8x32xf32>
    %355 = arith.mulf %351, %354 : vector<8x32xf32>
    %356 = arith.mulf %350, %352 : vector<8x32xf32>
    %357 = arith.addf %355, %356 : vector<8x32xf32>
    %358 = math.tanh %357 : vector<8x32xf32>
    %359 = arith.mulf %353, %358 : vector<8x32xf32>
    %c0_191 = arith.constant 0 : index
    %c0_192 = arith.constant 0 : index
    %360 = vector.load %arg21[%c0_191, %c0_192] : memref<8x32xf32, #tpu.memory_space<vmem>>, vector<8x32xf32>
    tpu.vector_store %arg21[%c0_191, %c0_192], %357 {strides = array<i32>} : memref<8x32xf32, #tpu.memory_space<vmem>>, vector<8x32xf32>,
    %c0_193 = arith.constant 0 : index
    %c0_194 = arith.constant 0 : index
    %361 = vector.load %arg20[%c0_193, %c0_194] : memref<8x32xf32, #tpu.memory_space<vmem>>, vector<8x32xf32>
    tpu.vector_store %arg20[%c0_193, %c0_194], %359 {strides = array<i32>} : memref<8x32xf32, #tpu.memory_space<vmem>>, vector<8x32xf32>,
    %362 = arith.index_cast %337 : i32 to index
    %c0_195 = arith.constant 0 : index
    %363 = vector.load %arg23[%362, %c0_195] : memref<64x32xf32, #tpu.memory_space<vmem>>, vector<8x32xf32>
    tpu.vector_store %arg23[%362, %c0_195], %359 {strides = array<i32>} : memref<64x32xf32, #tpu.memory_space<vmem>>, vector<8x32xf32>,
    %c4_i32_196 = arith.constant 4 : i32
    %c7_i32_197 = arith.constant 7 : i32
    %364 = arith.subi %c7_i32_197, %c4_i32_196 : i32
    %c8_i32_198 = arith.constant 8 : i32
    %365 = arith.muli %364, %c8_i32_198 : i32
    %366 = tpu.assume_multiple %365, 8 : i32
    %367 = arith.index_cast %366 : i32 to index
    %c0_199 = arith.constant 0 : index
    %368 = vector.load %arg19[%367, %c0_199] : memref<64x128xf32, #tpu.memory_space<vmem>>, vector<8x128xf32>
    %c0_200 = arith.constant 0 : index
    %c0_201 = arith.constant 0 : index
    %369 = vector.load %arg20[%c0_200, %c0_201] : memref<8x32xf32, #tpu.memory_space<vmem>>, vector<8x32xf32>
    %370 = arith.truncf %369 : vector<8x32xf32> to vector<8x32xbf16>
    %cst_202 = arith.constant dense<0.000000e+00> : vector<8x128xf32>
    %371 = tpu.matmul %370, %243, %cst_202 {dimension_numbers = #tpu.dot_dimension_numbers<[1], [0], [0], [1], [0, 0, 1, 1], [], []>} : vector<8x32xbf16>, vector<32x128xbf16>, vector<8x128xf32> -> vector<8x128xf32>
    %372 = arith.addf %368, %371 : vector<8x128xf32>
    %373 = arith.negf %372 : vector<8x128xf32>
    %374 = math.exp %373 : vector<8x128xf32>
    %cst_203 = arith.constant 1.000000e+00 : f32
    %375 = vector.broadcast %cst_203 : f32 to vector<8x128xf32>
    %376 = arith.addf %375, %374 : vector<8x128xf32>
    %377 = arith.divf %375, %376 : vector<8x128xf32>
    %378 = math.tanh %372 : vector<8x128xf32>
    %379 = vector.extract_strided_slice %377 {offsets = [0, 0], sizes = [8, 32], strides = [1, 1]} : vector<8x128xf32> to vector<8x32xf32>
    %380 = vector.extract_strided_slice %377 {offsets = [0, 32], sizes = [8, 32], strides = [1, 1]} : vector<8x128xf32> to vector<8x32xf32>
    %381 = vector.extract_strided_slice %378 {offsets = [0, 64], sizes = [8, 32], strides = [1, 1]} : vector<8x128xf32> to vector<8x32xf32>
    %382 = vector.extract_strided_slice %377 {offsets = [0, 96], sizes = [8, 32], strides = [1, 1]} : vector<8x128xf32> to vector<8x32xf32>
    %c0_204 = arith.constant 0 : index
    %c0_205 = arith.constant 0 : index
    %383 = vector.load %arg21[%c0_204, %c0_205] : memref<8x32xf32, #tpu.memory_space<vmem>>, vector<8x32xf32>
    %384 = arith.mulf %380, %383 : vector<8x32xf32>
    %385 = arith.mulf %379, %381 : vector<8x32xf32>
    %386 = arith.addf %384, %385 : vector<8x32xf32>
    %387 = math.tanh %386 : vector<8x32xf32>
    %388 = arith.mulf %382, %387 : vector<8x32xf32>
    %c0_206 = arith.constant 0 : index
    %c0_207 = arith.constant 0 : index
    %389 = vector.load %arg21[%c0_206, %c0_207] : memref<8x32xf32, #tpu.memory_space<vmem>>, vector<8x32xf32>
    tpu.vector_store %arg21[%c0_206, %c0_207], %386 {strides = array<i32>} : memref<8x32xf32, #tpu.memory_space<vmem>>, vector<8x32xf32>,
    %c0_208 = arith.constant 0 : index
    %c0_209 = arith.constant 0 : index
    %390 = vector.load %arg20[%c0_208, %c0_209] : memref<8x32xf32, #tpu.memory_space<vmem>>, vector<8x32xf32>
    tpu.vector_store %arg20[%c0_208, %c0_209], %388 {strides = array<i32>} : memref<8x32xf32, #tpu.memory_space<vmem>>, vector<8x32xf32>,
    %391 = arith.index_cast %366 : i32 to index
    %c0_210 = arith.constant 0 : index
    %392 = vector.load %arg23[%391, %c0_210] : memref<64x32xf32, #tpu.memory_space<vmem>>, vector<8x32xf32>
    tpu.vector_store %arg23[%391, %c0_210], %388 {strides = array<i32>} : memref<64x32xf32, #tpu.memory_space<vmem>>, vector<8x32xf32>,
    %c5_i32_211 = arith.constant 5 : i32
    %c7_i32_212 = arith.constant 7 : i32
    %393 = arith.subi %c7_i32_212, %c5_i32_211 : i32
    %c8_i32_213 = arith.constant 8 : i32
    %394 = arith.muli %393, %c8_i32_213 : i32
    %395 = tpu.assume_multiple %394, 8 : i32
    %396 = arith.index_cast %395 : i32 to index
    %c0_214 = arith.constant 0 : index
    %397 = vector.load %arg19[%396, %c0_214] : memref<64x128xf32, #tpu.memory_space<vmem>>, vector<8x128xf32>
    %c0_215 = arith.constant 0 : index
    %c0_216 = arith.constant 0 : index
    %398 = vector.load %arg20[%c0_215, %c0_216] : memref<8x32xf32, #tpu.memory_space<vmem>>, vector<8x32xf32>
    %399 = arith.truncf %398 : vector<8x32xf32> to vector<8x32xbf16>
    %cst_217 = arith.constant dense<0.000000e+00> : vector<8x128xf32>
    %400 = tpu.matmul %399, %243, %cst_217 {dimension_numbers = #tpu.dot_dimension_numbers<[1], [0], [0], [1], [0, 0, 1, 1], [], []>} : vector<8x32xbf16>, vector<32x128xbf16>, vector<8x128xf32> -> vector<8x128xf32>
    %401 = arith.addf %397, %400 : vector<8x128xf32>
    %402 = arith.negf %401 : vector<8x128xf32>
    %403 = math.exp %402 : vector<8x128xf32>
    %cst_218 = arith.constant 1.000000e+00 : f32
    %404 = vector.broadcast %cst_218 : f32 to vector<8x128xf32>
    %405 = arith.addf %404, %403 : vector<8x128xf32>
    %406 = arith.divf %404, %405 : vector<8x128xf32>
    %407 = math.tanh %401 : vector<8x128xf32>
    %408 = vector.extract_strided_slice %406 {offsets = [0, 0], sizes = [8, 32], strides = [1, 1]} : vector<8x128xf32> to vector<8x32xf32>
    %409 = vector.extract_strided_slice %406 {offsets = [0, 32], sizes = [8, 32], strides = [1, 1]} : vector<8x128xf32> to vector<8x32xf32>
    %410 = vector.extract_strided_slice %407 {offsets = [0, 64], sizes = [8, 32], strides = [1, 1]} : vector<8x128xf32> to vector<8x32xf32>
    %411 = vector.extract_strided_slice %406 {offsets = [0, 96], sizes = [8, 32], strides = [1, 1]} : vector<8x128xf32> to vector<8x32xf32>
    %c0_219 = arith.constant 0 : index
    %c0_220 = arith.constant 0 : index
    %412 = vector.load %arg21[%c0_219, %c0_220] : memref<8x32xf32, #tpu.memory_space<vmem>>, vector<8x32xf32>
    %413 = arith.mulf %409, %412 : vector<8x32xf32>
    %414 = arith.mulf %408, %410 : vector<8x32xf32>
    %415 = arith.addf %413, %414 : vector<8x32xf32>
    %416 = math.tanh %415 : vector<8x32xf32>
    %417 = arith.mulf %411, %416 : vector<8x32xf32>
    %c0_221 = arith.constant 0 : index
    %c0_222 = arith.constant 0 : index
    %418 = vector.load %arg21[%c0_221, %c0_222] : memref<8x32xf32, #tpu.memory_space<vmem>>, vector<8x32xf32>
    tpu.vector_store %arg21[%c0_221, %c0_222], %415 {strides = array<i32>} : memref<8x32xf32, #tpu.memory_space<vmem>>, vector<8x32xf32>,
    %c0_223 = arith.constant 0 : index
    %c0_224 = arith.constant 0 : index
    %419 = vector.load %arg20[%c0_223, %c0_224] : memref<8x32xf32, #tpu.memory_space<vmem>>, vector<8x32xf32>
    tpu.vector_store %arg20[%c0_223, %c0_224], %417 {strides = array<i32>} : memref<8x32xf32, #tpu.memory_space<vmem>>, vector<8x32xf32>,
    %420 = arith.index_cast %395 : i32 to index
    %c0_225 = arith.constant 0 : index
    %421 = vector.load %arg23[%420, %c0_225] : memref<64x32xf32, #tpu.memory_space<vmem>>, vector<8x32xf32>
    tpu.vector_store %arg23[%420, %c0_225], %417 {strides = array<i32>} : memref<64x32xf32, #tpu.memory_space<vmem>>, vector<8x32xf32>,
    %c6_i32_226 = arith.constant 6 : i32
    %c7_i32_227 = arith.constant 7 : i32
    %422 = arith.subi %c7_i32_227, %c6_i32_226 : i32
    %c8_i32_228 = arith.constant 8 : i32
    %423 = arith.muli %422, %c8_i32_228 : i32
    %424 = tpu.assume_multiple %423, 8 : i32
    %425 = arith.index_cast %424 : i32 to index
    %c0_229 = arith.constant 0 : index
    %426 = vector.load %arg19[%425, %c0_229] : memref<64x128xf32, #tpu.memory_space<vmem>>, vector<8x128xf32>
    %c0_230 = arith.constant 0 : index
    %c0_231 = arith.constant 0 : index
    %427 = vector.load %arg20[%c0_230, %c0_231] : memref<8x32xf32, #tpu.memory_space<vmem>>, vector<8x32xf32>
    %428 = arith.truncf %427 : vector<8x32xf32> to vector<8x32xbf16>
    %cst_232 = arith.constant dense<0.000000e+00> : vector<8x128xf32>
    %429 = tpu.matmul %428, %243, %cst_232 {dimension_numbers = #tpu.dot_dimension_numbers<[1], [0], [0], [1], [0, 0, 1, 1], [], []>} : vector<8x32xbf16>, vector<32x128xbf16>, vector<8x128xf32> -> vector<8x128xf32>
    %430 = arith.addf %426, %429 : vector<8x128xf32>
    %431 = arith.negf %430 : vector<8x128xf32>
    %432 = math.exp %431 : vector<8x128xf32>
    %cst_233 = arith.constant 1.000000e+00 : f32
    %433 = vector.broadcast %cst_233 : f32 to vector<8x128xf32>
    %434 = arith.addf %433, %432 : vector<8x128xf32>
    %435 = arith.divf %433, %434 : vector<8x128xf32>
    %436 = math.tanh %430 : vector<8x128xf32>
    %437 = vector.extract_strided_slice %435 {offsets = [0, 0], sizes = [8, 32], strides = [1, 1]} : vector<8x128xf32> to vector<8x32xf32>
    %438 = vector.extract_strided_slice %435 {offsets = [0, 32], sizes = [8, 32], strides = [1, 1]} : vector<8x128xf32> to vector<8x32xf32>
    %439 = vector.extract_strided_slice %436 {offsets = [0, 64], sizes = [8, 32], strides = [1, 1]} : vector<8x128xf32> to vector<8x32xf32>
    %440 = vector.extract_strided_slice %435 {offsets = [0, 96], sizes = [8, 32], strides = [1, 1]} : vector<8x128xf32> to vector<8x32xf32>
    %c0_234 = arith.constant 0 : index
    %c0_235 = arith.constant 0 : index
    %441 = vector.load %arg21[%c0_234, %c0_235] : memref<8x32xf32, #tpu.memory_space<vmem>>, vector<8x32xf32>
    %442 = arith.mulf %438, %441 : vector<8x32xf32>
    %443 = arith.mulf %437, %439 : vector<8x32xf32>
    %444 = arith.addf %442, %443 : vector<8x32xf32>
    %445 = math.tanh %444 : vector<8x32xf32>
    %446 = arith.mulf %440, %445 : vector<8x32xf32>
    %c0_236 = arith.constant 0 : index
    %c0_237 = arith.constant 0 : index
    %447 = vector.load %arg21[%c0_236, %c0_237] : memref<8x32xf32, #tpu.memory_space<vmem>>, vector<8x32xf32>
    tpu.vector_store %arg21[%c0_236, %c0_237], %444 {strides = array<i32>} : memref<8x32xf32, #tpu.memory_space<vmem>>, vector<8x32xf32>,
    %c0_238 = arith.constant 0 : index
    %c0_239 = arith.constant 0 : index
    %448 = vector.load %arg20[%c0_238, %c0_239] : memref<8x32xf32, #tpu.memory_space<vmem>>, vector<8x32xf32>
    tpu.vector_store %arg20[%c0_238, %c0_239], %446 {strides = array<i32>} : memref<8x32xf32, #tpu.memory_space<vmem>>, vector<8x32xf32>,
    %449 = arith.index_cast %424 : i32 to index
    %c0_240 = arith.constant 0 : index
    %450 = vector.load %arg23[%449, %c0_240] : memref<64x32xf32, #tpu.memory_space<vmem>>, vector<8x32xf32>
    tpu.vector_store %arg23[%449, %c0_240], %446 {strides = array<i32>} : memref<64x32xf32, #tpu.memory_space<vmem>>, vector<8x32xf32>,
    %c7_i32_241 = arith.constant 7 : i32
    %c7_i32_242 = arith.constant 7 : i32
    %451 = arith.subi %c7_i32_242, %c7_i32_241 : i32
    %c8_i32_243 = arith.constant 8 : i32
    %452 = arith.muli %451, %c8_i32_243 : i32
    %453 = tpu.assume_multiple %452, 8 : i32
    %454 = arith.index_cast %453 : i32 to index
    %c0_244 = arith.constant 0 : index
    %455 = vector.load %arg19[%454, %c0_244] : memref<64x128xf32, #tpu.memory_space<vmem>>, vector<8x128xf32>
    %c0_245 = arith.constant 0 : index
    %c0_246 = arith.constant 0 : index
    %456 = vector.load %arg20[%c0_245, %c0_246] : memref<8x32xf32, #tpu.memory_space<vmem>>, vector<8x32xf32>
    %457 = arith.truncf %456 : vector<8x32xf32> to vector<8x32xbf16>
    %cst_247 = arith.constant dense<0.000000e+00> : vector<8x128xf32>
    %458 = tpu.matmul %457, %243, %cst_247 {dimension_numbers = #tpu.dot_dimension_numbers<[1], [0], [0], [1], [0, 0, 1, 1], [], []>} : vector<8x32xbf16>, vector<32x128xbf16>, vector<8x128xf32> -> vector<8x128xf32>
    %459 = arith.addf %455, %458 : vector<8x128xf32>
    %460 = arith.negf %459 : vector<8x128xf32>
    %461 = math.exp %460 : vector<8x128xf32>
    %cst_248 = arith.constant 1.000000e+00 : f32
    %462 = vector.broadcast %cst_248 : f32 to vector<8x128xf32>
    %463 = arith.addf %462, %461 : vector<8x128xf32>
    %464 = arith.divf %462, %463 : vector<8x128xf32>
    %465 = math.tanh %459 : vector<8x128xf32>
    %466 = vector.extract_strided_slice %464 {offsets = [0, 0], sizes = [8, 32], strides = [1, 1]} : vector<8x128xf32> to vector<8x32xf32>
    %467 = vector.extract_strided_slice %464 {offsets = [0, 32], sizes = [8, 32], strides = [1, 1]} : vector<8x128xf32> to vector<8x32xf32>
    %468 = vector.extract_strided_slice %465 {offsets = [0, 64], sizes = [8, 32], strides = [1, 1]} : vector<8x128xf32> to vector<8x32xf32>
    %469 = vector.extract_strided_slice %464 {offsets = [0, 96], sizes = [8, 32], strides = [1, 1]} : vector<8x128xf32> to vector<8x32xf32>
    %c0_249 = arith.constant 0 : index
    %c0_250 = arith.constant 0 : index
    %470 = vector.load %arg21[%c0_249, %c0_250] : memref<8x32xf32, #tpu.memory_space<vmem>>, vector<8x32xf32>
    %471 = arith.mulf %467, %470 : vector<8x32xf32>
    %472 = arith.mulf %466, %468 : vector<8x32xf32>
    %473 = arith.addf %471, %472 : vector<8x32xf32>
    %474 = math.tanh %473 : vector<8x32xf32>
    %475 = arith.mulf %469, %474 : vector<8x32xf32>
    %c0_251 = arith.constant 0 : index
    %c0_252 = arith.constant 0 : index
    %476 = vector.load %arg21[%c0_251, %c0_252] : memref<8x32xf32, #tpu.memory_space<vmem>>, vector<8x32xf32>
    tpu.vector_store %arg21[%c0_251, %c0_252], %473 {strides = array<i32>} : memref<8x32xf32, #tpu.memory_space<vmem>>, vector<8x32xf32>,
    %c0_253 = arith.constant 0 : index
    %c0_254 = arith.constant 0 : index
    %477 = vector.load %arg20[%c0_253, %c0_254] : memref<8x32xf32, #tpu.memory_space<vmem>>, vector<8x32xf32>
    tpu.vector_store %arg20[%c0_253, %c0_254], %475 {strides = array<i32>} : memref<8x32xf32, #tpu.memory_space<vmem>>, vector<8x32xf32>,
    %478 = arith.index_cast %453 : i32 to index
    %c0_255 = arith.constant 0 : index
    %479 = vector.load %arg23[%478, %c0_255] : memref<64x32xf32, #tpu.memory_space<vmem>>, vector<8x32xf32>
    tpu.vector_store %arg23[%478, %c0_255], %475 {strides = array<i32>} : memref<64x32xf32, #tpu.memory_space<vmem>>, vector<8x32xf32>,
    %c8_i32_256 = arith.constant 8 : i32
    %c0_257 = arith.constant 0 : index
    %c0_258 = arith.constant 0 : index
    %480 = vector.load %arg22[%c0_257, %c0_258] : memref<64x32xf32, #tpu.memory_space<vmem>>, vector<64x32xf32>
    %481 = arith.truncf %480 : vector<64x32xf32> to vector<64x32xbf16>
    %c0_259 = arith.constant 0 : index
    %c0_260 = arith.constant 0 : index
    %482 = vector.load %arg7[%c0_259, %c0_260] : memref<32x128xbf16, #tpu.memory_space<vmem>>, vector<32x128xbf16>
    %cst_261 = arith.constant dense<0.000000e+00> : vector<64x128xf32>
    %483 = tpu.matmul %481, %482, %cst_261 {dimension_numbers = #tpu.dot_dimension_numbers<[1], [0], [0], [1], [0, 0, 1, 1], [], []>} : vector<64x32xbf16>, vector<32x128xbf16>, vector<64x128xf32> -> vector<64x128xf32>
    %c0_262 = arith.constant 0 : index
    %c0_263 = arith.constant 0 : index
    %484 = vector.load %arg23[%c0_262, %c0_263] : memref<64x32xf32, #tpu.memory_space<vmem>>, vector<64x32xf32>
    %485 = arith.truncf %484 : vector<64x32xf32> to vector<64x32xbf16>
    %c0_264 = arith.constant 0 : index
    %c0_265 = arith.constant 0 : index
    %486 = vector.load %arg8[%c0_264, %c0_265] : memref<32x128xbf16, #tpu.memory_space<vmem>>, vector<32x128xbf16>
    %cst_266 = arith.constant dense<0.000000e+00> : vector<64x128xf32>
    %487 = tpu.matmul %485, %486, %cst_266 {dimension_numbers = #tpu.dot_dimension_numbers<[1], [0], [0], [1], [0, 0, 1, 1], [], []>} : vector<64x32xbf16>, vector<32x128xbf16>, vector<64x128xf32> -> vector<64x128xf32>
    %488 = arith.addf %483, %487 : vector<64x128xf32>
    %c0_267 = arith.constant 0 : index
    %c0_268 = arith.constant 0 : index
    %489 = vector.load %arg10[%c0_267, %c0_268] : memref<1x128xf32, #tpu.memory_space<vmem>>, vector<1x128xf32>
    %490 = vector.broadcast %489 : vector<1x128xf32> to vector<64x128xf32>
    %491 = arith.addf %488, %490 : vector<64x128xf32>
    %c0_269 = arith.constant 0 : index
    %c0_270 = arith.constant 0 : index
    %492 = vector.load %arg19[%c0_269, %c0_270] : memref<64x128xf32, #tpu.memory_space<vmem>>, vector<64x128xf32>
    tpu.vector_store %arg19[%c0_269, %c0_270], %491 {strides = array<i32>} : memref<64x128xf32, #tpu.memory_space<vmem>>, vector<64x128xf32>,
    %c0_271 = arith.constant 0 : index
    %c0_272 = arith.constant 0 : index
    %493 = vector.load %arg9[%c0_271, %c0_272] : memref<32x128xbf16, #tpu.memory_space<vmem>>, vector<32x128xbf16>
    %cst_273 = arith.constant 0.000000e+00 : f32
    %494 = vector.broadcast %cst_273 : f32 to vector<8x32xf32>
    %c0_274 = arith.constant 0 : index
    %c0_275 = arith.constant 0 : index
    %495 = vector.load %arg20[%c0_274, %c0_275] : memref<8x32xf32, #tpu.memory_space<vmem>>, vector<8x32xf32>
    tpu.vector_store %arg20[%c0_274, %c0_275], %494 {strides = array<i32>} : memref<8x32xf32, #tpu.memory_space<vmem>>, vector<8x32xf32>,
    %cst_276 = arith.constant 0.000000e+00 : f32
    %496 = vector.broadcast %cst_276 : f32 to vector<8x32xf32>
    %c0_277 = arith.constant 0 : index
    %c0_278 = arith.constant 0 : index
    %497 = vector.load %arg21[%c0_277, %c0_278] : memref<8x32xf32, #tpu.memory_space<vmem>>, vector<8x32xf32>
    tpu.vector_store %arg21[%c0_277, %c0_278], %496 {strides = array<i32>} : memref<8x32xf32, #tpu.memory_space<vmem>>, vector<8x32xf32>,
    %c0_i32_279 = arith.constant 0 : i32
    %c8_i32_280 = arith.constant 8 : i32
    %498 = arith.muli %c0_i32_279, %c8_i32_280 : i32
    %499 = tpu.assume_multiple %498, 8 : i32
    %500 = arith.index_cast %499 : i32 to index
    %c0_281 = arith.constant 0 : index
    %501 = vector.load %arg19[%500, %c0_281] : memref<64x128xf32, #tpu.memory_space<vmem>>, vector<8x128xf32>
    %c0_282 = arith.constant 0 : index
    %c0_283 = arith.constant 0 : index
    %502 = vector.load %arg20[%c0_282, %c0_283] : memref<8x32xf32, #tpu.memory_space<vmem>>, vector<8x32xf32>
    %503 = arith.truncf %502 : vector<8x32xf32> to vector<8x32xbf16>
    %cst_284 = arith.constant dense<0.000000e+00> : vector<8x128xf32>
    %504 = tpu.matmul %503, %493, %cst_284 {dimension_numbers = #tpu.dot_dimension_numbers<[1], [0], [0], [1], [0, 0, 1, 1], [], []>} : vector<8x32xbf16>, vector<32x128xbf16>, vector<8x128xf32> -> vector<8x128xf32>
    %505 = arith.addf %501, %504 : vector<8x128xf32>
    %506 = arith.negf %505 : vector<8x128xf32>
    %507 = math.exp %506 : vector<8x128xf32>
    %cst_285 = arith.constant 1.000000e+00 : f32
    %508 = vector.broadcast %cst_285 : f32 to vector<8x128xf32>
    %509 = arith.addf %508, %507 : vector<8x128xf32>
    %510 = arith.divf %508, %509 : vector<8x128xf32>
    %511 = math.tanh %505 : vector<8x128xf32>
    %512 = vector.extract_strided_slice %510 {offsets = [0, 0], sizes = [8, 32], strides = [1, 1]} : vector<8x128xf32> to vector<8x32xf32>
    %513 = vector.extract_strided_slice %510 {offsets = [0, 32], sizes = [8, 32], strides = [1, 1]} : vector<8x128xf32> to vector<8x32xf32>
    %514 = vector.extract_strided_slice %511 {offsets = [0, 64], sizes = [8, 32], strides = [1, 1]} : vector<8x128xf32> to vector<8x32xf32>
    %515 = vector.extract_strided_slice %510 {offsets = [0, 96], sizes = [8, 32], strides = [1, 1]} : vector<8x128xf32> to vector<8x32xf32>
    %c0_286 = arith.constant 0 : index
    %c0_287 = arith.constant 0 : index
    %516 = vector.load %arg21[%c0_286, %c0_287] : memref<8x32xf32, #tpu.memory_space<vmem>>, vector<8x32xf32>
    %517 = arith.mulf %513, %516 : vector<8x32xf32>
    %518 = arith.mulf %512, %514 : vector<8x32xf32>
    %519 = arith.addf %517, %518 : vector<8x32xf32>
    %520 = math.tanh %519 : vector<8x32xf32>
    %521 = arith.mulf %515, %520 : vector<8x32xf32>
    %c0_288 = arith.constant 0 : index
    %c0_289 = arith.constant 0 : index
    %522 = vector.load %arg21[%c0_288, %c0_289] : memref<8x32xf32, #tpu.memory_space<vmem>>, vector<8x32xf32>
    tpu.vector_store %arg21[%c0_288, %c0_289], %519 {strides = array<i32>} : memref<8x32xf32, #tpu.memory_space<vmem>>, vector<8x32xf32>,
    %c0_290 = arith.constant 0 : index
    %c0_291 = arith.constant 0 : index
    %523 = vector.load %arg20[%c0_290, %c0_291] : memref<8x32xf32, #tpu.memory_space<vmem>>, vector<8x32xf32>
    tpu.vector_store %arg20[%c0_290, %c0_291], %521 {strides = array<i32>} : memref<8x32xf32, #tpu.memory_space<vmem>>, vector<8x32xf32>,
    %c1_i32_292 = arith.constant 1 : i32
    %c8_i32_293 = arith.constant 8 : i32
    %524 = arith.muli %c1_i32_292, %c8_i32_293 : i32
    %525 = tpu.assume_multiple %524, 8 : i32
    %526 = arith.index_cast %525 : i32 to index
    %c0_294 = arith.constant 0 : index
    %527 = vector.load %arg19[%526, %c0_294] : memref<64x128xf32, #tpu.memory_space<vmem>>, vector<8x128xf32>
    %c0_295 = arith.constant 0 : index
    %c0_296 = arith.constant 0 : index
    %528 = vector.load %arg20[%c0_295, %c0_296] : memref<8x32xf32, #tpu.memory_space<vmem>>, vector<8x32xf32>
    %529 = arith.truncf %528 : vector<8x32xf32> to vector<8x32xbf16>
    %cst_297 = arith.constant dense<0.000000e+00> : vector<8x128xf32>
    %530 = tpu.matmul %529, %493, %cst_297 {dimension_numbers = #tpu.dot_dimension_numbers<[1], [0], [0], [1], [0, 0, 1, 1], [], []>} : vector<8x32xbf16>, vector<32x128xbf16>, vector<8x128xf32> -> vector<8x128xf32>
    %531 = arith.addf %527, %530 : vector<8x128xf32>
    %532 = arith.negf %531 : vector<8x128xf32>
    %533 = math.exp %532 : vector<8x128xf32>
    %cst_298 = arith.constant 1.000000e+00 : f32
    %534 = vector.broadcast %cst_298 : f32 to vector<8x128xf32>
    %535 = arith.addf %534, %533 : vector<8x128xf32>
    %536 = arith.divf %534, %535 : vector<8x128xf32>
    %537 = math.tanh %531 : vector<8x128xf32>
    %538 = vector.extract_strided_slice %536 {offsets = [0, 0], sizes = [8, 32], strides = [1, 1]} : vector<8x128xf32> to vector<8x32xf32>
    %539 = vector.extract_strided_slice %536 {offsets = [0, 32], sizes = [8, 32], strides = [1, 1]} : vector<8x128xf32> to vector<8x32xf32>
    %540 = vector.extract_strided_slice %537 {offsets = [0, 64], sizes = [8, 32], strides = [1, 1]} : vector<8x128xf32> to vector<8x32xf32>
    %541 = vector.extract_strided_slice %536 {offsets = [0, 96], sizes = [8, 32], strides = [1, 1]} : vector<8x128xf32> to vector<8x32xf32>
    %c0_299 = arith.constant 0 : index
    %c0_300 = arith.constant 0 : index
    %542 = vector.load %arg21[%c0_299, %c0_300] : memref<8x32xf32, #tpu.memory_space<vmem>>, vector<8x32xf32>
    %543 = arith.mulf %539, %542 : vector<8x32xf32>
    %544 = arith.mulf %538, %540 : vector<8x32xf32>
    %545 = arith.addf %543, %544 : vector<8x32xf32>
    %546 = math.tanh %545 : vector<8x32xf32>
    %547 = arith.mulf %541, %546 : vector<8x32xf32>
    %c0_301 = arith.constant 0 : index
    %c0_302 = arith.constant 0 : index
    %548 = vector.load %arg21[%c0_301, %c0_302] : memref<8x32xf32, #tpu.memory_space<vmem>>, vector<8x32xf32>
    tpu.vector_store %arg21[%c0_301, %c0_302], %545 {strides = array<i32>} : memref<8x32xf32, #tpu.memory_space<vmem>>, vector<8x32xf32>,
    %c0_303 = arith.constant 0 : index
    %c0_304 = arith.constant 0 : index
    %549 = vector.load %arg20[%c0_303, %c0_304] : memref<8x32xf32, #tpu.memory_space<vmem>>, vector<8x32xf32>
    tpu.vector_store %arg20[%c0_303, %c0_304], %547 {strides = array<i32>} : memref<8x32xf32, #tpu.memory_space<vmem>>, vector<8x32xf32>,
    %c2_i32_305 = arith.constant 2 : i32
    %c8_i32_306 = arith.constant 8 : i32
    %550 = arith.muli %c2_i32_305, %c8_i32_306 : i32
    %551 = tpu.assume_multiple %550, 8 : i32
    %552 = arith.index_cast %551 : i32 to index
    %c0_307 = arith.constant 0 : index
    %553 = vector.load %arg19[%552, %c0_307] : memref<64x128xf32, #tpu.memory_space<vmem>>, vector<8x128xf32>
    %c0_308 = arith.constant 0 : index
    %c0_309 = arith.constant 0 : index
    %554 = vector.load %arg20[%c0_308, %c0_309] : memref<8x32xf32, #tpu.memory_space<vmem>>, vector<8x32xf32>
    %555 = arith.truncf %554 : vector<8x32xf32> to vector<8x32xbf16>
    %cst_310 = arith.constant dense<0.000000e+00> : vector<8x128xf32>
    %556 = tpu.matmul %555, %493, %cst_310 {dimension_numbers = #tpu.dot_dimension_numbers<[1], [0], [0], [1], [0, 0, 1, 1], [], []>} : vector<8x32xbf16>, vector<32x128xbf16>, vector<8x128xf32> -> vector<8x128xf32>
    %557 = arith.addf %553, %556 : vector<8x128xf32>
    %558 = arith.negf %557 : vector<8x128xf32>
    %559 = math.exp %558 : vector<8x128xf32>
    %cst_311 = arith.constant 1.000000e+00 : f32
    %560 = vector.broadcast %cst_311 : f32 to vector<8x128xf32>
    %561 = arith.addf %560, %559 : vector<8x128xf32>
    %562 = arith.divf %560, %561 : vector<8x128xf32>
    %563 = math.tanh %557 : vector<8x128xf32>
    %564 = vector.extract_strided_slice %562 {offsets = [0, 0], sizes = [8, 32], strides = [1, 1]} : vector<8x128xf32> to vector<8x32xf32>
    %565 = vector.extract_strided_slice %562 {offsets = [0, 32], sizes = [8, 32], strides = [1, 1]} : vector<8x128xf32> to vector<8x32xf32>
    %566 = vector.extract_strided_slice %563 {offsets = [0, 64], sizes = [8, 32], strides = [1, 1]} : vector<8x128xf32> to vector<8x32xf32>
    %567 = vector.extract_strided_slice %562 {offsets = [0, 96], sizes = [8, 32], strides = [1, 1]} : vector<8x128xf32> to vector<8x32xf32>
    %c0_312 = arith.constant 0 : index
    %c0_313 = arith.constant 0 : index
    %568 = vector.load %arg21[%c0_312, %c0_313] : memref<8x32xf32, #tpu.memory_space<vmem>>, vector<8x32xf32>
    %569 = arith.mulf %565, %568 : vector<8x32xf32>
    %570 = arith.mulf %564, %566 : vector<8x32xf32>
    %571 = arith.addf %569, %570 : vector<8x32xf32>
    %572 = math.tanh %571 : vector<8x32xf32>
    %573 = arith.mulf %567, %572 : vector<8x32xf32>
    %c0_314 = arith.constant 0 : index
    %c0_315 = arith.constant 0 : index
    %574 = vector.load %arg21[%c0_314, %c0_315] : memref<8x32xf32, #tpu.memory_space<vmem>>, vector<8x32xf32>
    tpu.vector_store %arg21[%c0_314, %c0_315], %571 {strides = array<i32>} : memref<8x32xf32, #tpu.memory_space<vmem>>, vector<8x32xf32>,
    %c0_316 = arith.constant 0 : index
    %c0_317 = arith.constant 0 : index
    %575 = vector.load %arg20[%c0_316, %c0_317] : memref<8x32xf32, #tpu.memory_space<vmem>>, vector<8x32xf32>
    tpu.vector_store %arg20[%c0_316, %c0_317], %573 {strides = array<i32>} : memref<8x32xf32, #tpu.memory_space<vmem>>, vector<8x32xf32>,
    %c3_i32_318 = arith.constant 3 : i32
    %c8_i32_319 = arith.constant 8 : i32
    %576 = arith.muli %c3_i32_318, %c8_i32_319 : i32
    %577 = tpu.assume_multiple %576, 8 : i32
    %578 = arith.index_cast %577 : i32 to index
    %c0_320 = arith.constant 0 : index
    %579 = vector.load %arg19[%578, %c0_320] : memref<64x128xf32, #tpu.memory_space<vmem>>, vector<8x128xf32>
    %c0_321 = arith.constant 0 : index
    %c0_322 = arith.constant 0 : index
    %580 = vector.load %arg20[%c0_321, %c0_322] : memref<8x32xf32, #tpu.memory_space<vmem>>, vector<8x32xf32>
    %581 = arith.truncf %580 : vector<8x32xf32> to vector<8x32xbf16>
    %cst_323 = arith.constant dense<0.000000e+00> : vector<8x128xf32>
    %582 = tpu.matmul %581, %493, %cst_323 {dimension_numbers = #tpu.dot_dimension_numbers<[1], [0], [0], [1], [0, 0, 1, 1], [], []>} : vector<8x32xbf16>, vector<32x128xbf16>, vector<8x128xf32> -> vector<8x128xf32>
    %583 = arith.addf %579, %582 : vector<8x128xf32>
    %584 = arith.negf %583 : vector<8x128xf32>
    %585 = math.exp %584 : vector<8x128xf32>
    %cst_324 = arith.constant 1.000000e+00 : f32
    %586 = vector.broadcast %cst_324 : f32 to vector<8x128xf32>
    %587 = arith.addf %586, %585 : vector<8x128xf32>
    %588 = arith.divf %586, %587 : vector<8x128xf32>
    %589 = math.tanh %583 : vector<8x128xf32>
    %590 = vector.extract_strided_slice %588 {offsets = [0, 0], sizes = [8, 32], strides = [1, 1]} : vector<8x128xf32> to vector<8x32xf32>
    %591 = vector.extract_strided_slice %588 {offsets = [0, 32], sizes = [8, 32], strides = [1, 1]} : vector<8x128xf32> to vector<8x32xf32>
    %592 = vector.extract_strided_slice %589 {offsets = [0, 64], sizes = [8, 32], strides = [1, 1]} : vector<8x128xf32> to vector<8x32xf32>
    %593 = vector.extract_strided_slice %588 {offsets = [0, 96], sizes = [8, 32], strides = [1, 1]} : vector<8x128xf32> to vector<8x32xf32>
    %c0_325 = arith.constant 0 : index
    %c0_326 = arith.constant 0 : index
    %594 = vector.load %arg21[%c0_325, %c0_326] : memref<8x32xf32, #tpu.memory_space<vmem>>, vector<8x32xf32>
    %595 = arith.mulf %591, %594 : vector<8x32xf32>
    %596 = arith.mulf %590, %592 : vector<8x32xf32>
    %597 = arith.addf %595, %596 : vector<8x32xf32>
    %598 = math.tanh %597 : vector<8x32xf32>
    %599 = arith.mulf %593, %598 : vector<8x32xf32>
    %c0_327 = arith.constant 0 : index
    %c0_328 = arith.constant 0 : index
    %600 = vector.load %arg21[%c0_327, %c0_328] : memref<8x32xf32, #tpu.memory_space<vmem>>, vector<8x32xf32>
    tpu.vector_store %arg21[%c0_327, %c0_328], %597 {strides = array<i32>} : memref<8x32xf32, #tpu.memory_space<vmem>>, vector<8x32xf32>,
    %c0_329 = arith.constant 0 : index
    %c0_330 = arith.constant 0 : index
    %601 = vector.load %arg20[%c0_329, %c0_330] : memref<8x32xf32, #tpu.memory_space<vmem>>, vector<8x32xf32>
    tpu.vector_store %arg20[%c0_329, %c0_330], %599 {strides = array<i32>} : memref<8x32xf32, #tpu.memory_space<vmem>>, vector<8x32xf32>,
    %c4_i32_331 = arith.constant 4 : i32
    %c8_i32_332 = arith.constant 8 : i32
    %602 = arith.muli %c4_i32_331, %c8_i32_332 : i32
    %603 = tpu.assume_multiple %602, 8 : i32
    %604 = arith.index_cast %603 : i32 to index
    %c0_333 = arith.constant 0 : index
    %605 = vector.load %arg19[%604, %c0_333] : memref<64x128xf32, #tpu.memory_space<vmem>>, vector<8x128xf32>
    %c0_334 = arith.constant 0 : index
    %c0_335 = arith.constant 0 : index
    %606 = vector.load %arg20[%c0_334, %c0_335] : memref<8x32xf32, #tpu.memory_space<vmem>>, vector<8x32xf32>
    %607 = arith.truncf %606 : vector<8x32xf32> to vector<8x32xbf16>
    %cst_336 = arith.constant dense<0.000000e+00> : vector<8x128xf32>
    %608 = tpu.matmul %607, %493, %cst_336 {dimension_numbers = #tpu.dot_dimension_numbers<[1], [0], [0], [1], [0, 0, 1, 1], [], []>} : vector<8x32xbf16>, vector<32x128xbf16>, vector<8x128xf32> -> vector<8x128xf32>
    %609 = arith.addf %605, %608 : vector<8x128xf32>
    %610 = arith.negf %609 : vector<8x128xf32>
    %611 = math.exp %610 : vector<8x128xf32>
    %cst_337 = arith.constant 1.000000e+00 : f32
    %612 = vector.broadcast %cst_337 : f32 to vector<8x128xf32>
    %613 = arith.addf %612, %611 : vector<8x128xf32>
    %614 = arith.divf %612, %613 : vector<8x128xf32>
    %615 = math.tanh %609 : vector<8x128xf32>
    %616 = vector.extract_strided_slice %614 {offsets = [0, 0], sizes = [8, 32], strides = [1, 1]} : vector<8x128xf32> to vector<8x32xf32>
    %617 = vector.extract_strided_slice %614 {offsets = [0, 32], sizes = [8, 32], strides = [1, 1]} : vector<8x128xf32> to vector<8x32xf32>
    %618 = vector.extract_strided_slice %615 {offsets = [0, 64], sizes = [8, 32], strides = [1, 1]} : vector<8x128xf32> to vector<8x32xf32>
    %619 = vector.extract_strided_slice %614 {offsets = [0, 96], sizes = [8, 32], strides = [1, 1]} : vector<8x128xf32> to vector<8x32xf32>
    %c0_338 = arith.constant 0 : index
    %c0_339 = arith.constant 0 : index
    %620 = vector.load %arg21[%c0_338, %c0_339] : memref<8x32xf32, #tpu.memory_space<vmem>>, vector<8x32xf32>
    %621 = arith.mulf %617, %620 : vector<8x32xf32>
    %622 = arith.mulf %616, %618 : vector<8x32xf32>
    %623 = arith.addf %621, %622 : vector<8x32xf32>
    %624 = math.tanh %623 : vector<8x32xf32>
    %625 = arith.mulf %619, %624 : vector<8x32xf32>
    %c0_340 = arith.constant 0 : index
    %c0_341 = arith.constant 0 : index
    %626 = vector.load %arg21[%c0_340, %c0_341] : memref<8x32xf32, #tpu.memory_space<vmem>>, vector<8x32xf32>
    tpu.vector_store %arg21[%c0_340, %c0_341], %623 {strides = array<i32>} : memref<8x32xf32, #tpu.memory_space<vmem>>, vector<8x32xf32>,
    %c0_342 = arith.constant 0 : index
    %c0_343 = arith.constant 0 : index
    %627 = vector.load %arg20[%c0_342, %c0_343] : memref<8x32xf32, #tpu.memory_space<vmem>>, vector<8x32xf32>
    tpu.vector_store %arg20[%c0_342, %c0_343], %625 {strides = array<i32>} : memref<8x32xf32, #tpu.memory_space<vmem>>, vector<8x32xf32>,
    %c5_i32_344 = arith.constant 5 : i32
    %c8_i32_345 = arith.constant 8 : i32
    %628 = arith.muli %c5_i32_344, %c8_i32_345 : i32
    %629 = tpu.assume_multiple %628, 8 : i32
    %630 = arith.index_cast %629 : i32 to index
    %c0_346 = arith.constant 0 : index
    %631 = vector.load %arg19[%630, %c0_346] : memref<64x128xf32, #tpu.memory_space<vmem>>, vector<8x128xf32>
    %c0_347 = arith.constant 0 : index
    %c0_348 = arith.constant 0 : index
    %632 = vector.load %arg20[%c0_347, %c0_348] : memref<8x32xf32, #tpu.memory_space<vmem>>, vector<8x32xf32>
    %633 = arith.truncf %632 : vector<8x32xf32> to vector<8x32xbf16>
    %cst_349 = arith.constant dense<0.000000e+00> : vector<8x128xf32>
    %634 = tpu.matmul %633, %493, %cst_349 {dimension_numbers = #tpu.dot_dimension_numbers<[1], [0], [0], [1], [0, 0, 1, 1], [], []>} : vector<8x32xbf16>, vector<32x128xbf16>, vector<8x128xf32> -> vector<8x128xf32>
    %635 = arith.addf %631, %634 : vector<8x128xf32>
    %636 = arith.negf %635 : vector<8x128xf32>
    %637 = math.exp %636 : vector<8x128xf32>
    %cst_350 = arith.constant 1.000000e+00 : f32
    %638 = vector.broadcast %cst_350 : f32 to vector<8x128xf32>
    %639 = arith.addf %638, %637 : vector<8x128xf32>
    %640 = arith.divf %638, %639 : vector<8x128xf32>
    %641 = math.tanh %635 : vector<8x128xf32>
    %642 = vector.extract_strided_slice %640 {offsets = [0, 0], sizes = [8, 32], strides = [1, 1]} : vector<8x128xf32> to vector<8x32xf32>
    %643 = vector.extract_strided_slice %640 {offsets = [0, 32], sizes = [8, 32], strides = [1, 1]} : vector<8x128xf32> to vector<8x32xf32>
    %644 = vector.extract_strided_slice %641 {offsets = [0, 64], sizes = [8, 32], strides = [1, 1]} : vector<8x128xf32> to vector<8x32xf32>
    %645 = vector.extract_strided_slice %640 {offsets = [0, 96], sizes = [8, 32], strides = [1, 1]} : vector<8x128xf32> to vector<8x32xf32>
    %c0_351 = arith.constant 0 : index
    %c0_352 = arith.constant 0 : index
    %646 = vector.load %arg21[%c0_351, %c0_352] : memref<8x32xf32, #tpu.memory_space<vmem>>, vector<8x32xf32>
    %647 = arith.mulf %643, %646 : vector<8x32xf32>
    %648 = arith.mulf %642, %644 : vector<8x32xf32>
    %649 = arith.addf %647, %648 : vector<8x32xf32>
    %650 = math.tanh %649 : vector<8x32xf32>
    %651 = arith.mulf %645, %650 : vector<8x32xf32>
    %c0_353 = arith.constant 0 : index
    %c0_354 = arith.constant 0 : index
    %652 = vector.load %arg21[%c0_353, %c0_354] : memref<8x32xf32, #tpu.memory_space<vmem>>, vector<8x32xf32>
    tpu.vector_store %arg21[%c0_353, %c0_354], %649 {strides = array<i32>} : memref<8x32xf32, #tpu.memory_space<vmem>>, vector<8x32xf32>,
    %c0_355 = arith.constant 0 : index
    %c0_356 = arith.constant 0 : index
    %653 = vector.load %arg20[%c0_355, %c0_356] : memref<8x32xf32, #tpu.memory_space<vmem>>, vector<8x32xf32>
    tpu.vector_store %arg20[%c0_355, %c0_356], %651 {strides = array<i32>} : memref<8x32xf32, #tpu.memory_space<vmem>>, vector<8x32xf32>,
    %c6_i32_357 = arith.constant 6 : i32
    %c8_i32_358 = arith.constant 8 : i32
    %654 = arith.muli %c6_i32_357, %c8_i32_358 : i32
    %655 = tpu.assume_multiple %654, 8 : i32
    %656 = arith.index_cast %655 : i32 to index
    %c0_359 = arith.constant 0 : index
    %657 = vector.load %arg19[%656, %c0_359] : memref<64x128xf32, #tpu.memory_space<vmem>>, vector<8x128xf32>
    %c0_360 = arith.constant 0 : index
    %c0_361 = arith.constant 0 : index
    %658 = vector.load %arg20[%c0_360, %c0_361] : memref<8x32xf32, #tpu.memory_space<vmem>>, vector<8x32xf32>
    %659 = arith.truncf %658 : vector<8x32xf32> to vector<8x32xbf16>
    %cst_362 = arith.constant dense<0.000000e+00> : vector<8x128xf32>
    %660 = tpu.matmul %659, %493, %cst_362 {dimension_numbers = #tpu.dot_dimension_numbers<[1], [0], [0], [1], [0, 0, 1, 1], [], []>} : vector<8x32xbf16>, vector<32x128xbf16>, vector<8x128xf32> -> vector<8x128xf32>
    %661 = arith.addf %657, %660 : vector<8x128xf32>
    %662 = arith.negf %661 : vector<8x128xf32>
    %663 = math.exp %662 : vector<8x128xf32>
    %cst_363 = arith.constant 1.000000e+00 : f32
    %664 = vector.broadcast %cst_363 : f32 to vector<8x128xf32>
    %665 = arith.addf %664, %663 : vector<8x128xf32>
    %666 = arith.divf %664, %665 : vector<8x128xf32>
    %667 = math.tanh %661 : vector<8x128xf32>
    %668 = vector.extract_strided_slice %666 {offsets = [0, 0], sizes = [8, 32], strides = [1, 1]} : vector<8x128xf32> to vector<8x32xf32>
    %669 = vector.extract_strided_slice %666 {offsets = [0, 32], sizes = [8, 32], strides = [1, 1]} : vector<8x128xf32> to vector<8x32xf32>
    %670 = vector.extract_strided_slice %667 {offsets = [0, 64], sizes = [8, 32], strides = [1, 1]} : vector<8x128xf32> to vector<8x32xf32>
    %671 = vector.extract_strided_slice %666 {offsets = [0, 96], sizes = [8, 32], strides = [1, 1]} : vector<8x128xf32> to vector<8x32xf32>
    %c0_364 = arith.constant 0 : index
    %c0_365 = arith.constant 0 : index
    %672 = vector.load %arg21[%c0_364, %c0_365] : memref<8x32xf32, #tpu.memory_space<vmem>>, vector<8x32xf32>
    %673 = arith.mulf %669, %672 : vector<8x32xf32>
    %674 = arith.mulf %668, %670 : vector<8x32xf32>
    %675 = arith.addf %673, %674 : vector<8x32xf32>
    %676 = math.tanh %675 : vector<8x32xf32>
    %677 = arith.mulf %671, %676 : vector<8x32xf32>
    %c0_366 = arith.constant 0 : index
    %c0_367 = arith.constant 0 : index
    %678 = vector.load %arg21[%c0_366, %c0_367] : memref<8x32xf32, #tpu.memory_space<vmem>>, vector<8x32xf32>
    tpu.vector_store %arg21[%c0_366, %c0_367], %675 {strides = array<i32>} : memref<8x32xf32, #tpu.memory_space<vmem>>, vector<8x32xf32>,
    %c0_368 = arith.constant 0 : index
    %c0_369 = arith.constant 0 : index
    %679 = vector.load %arg20[%c0_368, %c0_369] : memref<8x32xf32, #tpu.memory_space<vmem>>, vector<8x32xf32>
    tpu.vector_store %arg20[%c0_368, %c0_369], %677 {strides = array<i32>} : memref<8x32xf32, #tpu.memory_space<vmem>>, vector<8x32xf32>,
    %c7_i32_370 = arith.constant 7 : i32
    %c8_i32_371 = arith.constant 8 : i32
    %680 = arith.muli %c7_i32_370, %c8_i32_371 : i32
    %681 = tpu.assume_multiple %680, 8 : i32
    %682 = arith.index_cast %681 : i32 to index
    %c0_372 = arith.constant 0 : index
    %683 = vector.load %arg19[%682, %c0_372] : memref<64x128xf32, #tpu.memory_space<vmem>>, vector<8x128xf32>
    %c0_373 = arith.constant 0 : index
    %c0_374 = arith.constant 0 : index
    %684 = vector.load %arg20[%c0_373, %c0_374] : memref<8x32xf32, #tpu.memory_space<vmem>>, vector<8x32xf32>
    %685 = arith.truncf %684 : vector<8x32xf32> to vector<8x32xbf16>
    %cst_375 = arith.constant dense<0.000000e+00> : vector<8x128xf32>
    %686 = tpu.matmul %685, %493, %cst_375 {dimension_numbers = #tpu.dot_dimension_numbers<[1], [0], [0], [1], [0, 0, 1, 1], [], []>} : vector<8x32xbf16>, vector<32x128xbf16>, vector<8x128xf32> -> vector<8x128xf32>
    %687 = arith.addf %683, %686 : vector<8x128xf32>
    %688 = arith.negf %687 : vector<8x128xf32>
    %689 = math.exp %688 : vector<8x128xf32>
    %cst_376 = arith.constant 1.000000e+00 : f32
    %690 = vector.broadcast %cst_376 : f32 to vector<8x128xf32>
    %691 = arith.addf %690, %689 : vector<8x128xf32>
    %692 = arith.divf %690, %691 : vector<8x128xf32>
    %693 = math.tanh %687 : vector<8x128xf32>
    %694 = vector.extract_strided_slice %692 {offsets = [0, 0], sizes = [8, 32], strides = [1, 1]} : vector<8x128xf32> to vector<8x32xf32>
    %695 = vector.extract_strided_slice %692 {offsets = [0, 32], sizes = [8, 32], strides = [1, 1]} : vector<8x128xf32> to vector<8x32xf32>
    %696 = vector.extract_strided_slice %693 {offsets = [0, 64], sizes = [8, 32], strides = [1, 1]} : vector<8x128xf32> to vector<8x32xf32>
    %697 = vector.extract_strided_slice %692 {offsets = [0, 96], sizes = [8, 32], strides = [1, 1]} : vector<8x128xf32> to vector<8x32xf32>
    %c0_377 = arith.constant 0 : index
    %c0_378 = arith.constant 0 : index
    %698 = vector.load %arg21[%c0_377, %c0_378] : memref<8x32xf32, #tpu.memory_space<vmem>>, vector<8x32xf32>
    %699 = arith.mulf %695, %698 : vector<8x32xf32>
    %700 = arith.mulf %694, %696 : vector<8x32xf32>
    %701 = arith.addf %699, %700 : vector<8x32xf32>
    %702 = math.tanh %701 : vector<8x32xf32>
    %703 = arith.mulf %697, %702 : vector<8x32xf32>
    %c0_379 = arith.constant 0 : index
    %c0_380 = arith.constant 0 : index
    %704 = vector.load %arg21[%c0_379, %c0_380] : memref<8x32xf32, #tpu.memory_space<vmem>>, vector<8x32xf32>
    tpu.vector_store %arg21[%c0_379, %c0_380], %701 {strides = array<i32>} : memref<8x32xf32, #tpu.memory_space<vmem>>, vector<8x32xf32>,
    %c0_381 = arith.constant 0 : index
    %c0_382 = arith.constant 0 : index
    %705 = vector.load %arg20[%c0_381, %c0_382] : memref<8x32xf32, #tpu.memory_space<vmem>>, vector<8x32xf32>
    tpu.vector_store %arg20[%c0_381, %c0_382], %703 {strides = array<i32>} : memref<8x32xf32, #tpu.memory_space<vmem>>, vector<8x32xf32>,
    %c8_i32_383 = arith.constant 8 : i32
    %c0_384 = arith.constant 0 : index
    %c0_385 = arith.constant 0 : index
    %706 = vector.load %arg20[%c0_384, %c0_385] : memref<8x32xf32, #tpu.memory_space<vmem>>, vector<8x32xf32>
    %c0_386 = arith.constant 0 : index
    %c0_387 = arith.constant 0 : index
    %707 = vector.load %arg22[%c0_386, %c0_387] : memref<64x32xf32, #tpu.memory_space<vmem>>, vector<64x32xf32>
    %708 = arith.truncf %707 : vector<64x32xf32> to vector<64x32xbf16>
    %c0_388 = arith.constant 0 : index
    %c0_389 = arith.constant 0 : index
    %709 = vector.load %arg11[%c0_388, %c0_389] : memref<32x128xbf16, #tpu.memory_space<vmem>>, vector<32x128xbf16>
    %cst_390 = arith.constant dense<0.000000e+00> : vector<64x128xf32>
    %710 = tpu.matmul %708, %709, %cst_390 {dimension_numbers = #tpu.dot_dimension_numbers<[1], [0], [0], [1], [0, 0, 1, 1], [], []>} : vector<64x32xbf16>, vector<32x128xbf16>, vector<64x128xf32> -> vector<64x128xf32>
    %c0_391 = arith.constant 0 : index
    %c0_392 = arith.constant 0 : index
    %711 = vector.load %arg23[%c0_391, %c0_392] : memref<64x32xf32, #tpu.memory_space<vmem>>, vector<64x32xf32>
    %712 = arith.truncf %711 : vector<64x32xf32> to vector<64x32xbf16>
    %c0_393 = arith.constant 0 : index
    %c0_394 = arith.constant 0 : index
    %713 = vector.load %arg12[%c0_393, %c0_394] : memref<32x128xbf16, #tpu.memory_space<vmem>>, vector<32x128xbf16>
    %cst_395 = arith.constant dense<0.000000e+00> : vector<64x128xf32>
    %714 = tpu.matmul %712, %713, %cst_395 {dimension_numbers = #tpu.dot_dimension_numbers<[1], [0], [0], [1], [0, 0, 1, 1], [], []>} : vector<64x32xbf16>, vector<32x128xbf16>, vector<64x128xf32> -> vector<64x128xf32>
    %715 = arith.addf %710, %714 : vector<64x128xf32>
    %c0_396 = arith.constant 0 : index
    %c0_397 = arith.constant 0 : index
    %716 = vector.load %arg14[%c0_396, %c0_397] : memref<1x128xf32, #tpu.memory_space<vmem>>, vector<1x128xf32>
    %717 = vector.broadcast %716 : vector<1x128xf32> to vector<64x128xf32>
    %718 = arith.addf %715, %717 : vector<64x128xf32>
    %c0_398 = arith.constant 0 : index
    %c0_399 = arith.constant 0 : index
    %719 = vector.load %arg19[%c0_398, %c0_399] : memref<64x128xf32, #tpu.memory_space<vmem>>, vector<64x128xf32>
    tpu.vector_store %arg19[%c0_398, %c0_399], %718 {strides = array<i32>} : memref<64x128xf32, #tpu.memory_space<vmem>>, vector<64x128xf32>,
    %c0_400 = arith.constant 0 : index
    %c0_401 = arith.constant 0 : index
    %720 = vector.load %arg13[%c0_400, %c0_401] : memref<32x128xbf16, #tpu.memory_space<vmem>>, vector<32x128xbf16>
    %cst_402 = arith.constant 0.000000e+00 : f32
    %721 = vector.broadcast %cst_402 : f32 to vector<8x32xf32>
    %c0_403 = arith.constant 0 : index
    %c0_404 = arith.constant 0 : index
    %722 = vector.load %arg20[%c0_403, %c0_404] : memref<8x32xf32, #tpu.memory_space<vmem>>, vector<8x32xf32>
    tpu.vector_store %arg20[%c0_403, %c0_404], %721 {strides = array<i32>} : memref<8x32xf32, #tpu.memory_space<vmem>>, vector<8x32xf32>,
    %cst_405 = arith.constant 0.000000e+00 : f32
    %723 = vector.broadcast %cst_405 : f32 to vector<8x32xf32>
    %c0_406 = arith.constant 0 : index
    %c0_407 = arith.constant 0 : index
    %724 = vector.load %arg21[%c0_406, %c0_407] : memref<8x32xf32, #tpu.memory_space<vmem>>, vector<8x32xf32>
    tpu.vector_store %arg21[%c0_406, %c0_407], %723 {strides = array<i32>} : memref<8x32xf32, #tpu.memory_space<vmem>>, vector<8x32xf32>,
    %c0_i32_408 = arith.constant 0 : i32
    %c7_i32_409 = arith.constant 7 : i32
    %725 = arith.subi %c7_i32_409, %c0_i32_408 : i32
    %c8_i32_410 = arith.constant 8 : i32
    %726 = arith.muli %725, %c8_i32_410 : i32
    %727 = tpu.assume_multiple %726, 8 : i32
    %728 = arith.index_cast %727 : i32 to index
    %c0_411 = arith.constant 0 : index
    %729 = vector.load %arg19[%728, %c0_411] : memref<64x128xf32, #tpu.memory_space<vmem>>, vector<8x128xf32>
    %c0_412 = arith.constant 0 : index
    %c0_413 = arith.constant 0 : index
    %730 = vector.load %arg20[%c0_412, %c0_413] : memref<8x32xf32, #tpu.memory_space<vmem>>, vector<8x32xf32>
    %731 = arith.truncf %730 : vector<8x32xf32> to vector<8x32xbf16>
    %cst_414 = arith.constant dense<0.000000e+00> : vector<8x128xf32>
    %732 = tpu.matmul %731, %720, %cst_414 {dimension_numbers = #tpu.dot_dimension_numbers<[1], [0], [0], [1], [0, 0, 1, 1], [], []>} : vector<8x32xbf16>, vector<32x128xbf16>, vector<8x128xf32> -> vector<8x128xf32>
    %733 = arith.addf %729, %732 : vector<8x128xf32>
    %734 = arith.negf %733 : vector<8x128xf32>
    %735 = math.exp %734 : vector<8x128xf32>
    %cst_415 = arith.constant 1.000000e+00 : f32
    %736 = vector.broadcast %cst_415 : f32 to vector<8x128xf32>
    %737 = arith.addf %736, %735 : vector<8x128xf32>
    %738 = arith.divf %736, %737 : vector<8x128xf32>
    %739 = math.tanh %733 : vector<8x128xf32>
    %740 = vector.extract_strided_slice %738 {offsets = [0, 0], sizes = [8, 32], strides = [1, 1]} : vector<8x128xf32> to vector<8x32xf32>
    %741 = vector.extract_strided_slice %738 {offsets = [0, 32], sizes = [8, 32], strides = [1, 1]} : vector<8x128xf32> to vector<8x32xf32>
    %742 = vector.extract_strided_slice %739 {offsets = [0, 64], sizes = [8, 32], strides = [1, 1]} : vector<8x128xf32> to vector<8x32xf32>
    %743 = vector.extract_strided_slice %738 {offsets = [0, 96], sizes = [8, 32], strides = [1, 1]} : vector<8x128xf32> to vector<8x32xf32>
    %c0_416 = arith.constant 0 : index
    %c0_417 = arith.constant 0 : index
    %744 = vector.load %arg21[%c0_416, %c0_417] : memref<8x32xf32, #tpu.memory_space<vmem>>, vector<8x32xf32>
    %745 = arith.mulf %741, %744 : vector<8x32xf32>
    %746 = arith.mulf %740, %742 : vector<8x32xf32>
    %747 = arith.addf %745, %746 : vector<8x32xf32>
    %748 = math.tanh %747 : vector<8x32xf32>
    %749 = arith.mulf %743, %748 : vector<8x32xf32>
    %c0_418 = arith.constant 0 : index
    %c0_419 = arith.constant 0 : index
    %750 = vector.load %arg21[%c0_418, %c0_419] : memref<8x32xf32, #tpu.memory_space<vmem>>, vector<8x32xf32>
    tpu.vector_store %arg21[%c0_418, %c0_419], %747 {strides = array<i32>} : memref<8x32xf32, #tpu.memory_space<vmem>>, vector<8x32xf32>,
    %c0_420 = arith.constant 0 : index
    %c0_421 = arith.constant 0 : index
    %751 = vector.load %arg20[%c0_420, %c0_421] : memref<8x32xf32, #tpu.memory_space<vmem>>, vector<8x32xf32>
    tpu.vector_store %arg20[%c0_420, %c0_421], %749 {strides = array<i32>} : memref<8x32xf32, #tpu.memory_space<vmem>>, vector<8x32xf32>,
    %c1_i32_422 = arith.constant 1 : i32
    %c7_i32_423 = arith.constant 7 : i32
    %752 = arith.subi %c7_i32_423, %c1_i32_422 : i32
    %c8_i32_424 = arith.constant 8 : i32
    %753 = arith.muli %752, %c8_i32_424 : i32
    %754 = tpu.assume_multiple %753, 8 : i32
    %755 = arith.index_cast %754 : i32 to index
    %c0_425 = arith.constant 0 : index
    %756 = vector.load %arg19[%755, %c0_425] : memref<64x128xf32, #tpu.memory_space<vmem>>, vector<8x128xf32>
    %c0_426 = arith.constant 0 : index
    %c0_427 = arith.constant 0 : index
    %757 = vector.load %arg20[%c0_426, %c0_427] : memref<8x32xf32, #tpu.memory_space<vmem>>, vector<8x32xf32>
    %758 = arith.truncf %757 : vector<8x32xf32> to vector<8x32xbf16>
    %cst_428 = arith.constant dense<0.000000e+00> : vector<8x128xf32>
    %759 = tpu.matmul %758, %720, %cst_428 {dimension_numbers = #tpu.dot_dimension_numbers<[1], [0], [0], [1], [0, 0, 1, 1], [], []>} : vector<8x32xbf16>, vector<32x128xbf16>, vector<8x128xf32> -> vector<8x128xf32>
    %760 = arith.addf %756, %759 : vector<8x128xf32>
    %761 = arith.negf %760 : vector<8x128xf32>
    %762 = math.exp %761 : vector<8x128xf32>
    %cst_429 = arith.constant 1.000000e+00 : f32
    %763 = vector.broadcast %cst_429 : f32 to vector<8x128xf32>
    %764 = arith.addf %763, %762 : vector<8x128xf32>
    %765 = arith.divf %763, %764 : vector<8x128xf32>
    %766 = math.tanh %760 : vector<8x128xf32>
    %767 = vector.extract_strided_slice %765 {offsets = [0, 0], sizes = [8, 32], strides = [1, 1]} : vector<8x128xf32> to vector<8x32xf32>
    %768 = vector.extract_strided_slice %765 {offsets = [0, 32], sizes = [8, 32], strides = [1, 1]} : vector<8x128xf32> to vector<8x32xf32>
    %769 = vector.extract_strided_slice %766 {offsets = [0, 64], sizes = [8, 32], strides = [1, 1]} : vector<8x128xf32> to vector<8x32xf32>
    %770 = vector.extract_strided_slice %765 {offsets = [0, 96], sizes = [8, 32], strides = [1, 1]} : vector<8x128xf32> to vector<8x32xf32>
    %c0_430 = arith.constant 0 : index
    %c0_431 = arith.constant 0 : index
    %771 = vector.load %arg21[%c0_430, %c0_431] : memref<8x32xf32, #tpu.memory_space<vmem>>, vector<8x32xf32>
    %772 = arith.mulf %768, %771 : vector<8x32xf32>
    %773 = arith.mulf %767, %769 : vector<8x32xf32>
    %774 = arith.addf %772, %773 : vector<8x32xf32>
    %775 = math.tanh %774 : vector<8x32xf32>
    %776 = arith.mulf %770, %775 : vector<8x32xf32>
    %c0_432 = arith.constant 0 : index
    %c0_433 = arith.constant 0 : index
    %777 = vector.load %arg21[%c0_432, %c0_433] : memref<8x32xf32, #tpu.memory_space<vmem>>, vector<8x32xf32>
    tpu.vector_store %arg21[%c0_432, %c0_433], %774 {strides = array<i32>} : memref<8x32xf32, #tpu.memory_space<vmem>>, vector<8x32xf32>,
    %c0_434 = arith.constant 0 : index
    %c0_435 = arith.constant 0 : index
    %778 = vector.load %arg20[%c0_434, %c0_435] : memref<8x32xf32, #tpu.memory_space<vmem>>, vector<8x32xf32>
    tpu.vector_store %arg20[%c0_434, %c0_435], %776 {strides = array<i32>} : memref<8x32xf32, #tpu.memory_space<vmem>>, vector<8x32xf32>,
    %c2_i32_436 = arith.constant 2 : i32
    %c7_i32_437 = arith.constant 7 : i32
    %779 = arith.subi %c7_i32_437, %c2_i32_436 : i32
    %c8_i32_438 = arith.constant 8 : i32
    %780 = arith.muli %779, %c8_i32_438 : i32
    %781 = tpu.assume_multiple %780, 8 : i32
    %782 = arith.index_cast %781 : i32 to index
    %c0_439 = arith.constant 0 : index
    %783 = vector.load %arg19[%782, %c0_439] : memref<64x128xf32, #tpu.memory_space<vmem>>, vector<8x128xf32>
    %c0_440 = arith.constant 0 : index
    %c0_441 = arith.constant 0 : index
    %784 = vector.load %arg20[%c0_440, %c0_441] : memref<8x32xf32, #tpu.memory_space<vmem>>, vector<8x32xf32>
    %785 = arith.truncf %784 : vector<8x32xf32> to vector<8x32xbf16>
    %cst_442 = arith.constant dense<0.000000e+00> : vector<8x128xf32>
    %786 = tpu.matmul %785, %720, %cst_442 {dimension_numbers = #tpu.dot_dimension_numbers<[1], [0], [0], [1], [0, 0, 1, 1], [], []>} : vector<8x32xbf16>, vector<32x128xbf16>, vector<8x128xf32> -> vector<8x128xf32>
    %787 = arith.addf %783, %786 : vector<8x128xf32>
    %788 = arith.negf %787 : vector<8x128xf32>
    %789 = math.exp %788 : vector<8x128xf32>
    %cst_443 = arith.constant 1.000000e+00 : f32
    %790 = vector.broadcast %cst_443 : f32 to vector<8x128xf32>
    %791 = arith.addf %790, %789 : vector<8x128xf32>
    %792 = arith.divf %790, %791 : vector<8x128xf32>
    %793 = math.tanh %787 : vector<8x128xf32>
    %794 = vector.extract_strided_slice %792 {offsets = [0, 0], sizes = [8, 32], strides = [1, 1]} : vector<8x128xf32> to vector<8x32xf32>
    %795 = vector.extract_strided_slice %792 {offsets = [0, 32], sizes = [8, 32], strides = [1, 1]} : vector<8x128xf32> to vector<8x32xf32>
    %796 = vector.extract_strided_slice %793 {offsets = [0, 64], sizes = [8, 32], strides = [1, 1]} : vector<8x128xf32> to vector<8x32xf32>
    %797 = vector.extract_strided_slice %792 {offsets = [0, 96], sizes = [8, 32], strides = [1, 1]} : vector<8x128xf32> to vector<8x32xf32>
    %c0_444 = arith.constant 0 : index
    %c0_445 = arith.constant 0 : index
    %798 = vector.load %arg21[%c0_444, %c0_445] : memref<8x32xf32, #tpu.memory_space<vmem>>, vector<8x32xf32>
    %799 = arith.mulf %795, %798 : vector<8x32xf32>
    %800 = arith.mulf %794, %796 : vector<8x32xf32>
    %801 = arith.addf %799, %800 : vector<8x32xf32>
    %802 = math.tanh %801 : vector<8x32xf32>
    %803 = arith.mulf %797, %802 : vector<8x32xf32>
    %c0_446 = arith.constant 0 : index
    %c0_447 = arith.constant 0 : index
    %804 = vector.load %arg21[%c0_446, %c0_447] : memref<8x32xf32, #tpu.memory_space<vmem>>, vector<8x32xf32>
    tpu.vector_store %arg21[%c0_446, %c0_447], %801 {strides = array<i32>} : memref<8x32xf32, #tpu.memory_space<vmem>>, vector<8x32xf32>,
    %c0_448 = arith.constant 0 : index
    %c0_449 = arith.constant 0 : index
    %805 = vector.load %arg20[%c0_448, %c0_449] : memref<8x32xf32, #tpu.memory_space<vmem>>, vector<8x32xf32>
    tpu.vector_store %arg20[%c0_448, %c0_449], %803 {strides = array<i32>} : memref<8x32xf32, #tpu.memory_space<vmem>>, vector<8x32xf32>,
    %c3_i32_450 = arith.constant 3 : i32
    %c7_i32_451 = arith.constant 7 : i32
    %806 = arith.subi %c7_i32_451, %c3_i32_450 : i32
    %c8_i32_452 = arith.constant 8 : i32
    %807 = arith.muli %806, %c8_i32_452 : i32
    %808 = tpu.assume_multiple %807, 8 : i32
    %809 = arith.index_cast %808 : i32 to index
    %c0_453 = arith.constant 0 : index
    %810 = vector.load %arg19[%809, %c0_453] : memref<64x128xf32, #tpu.memory_space<vmem>>, vector<8x128xf32>
    %c0_454 = arith.constant 0 : index
    %c0_455 = arith.constant 0 : index
    %811 = vector.load %arg20[%c0_454, %c0_455] : memref<8x32xf32, #tpu.memory_space<vmem>>, vector<8x32xf32>
    %812 = arith.truncf %811 : vector<8x32xf32> to vector<8x32xbf16>
    %cst_456 = arith.constant dense<0.000000e+00> : vector<8x128xf32>
    %813 = tpu.matmul %812, %720, %cst_456 {dimension_numbers = #tpu.dot_dimension_numbers<[1], [0], [0], [1], [0, 0, 1, 1], [], []>} : vector<8x32xbf16>, vector<32x128xbf16>, vector<8x128xf32> -> vector<8x128xf32>
    %814 = arith.addf %810, %813 : vector<8x128xf32>
    %815 = arith.negf %814 : vector<8x128xf32>
    %816 = math.exp %815 : vector<8x128xf32>
    %cst_457 = arith.constant 1.000000e+00 : f32
    %817 = vector.broadcast %cst_457 : f32 to vector<8x128xf32>
    %818 = arith.addf %817, %816 : vector<8x128xf32>
    %819 = arith.divf %817, %818 : vector<8x128xf32>
    %820 = math.tanh %814 : vector<8x128xf32>
    %821 = vector.extract_strided_slice %819 {offsets = [0, 0], sizes = [8, 32], strides = [1, 1]} : vector<8x128xf32> to vector<8x32xf32>
    %822 = vector.extract_strided_slice %819 {offsets = [0, 32], sizes = [8, 32], strides = [1, 1]} : vector<8x128xf32> to vector<8x32xf32>
    %823 = vector.extract_strided_slice %820 {offsets = [0, 64], sizes = [8, 32], strides = [1, 1]} : vector<8x128xf32> to vector<8x32xf32>
    %824 = vector.extract_strided_slice %819 {offsets = [0, 96], sizes = [8, 32], strides = [1, 1]} : vector<8x128xf32> to vector<8x32xf32>
    %c0_458 = arith.constant 0 : index
    %c0_459 = arith.constant 0 : index
    %825 = vector.load %arg21[%c0_458, %c0_459] : memref<8x32xf32, #tpu.memory_space<vmem>>, vector<8x32xf32>
    %826 = arith.mulf %822, %825 : vector<8x32xf32>
    %827 = arith.mulf %821, %823 : vector<8x32xf32>
    %828 = arith.addf %826, %827 : vector<8x32xf32>
    %829 = math.tanh %828 : vector<8x32xf32>
    %830 = arith.mulf %824, %829 : vector<8x32xf32>
    %c0_460 = arith.constant 0 : index
    %c0_461 = arith.constant 0 : index
    %831 = vector.load %arg21[%c0_460, %c0_461] : memref<8x32xf32, #tpu.memory_space<vmem>>, vector<8x32xf32>
    tpu.vector_store %arg21[%c0_460, %c0_461], %828 {strides = array<i32>} : memref<8x32xf32, #tpu.memory_space<vmem>>, vector<8x32xf32>,
    %c0_462 = arith.constant 0 : index
    %c0_463 = arith.constant 0 : index
    %832 = vector.load %arg20[%c0_462, %c0_463] : memref<8x32xf32, #tpu.memory_space<vmem>>, vector<8x32xf32>
    tpu.vector_store %arg20[%c0_462, %c0_463], %830 {strides = array<i32>} : memref<8x32xf32, #tpu.memory_space<vmem>>, vector<8x32xf32>,
    %c4_i32_464 = arith.constant 4 : i32
    %c7_i32_465 = arith.constant 7 : i32
    %833 = arith.subi %c7_i32_465, %c4_i32_464 : i32
    %c8_i32_466 = arith.constant 8 : i32
    %834 = arith.muli %833, %c8_i32_466 : i32
    %835 = tpu.assume_multiple %834, 8 : i32
    %836 = arith.index_cast %835 : i32 to index
    %c0_467 = arith.constant 0 : index
    %837 = vector.load %arg19[%836, %c0_467] : memref<64x128xf32, #tpu.memory_space<vmem>>, vector<8x128xf32>
    %c0_468 = arith.constant 0 : index
    %c0_469 = arith.constant 0 : index
    %838 = vector.load %arg20[%c0_468, %c0_469] : memref<8x32xf32, #tpu.memory_space<vmem>>, vector<8x32xf32>
    %839 = arith.truncf %838 : vector<8x32xf32> to vector<8x32xbf16>
    %cst_470 = arith.constant dense<0.000000e+00> : vector<8x128xf32>
    %840 = tpu.matmul %839, %720, %cst_470 {dimension_numbers = #tpu.dot_dimension_numbers<[1], [0], [0], [1], [0, 0, 1, 1], [], []>} : vector<8x32xbf16>, vector<32x128xbf16>, vector<8x128xf32> -> vector<8x128xf32>
    %841 = arith.addf %837, %840 : vector<8x128xf32>
    %842 = arith.negf %841 : vector<8x128xf32>
    %843 = math.exp %842 : vector<8x128xf32>
    %cst_471 = arith.constant 1.000000e+00 : f32
    %844 = vector.broadcast %cst_471 : f32 to vector<8x128xf32>
    %845 = arith.addf %844, %843 : vector<8x128xf32>
    %846 = arith.divf %844, %845 : vector<8x128xf32>
    %847 = math.tanh %841 : vector<8x128xf32>
    %848 = vector.extract_strided_slice %846 {offsets = [0, 0], sizes = [8, 32], strides = [1, 1]} : vector<8x128xf32> to vector<8x32xf32>
    %849 = vector.extract_strided_slice %846 {offsets = [0, 32], sizes = [8, 32], strides = [1, 1]} : vector<8x128xf32> to vector<8x32xf32>
    %850 = vector.extract_strided_slice %847 {offsets = [0, 64], sizes = [8, 32], strides = [1, 1]} : vector<8x128xf32> to vector<8x32xf32>
    %851 = vector.extract_strided_slice %846 {offsets = [0, 96], sizes = [8, 32], strides = [1, 1]} : vector<8x128xf32> to vector<8x32xf32>
    %c0_472 = arith.constant 0 : index
    %c0_473 = arith.constant 0 : index
    %852 = vector.load %arg21[%c0_472, %c0_473] : memref<8x32xf32, #tpu.memory_space<vmem>>, vector<8x32xf32>
    %853 = arith.mulf %849, %852 : vector<8x32xf32>
    %854 = arith.mulf %848, %850 : vector<8x32xf32>
    %855 = arith.addf %853, %854 : vector<8x32xf32>
    %856 = math.tanh %855 : vector<8x32xf32>
    %857 = arith.mulf %851, %856 : vector<8x32xf32>
    %c0_474 = arith.constant 0 : index
    %c0_475 = arith.constant 0 : index
    %858 = vector.load %arg21[%c0_474, %c0_475] : memref<8x32xf32, #tpu.memory_space<vmem>>, vector<8x32xf32>
    tpu.vector_store %arg21[%c0_474, %c0_475], %855 {strides = array<i32>} : memref<8x32xf32, #tpu.memory_space<vmem>>, vector<8x32xf32>,
    %c0_476 = arith.constant 0 : index
    %c0_477 = arith.constant 0 : index
    %859 = vector.load %arg20[%c0_476, %c0_477] : memref<8x32xf32, #tpu.memory_space<vmem>>, vector<8x32xf32>
    tpu.vector_store %arg20[%c0_476, %c0_477], %857 {strides = array<i32>} : memref<8x32xf32, #tpu.memory_space<vmem>>, vector<8x32xf32>,
    %c5_i32_478 = arith.constant 5 : i32
    %c7_i32_479 = arith.constant 7 : i32
    %860 = arith.subi %c7_i32_479, %c5_i32_478 : i32
    %c8_i32_480 = arith.constant 8 : i32
    %861 = arith.muli %860, %c8_i32_480 : i32
    %862 = tpu.assume_multiple %861, 8 : i32
    %863 = arith.index_cast %862 : i32 to index
    %c0_481 = arith.constant 0 : index
    %864 = vector.load %arg19[%863, %c0_481] : memref<64x128xf32, #tpu.memory_space<vmem>>, vector<8x128xf32>
    %c0_482 = arith.constant 0 : index
    %c0_483 = arith.constant 0 : index
    %865 = vector.load %arg20[%c0_482, %c0_483] : memref<8x32xf32, #tpu.memory_space<vmem>>, vector<8x32xf32>
    %866 = arith.truncf %865 : vector<8x32xf32> to vector<8x32xbf16>
    %cst_484 = arith.constant dense<0.000000e+00> : vector<8x128xf32>
    %867 = tpu.matmul %866, %720, %cst_484 {dimension_numbers = #tpu.dot_dimension_numbers<[1], [0], [0], [1], [0, 0, 1, 1], [], []>} : vector<8x32xbf16>, vector<32x128xbf16>, vector<8x128xf32> -> vector<8x128xf32>
    %868 = arith.addf %864, %867 : vector<8x128xf32>
    %869 = arith.negf %868 : vector<8x128xf32>
    %870 = math.exp %869 : vector<8x128xf32>
    %cst_485 = arith.constant 1.000000e+00 : f32
    %871 = vector.broadcast %cst_485 : f32 to vector<8x128xf32>
    %872 = arith.addf %871, %870 : vector<8x128xf32>
    %873 = arith.divf %871, %872 : vector<8x128xf32>
    %874 = math.tanh %868 : vector<8x128xf32>
    %875 = vector.extract_strided_slice %873 {offsets = [0, 0], sizes = [8, 32], strides = [1, 1]} : vector<8x128xf32> to vector<8x32xf32>
    %876 = vector.extract_strided_slice %873 {offsets = [0, 32], sizes = [8, 32], strides = [1, 1]} : vector<8x128xf32> to vector<8x32xf32>
    %877 = vector.extract_strided_slice %874 {offsets = [0, 64], sizes = [8, 32], strides = [1, 1]} : vector<8x128xf32> to vector<8x32xf32>
    %878 = vector.extract_strided_slice %873 {offsets = [0, 96], sizes = [8, 32], strides = [1, 1]} : vector<8x128xf32> to vector<8x32xf32>
    %c0_486 = arith.constant 0 : index
    %c0_487 = arith.constant 0 : index
    %879 = vector.load %arg21[%c0_486, %c0_487] : memref<8x32xf32, #tpu.memory_space<vmem>>, vector<8x32xf32>
    %880 = arith.mulf %876, %879 : vector<8x32xf32>
    %881 = arith.mulf %875, %877 : vector<8x32xf32>
    %882 = arith.addf %880, %881 : vector<8x32xf32>
    %883 = math.tanh %882 : vector<8x32xf32>
    %884 = arith.mulf %878, %883 : vector<8x32xf32>
    %c0_488 = arith.constant 0 : index
    %c0_489 = arith.constant 0 : index
    %885 = vector.load %arg21[%c0_488, %c0_489] : memref<8x32xf32, #tpu.memory_space<vmem>>, vector<8x32xf32>
    tpu.vector_store %arg21[%c0_488, %c0_489], %882 {strides = array<i32>} : memref<8x32xf32, #tpu.memory_space<vmem>>, vector<8x32xf32>,
    %c0_490 = arith.constant 0 : index
    %c0_491 = arith.constant 0 : index
    %886 = vector.load %arg20[%c0_490, %c0_491] : memref<8x32xf32, #tpu.memory_space<vmem>>, vector<8x32xf32>
    tpu.vector_store %arg20[%c0_490, %c0_491], %884 {strides = array<i32>} : memref<8x32xf32, #tpu.memory_space<vmem>>, vector<8x32xf32>,
    %c6_i32_492 = arith.constant 6 : i32
    %c7_i32_493 = arith.constant 7 : i32
    %887 = arith.subi %c7_i32_493, %c6_i32_492 : i32
    %c8_i32_494 = arith.constant 8 : i32
    %888 = arith.muli %887, %c8_i32_494 : i32
    %889 = tpu.assume_multiple %888, 8 : i32
    %890 = arith.index_cast %889 : i32 to index
    %c0_495 = arith.constant 0 : index
    %891 = vector.load %arg19[%890, %c0_495] : memref<64x128xf32, #tpu.memory_space<vmem>>, vector<8x128xf32>
    %c0_496 = arith.constant 0 : index
    %c0_497 = arith.constant 0 : index
    %892 = vector.load %arg20[%c0_496, %c0_497] : memref<8x32xf32, #tpu.memory_space<vmem>>, vector<8x32xf32>
    %893 = arith.truncf %892 : vector<8x32xf32> to vector<8x32xbf16>
    %cst_498 = arith.constant dense<0.000000e+00> : vector<8x128xf32>
    %894 = tpu.matmul %893, %720, %cst_498 {dimension_numbers = #tpu.dot_dimension_numbers<[1], [0], [0], [1], [0, 0, 1, 1], [], []>} : vector<8x32xbf16>, vector<32x128xbf16>, vector<8x128xf32> -> vector<8x128xf32>
    %895 = arith.addf %891, %894 : vector<8x128xf32>
    %896 = arith.negf %895 : vector<8x128xf32>
    %897 = math.exp %896 : vector<8x128xf32>
    %cst_499 = arith.constant 1.000000e+00 : f32
    %898 = vector.broadcast %cst_499 : f32 to vector<8x128xf32>
    %899 = arith.addf %898, %897 : vector<8x128xf32>
    %900 = arith.divf %898, %899 : vector<8x128xf32>
    %901 = math.tanh %895 : vector<8x128xf32>
    %902 = vector.extract_strided_slice %900 {offsets = [0, 0], sizes = [8, 32], strides = [1, 1]} : vector<8x128xf32> to vector<8x32xf32>
    %903 = vector.extract_strided_slice %900 {offsets = [0, 32], sizes = [8, 32], strides = [1, 1]} : vector<8x128xf32> to vector<8x32xf32>
    %904 = vector.extract_strided_slice %901 {offsets = [0, 64], sizes = [8, 32], strides = [1, 1]} : vector<8x128xf32> to vector<8x32xf32>
    %905 = vector.extract_strided_slice %900 {offsets = [0, 96], sizes = [8, 32], strides = [1, 1]} : vector<8x128xf32> to vector<8x32xf32>
    %c0_500 = arith.constant 0 : index
    %c0_501 = arith.constant 0 : index
    %906 = vector.load %arg21[%c0_500, %c0_501] : memref<8x32xf32, #tpu.memory_space<vmem>>, vector<8x32xf32>
    %907 = arith.mulf %903, %906 : vector<8x32xf32>
    %908 = arith.mulf %902, %904 : vector<8x32xf32>
    %909 = arith.addf %907, %908 : vector<8x32xf32>
    %910 = math.tanh %909 : vector<8x32xf32>
    %911 = arith.mulf %905, %910 : vector<8x32xf32>
    %c0_502 = arith.constant 0 : index
    %c0_503 = arith.constant 0 : index
    %912 = vector.load %arg21[%c0_502, %c0_503] : memref<8x32xf32, #tpu.memory_space<vmem>>, vector<8x32xf32>
    tpu.vector_store %arg21[%c0_502, %c0_503], %909 {strides = array<i32>} : memref<8x32xf32, #tpu.memory_space<vmem>>, vector<8x32xf32>,
    %c0_504 = arith.constant 0 : index
    %c0_505 = arith.constant 0 : index
    %913 = vector.load %arg20[%c0_504, %c0_505] : memref<8x32xf32, #tpu.memory_space<vmem>>, vector<8x32xf32>
    tpu.vector_store %arg20[%c0_504, %c0_505], %911 {strides = array<i32>} : memref<8x32xf32, #tpu.memory_space<vmem>>, vector<8x32xf32>,
    %c7_i32_506 = arith.constant 7 : i32
    %c7_i32_507 = arith.constant 7 : i32
    %914 = arith.subi %c7_i32_507, %c7_i32_506 : i32
    %c8_i32_508 = arith.constant 8 : i32
    %915 = arith.muli %914, %c8_i32_508 : i32
    %916 = tpu.assume_multiple %915, 8 : i32
    %917 = arith.index_cast %916 : i32 to index
    %c0_509 = arith.constant 0 : index
    %918 = vector.load %arg19[%917, %c0_509] : memref<64x128xf32, #tpu.memory_space<vmem>>, vector<8x128xf32>
    %c0_510 = arith.constant 0 : index
    %c0_511 = arith.constant 0 : index
    %919 = vector.load %arg20[%c0_510, %c0_511] : memref<8x32xf32, #tpu.memory_space<vmem>>, vector<8x32xf32>
    %920 = arith.truncf %919 : vector<8x32xf32> to vector<8x32xbf16>
    %cst_512 = arith.constant dense<0.000000e+00> : vector<8x128xf32>
    %921 = tpu.matmul %920, %720, %cst_512 {dimension_numbers = #tpu.dot_dimension_numbers<[1], [0], [0], [1], [0, 0, 1, 1], [], []>} : vector<8x32xbf16>, vector<32x128xbf16>, vector<8x128xf32> -> vector<8x128xf32>
    %922 = arith.addf %918, %921 : vector<8x128xf32>
    %923 = arith.negf %922 : vector<8x128xf32>
    %924 = math.exp %923 : vector<8x128xf32>
    %cst_513 = arith.constant 1.000000e+00 : f32
    %925 = vector.broadcast %cst_513 : f32 to vector<8x128xf32>
    %926 = arith.addf %925, %924 : vector<8x128xf32>
    %927 = arith.divf %925, %926 : vector<8x128xf32>
    %928 = math.tanh %922 : vector<8x128xf32>
    %929 = vector.extract_strided_slice %927 {offsets = [0, 0], sizes = [8, 32], strides = [1, 1]} : vector<8x128xf32> to vector<8x32xf32>
    %930 = vector.extract_strided_slice %927 {offsets = [0, 32], sizes = [8, 32], strides = [1, 1]} : vector<8x128xf32> to vector<8x32xf32>
    %931 = vector.extract_strided_slice %928 {offsets = [0, 64], sizes = [8, 32], strides = [1, 1]} : vector<8x128xf32> to vector<8x32xf32>
    %932 = vector.extract_strided_slice %927 {offsets = [0, 96], sizes = [8, 32], strides = [1, 1]} : vector<8x128xf32> to vector<8x32xf32>
    %c0_514 = arith.constant 0 : index
    %c0_515 = arith.constant 0 : index
    %933 = vector.load %arg21[%c0_514, %c0_515] : memref<8x32xf32, #tpu.memory_space<vmem>>, vector<8x32xf32>
    %934 = arith.mulf %930, %933 : vector<8x32xf32>
    %935 = arith.mulf %929, %931 : vector<8x32xf32>
    %936 = arith.addf %934, %935 : vector<8x32xf32>
    %937 = math.tanh %936 : vector<8x32xf32>
    %938 = arith.mulf %932, %937 : vector<8x32xf32>
    %c0_516 = arith.constant 0 : index
    %c0_517 = arith.constant 0 : index
    %939 = vector.load %arg21[%c0_516, %c0_517] : memref<8x32xf32, #tpu.memory_space<vmem>>, vector<8x32xf32>
    tpu.vector_store %arg21[%c0_516, %c0_517], %936 {strides = array<i32>} : memref<8x32xf32, #tpu.memory_space<vmem>>, vector<8x32xf32>,
    %c0_518 = arith.constant 0 : index
    %c0_519 = arith.constant 0 : index
    %940 = vector.load %arg20[%c0_518, %c0_519] : memref<8x32xf32, #tpu.memory_space<vmem>>, vector<8x32xf32>
    tpu.vector_store %arg20[%c0_518, %c0_519], %938 {strides = array<i32>} : memref<8x32xf32, #tpu.memory_space<vmem>>, vector<8x32xf32>,
    %c8_i32_520 = arith.constant 8 : i32
    %c0_521 = arith.constant 0 : index
    %c0_522 = arith.constant 0 : index
    %941 = vector.load %arg20[%c0_521, %c0_522] : memref<8x32xf32, #tpu.memory_space<vmem>>, vector<8x32xf32>
    %942 = arith.truncf %706 : vector<8x32xf32> to vector<8x32xbf16>
    %c0_523 = arith.constant 0 : index
    %c0_524 = arith.constant 0 : index
    %943 = vector.load %arg15[%c0_523, %c0_524] : memref<32x128xbf16, #tpu.memory_space<vmem>>, vector<32x128xbf16>
    %cst_525 = arith.constant dense<0.000000e+00> : vector<8x128xf32>
    %944 = tpu.matmul %942, %943, %cst_525 {dimension_numbers = #tpu.dot_dimension_numbers<[1], [0], [0], [1], [0, 0, 1, 1], [], []>} : vector<8x32xbf16>, vector<32x128xbf16>, vector<8x128xf32> -> vector<8x128xf32>
    %945 = arith.truncf %941 : vector<8x32xf32> to vector<8x32xbf16>
    %c0_526 = arith.constant 0 : index
    %c0_527 = arith.constant 0 : index
    %946 = vector.load %arg16[%c0_526, %c0_527] : memref<32x128xbf16, #tpu.memory_space<vmem>>, vector<32x128xbf16>
    %cst_528 = arith.constant dense<0.000000e+00> : vector<8x128xf32>
    %947 = tpu.matmul %945, %946, %cst_528 {dimension_numbers = #tpu.dot_dimension_numbers<[1], [0], [0], [1], [0, 0, 1, 1], [], []>} : vector<8x32xbf16>, vector<32x128xbf16>, vector<8x128xf32> -> vector<8x128xf32>
    %948 = arith.addf %944, %947 : vector<8x128xf32>
    %c0_529 = arith.constant 0 : index
    %c0_530 = arith.constant 0 : index
    %949 = vector.load %arg17[%c0_529, %c0_530] : memref<1x128xf32, #tpu.memory_space<vmem>>, vector<1x128xf32>
    %950 = vector.broadcast %949 : vector<1x128xf32> to vector<8x128xf32>
    %951 = arith.addf %948, %950 : vector<8x128xf32>
    %c0_531 = arith.constant 0 : index
    %c0_532 = arith.constant 0 : index
    %952 = vector.load %arg18[%c0_531, %c0_532] : memref<8x128xf32, #tpu.memory_space<vmem>>, vector<8x128xf32>
    tpu.vector_store %arg18[%c0_531, %c0_532], %951 {strides = array<i32>} : memref<8x128xf32, #tpu.memory_space<vmem>>, vector<8x128xf32>,
    return
  }
}

</mosaic_0001>

<llo_original>
// kernel: icu_model_forward.1
$region0: #{icu_model_forward.1}
  #allocation0 [shape = 'u32[]', space=smem, size = 0x4, offset = 0x4, fixed_abs, tag = 'smem constant byte address 0x4 - core index']
  #allocation1 [shape = 'u32[144,128]{1,0:T(1,128)}', space=vmem, size = 0x12000, scoped, tag = 'internal scratch']
  #allocation2 [shape = 'f32[64,128]{1,0:T(8,128)}', space=vmem, size = 0x8000, scoped, tag = 'scratch operand']
  #allocation3 [shape = 'f32[8,32]{1,0:T(8,128)}', space=vmem, size = 0x1000, scoped, tag = 'scratch operand']
  #allocation4 [shape = 'f32[8,32]{1,0:T(8,128)}', space=vmem, size = 0x1000, scoped, tag = 'scratch operand']
  #allocation5 [shape = 'f32[64,32]{1,0:T(8,128)}', space=vmem, size = 0x8000, scoped, tag = 'scratch operand']
  #allocation6 [shape = 'f32[64,32]{1,0:T(8,128)}', space=vmem, size = 0x8000, scoped, tag = 'scratch operand']
  %s0 = inlined_call_operand.vmem [shape: bf16[64,8], index: 0, kind: input, shape index: {}]
  %s1 = inlined_call_operand.hbm [shape: bf16[8,128], index: 1, kind: input, shape index: {}]
  %s2 = inlined_call_operand.vmem [shape: bf16[32,128], index: 2, kind: input, shape index: {}]
  %s3 = inlined_call_operand.vmem [shape: f32[1,128], index: 3, kind: input, shape index: {}]
  %s4 = inlined_call_operand.hbm [shape: bf16[8,128], index: 4, kind: input, shape index: {}]
  %s5 = inlined_call_operand.vmem [shape: bf16[32,128], index: 5, kind: input, shape index: {}]
  %s6 = inlined_call_operand.vmem [shape: f32[1,128], index: 6, kind: input, shape index: {}]
  %s7 = inlined_call_operand.vmem [shape: bf16[32,128], index: 7, kind: input, shape index: {}]
  %s8 = inlined_call_operand.vmem [shape: bf16[32,128], index: 8, kind: input, shape index: {}]
  %s9 = inlined_call_operand.vmem [shape: bf16[32,128], index: 9, kind: input, shape index: {}]
  %s10 = inlined_call_operand.vmem [shape: f32[1,128], index: 10, kind: input, shape index: {}]
  %s11 = inlined_call_operand.vmem [shape: bf16[32,128], index: 11, kind: input, shape index: {}]
  %s12 = inlined_call_operand.vmem [shape: bf16[32,128], index: 12, kind: input, shape index: {}]
  %s13 = inlined_call_operand.hbm [shape: bf16[32,128], index: 13, kind: input, shape index: {}]
  %s14 = inlined_call_operand.vmem [shape: f32[1,128], index: 14, kind: input, shape index: {}]
  %s15 = inlined_call_operand.hbm [shape: bf16[32,128], index: 15, kind: input, shape index: {}]
  %s16 = inlined_call_operand.hbm [shape: bf16[32,128], index: 16, kind: input, shape index: {}]
  %s17 = inlined_call_operand.hbm [shape: f32[1,128], index: 17, kind: input, shape index: {}]
  %s18 = inlined_call_operand.vmem [shape: f32[8,128], index: 18, kind: output, shape index: {}]
  %s19 = sld [smem:[#allocation0]]
  $region106: #{icu_model_forward.1} parent=0
    _
  %s21 = ssub.s32 1, %s19
  %s22 = scalar_select 0, %s21, %s19
  $region1: #{icu_model_forward.1} parent=0
    #allocation7 [shape = 'u8[2048]{0}', space=vmem, size = 0x800, scoped, tag = 'input window, operand 1, single buffered']
    #allocation8 [shape = 's32[1]{0}', space=sflag, size = 0x4, scoped, tag = 'scoped memory for icu_model_forward.1']
    #allocation9 [shape = 'u8[2048]{0}', space=vmem, size = 0x800, scoped, tag = 'input window, operand 4, single buffered']
    #allocation10 [shape = 's32[1]{0}', space=sflag, size = 0x4, scoped, tag = 'scoped memory for icu_model_forward.1']
    #allocation11 [shape = 'u8[8192]{0}', space=vmem, size = 0x2000, scoped, tag = 'input window, operand 13, single buffered']
    #allocation12 [shape = 'u8[8192]{0}', space=vmem, size = 0x2000, scoped, tag = 'input window, operand 15, single buffered']
    #allocation13 [shape = 's32[1]{0}', space=sflag, size = 0x4, scoped, tag = 'scoped memory for icu_model_forward.1']
    #allocation14 [shape = 'u8[8192]{0}', space=vmem, size = 0x2000, scoped, tag = 'input window, operand 16, single buffered']
    #allocation15 [shape = 'u8[512]{0}', space=vmem, size = 0x400, scoped, tag = 'input window, operand 17, single buffered']
    #allocation16 [shape = 's32[1]{0}', space=sflag, size = 0x4, scoped, tag = 'scoped memory for icu_model_forward.1']
    %23 = vsyncpa [#allocation8], 0
    %24 = vsyncpa [#allocation10], 0
    %25 = vsyncpa [#allocation13], 0
    %26 = vsyncpa [#allocation16], 0
    // Predicated region
    $region2: #{icu_model_forward.1} parent=1 // pred_check
      _
    $region3: #{icu_model_forward.1} parent=1 // pred_check_branch
      %28 = sbr.rel (0) target = $region5
    $region4: #{icu_model_forward.1} parent=1 // pred_region
      _
    $region5: #{icu_model_forward.1} parent=1 // pred_fallthru
      _
    // Predicated region
    $region6: #{icu_model_forward.1} parent=1 // pred_check
      _
    $region7: #{icu_model_forward.1} parent=1 // pred_check_branch
      %30 = sbr.rel (0) target = $region9
    $region8: #{icu_model_forward.1} parent=1 // pred_region
      %s32 = ssub.s32 64, 64
      %33 = vsyncadd [#allocation8], %s32
      %s35 = sshll.u32 [#allocation7], 4
      %s36 = int_to_ptr.vmem [resolvable:$true] %s35
      %38 = dma.hbm_to_vmem [thread:$0]  %s1, 64, %s36, [#allocation8]
    $region9: #{icu_model_forward.1} parent=1 // pred_fallthru
      _
    // Predicated region
    $region10: #{icu_model_forward.1} parent=1 // pred_check
      _
    $region11: #{icu_model_forward.1} parent=1 // pred_check_branch
      %40 = sbr.rel (0) target = $region13
    $region12: #{icu_model_forward.1} parent=1 // pred_region
      _
    $region13: #{icu_model_forward.1} parent=1 // pred_fallthru
      _
    // Predicated region
    $region14: #{icu_model_forward.1} parent=1 // pred_check
      _
    $region15: #{icu_model_forward.1} parent=1 // pred_check_branch
      %42 = sbr.rel (0) target = $region17
    $region16: #{icu_model_forward.1} parent=1 // pred_region
      _
    $region17: #{icu_model_forward.1} parent=1 // pred_fallthru
      _
    // Predicated region
    $region18: #{icu_model_forward.1} parent=1 // pred_check
      _
    $region19: #{icu_model_forward.1} parent=1 // pred_check_branch
      %44 = sbr.rel (0) target = $region21
    $region20: #{icu_model_forward.1} parent=1 // pred_region
      %s46 = ssub.s32 64, 64
      %47 = vsyncadd [#allocation10], %s46
      %s49 = sshll.u32 [#allocation9], 4
      %s50 = int_to_ptr.vmem [resolvable:$true] %s49
      %52 = dma.hbm_to_vmem [thread:$0]  %s4, 64, %s50, [#allocation10]
    $region21: #{icu_model_forward.1} parent=1 // pred_fallthru
      _
    // Predicated region
    $region22: #{icu_model_forward.1} parent=1 // pred_check
      _
    $region23: #{icu_model_forward.1} parent=1 // pred_check_branch
      %54 = sbr.rel (0) target = $region25
    $region24: #{icu_model_forward.1} parent=1 // pred_region
      _
    $region25: #{icu_model_forward.1} parent=1 // pred_fallthru
      _
    // Predicated region
    $region26: #{icu_model_forward.1} parent=1 // pred_check
      _
    $region27: #{icu_model_forward.1} parent=1 // pred_check_branch
      %56 = sbr.rel (0) target = $region29
    $region28: #{icu_model_forward.1} parent=1 // pred_region
      _
    $region29: #{icu_model_forward.1} parent=1 // pred_fallthru
      _
    // Predicated region
    $region30: #{icu_model_forward.1} parent=1 // pred_check
      _
    $region31: #{icu_model_forward.1} parent=1 // pred_check_branch
      %58 = sbr.rel (0) target = $region33
    $region32: #{icu_model_forward.1} parent=1 // pred_region
      _
    $region33: #{icu_model_forward.1} parent=1 // pred_fallthru
      _
    // Predicated region
    $region34: #{icu_model_forward.1} parent=1 // pred_check
      _
    $region35: #{icu_model_forward.1} parent=1 // pred_check_branch
      %60 = sbr.rel (0) target = $region37
    $region36: #{icu_model_forward.1} parent=1 // pred_region
      _
    $region37: #{icu_model_forward.1} parent=1 // pred_fallthru
      _
    // Predicated region
    $region38: #{icu_model_forward.1} parent=1 // pred_check
      _
    $region39: #{icu_model_forward.1} parent=1 // pred_check_branch
      %62 = sbr.rel (0) target = $region41
    $region40: #{icu_model_forward.1} parent=1 // pred_region
      _
    $region41: #{icu_model_forward.1} parent=1 // pred_fallthru
      _
    // Predicated region
    $region42: #{icu_model_forward.1} parent=1 // pred_check
      _
    $region43: #{icu_model_forward.1} parent=1 // pred_check_branch
      %64 = sbr.rel (0) target = $region45
    $region44: #{icu_model_forward.1} parent=1 // pred_region
      _
    $region45: #{icu_model_forward.1} parent=1 // pred_fallthru
      _
    // Predicated region
    $region46: #{icu_model_forward.1} parent=1 // pred_check
      _
    $region47: #{icu_model_forward.1} parent=1 // pred_check_branch
      %66 = sbr.rel (0) target = $region49
    $region48: #{icu_model_forward.1} parent=1 // pred_region
      _
    $region49: #{icu_model_forward.1} parent=1 // pred_fallthru
      _
    // Predicated region
    $region50: #{icu_model_forward.1} parent=1 // pred_check
      _
    $region51: #{icu_model_forward.1} parent=1 // pred_check_branch
      %68 = sbr.rel (0) target = $region53
    $region52: #{icu_model_forward.1} parent=1 // pred_region
      _
    $region53: #{icu_model_forward.1} parent=1 // pred_fallthru
      _
    // Predicated region
    $region54: #{icu_model_forward.1} parent=1 // pred_check
      _
    $region55: #{icu_model_forward.1} parent=1 // pred_check_branch
      %70 = sbr.rel (0) target = $region57
    $region56: #{icu_model_forward.1} parent=1 // pred_region
      %s72 = ssub.s32 256, 256
      %73 = vsyncadd [#allocation10], %s72
      %s74 = sshll.u32 [#allocation11], 4
      %s75 = int_to_ptr.vmem [resolvable:$true] %s74
      %80 = dma.hbm_to_vmem [thread:$0]  %s13, 256, %s75, [#allocation10], 64, 64, 4
    $region57: #{icu_model_forward.1} parent=1 // pred_fallthru
      _
    // Predicated region
    $region58: #{icu_model_forward.1} parent=1 // pred_check
      _
    $region59: #{icu_model_forward.1} parent=1 // pred_check_branch
      %82 = sbr.rel (0) target = $region61
    $region60: #{icu_model_forward.1} parent=1 // pred_region
      _
    $region61: #{icu_model_forward.1} parent=1 // pred_fallthru
      _
    // Predicated region
    $region62: #{icu_model_forward.1} parent=1 // pred_check
      _
    $region63: #{icu_model_forward.1} parent=1 // pred_check_branch
      %84 = sbr.rel (0) target = $region65
    $region64: #{icu_model_forward.1} parent=1 // pred_region
      %s86 = ssub.s32 256, 256
      %87 = vsyncadd [#allocation13], %s86
      %s88 = sshll.u32 [#allocation12], 4
      %s89 = int_to_ptr.vmem [resolvable:$true] %s88
      %94 = dma.hbm_to_vmem [thread:$0]  %s15, 256, %s89, [#allocation13], 64, 64, 4
    $region65: #{icu_model_forward.1} parent=1 // pred_fallthru
      _
    // Predicated region
    $region66: #{icu_model_forward.1} parent=1 // pred_check
      _
    $region67: #{icu_model_forward.1} parent=1 // pred_check_branch
      %96 = sbr.rel (0) target = $region69
    $region68: #{icu_model_forward.1} parent=1 // pred_region
      %s98 = ssub.s32 256, 256
      %99 = vsyncadd [#allocation13], %s98
      %s100 = sshll.u32 [#allocation14], 4
      %s101 = int_to_ptr.vmem [resolvable:$true] %s100
      %106 = dma.hbm_to_vmem [thread:$0]  %s16, 256, %s101, [#allocation13], 64, 64, 4
    $region69: #{icu_model_forward.1} parent=1 // pred_fallthru
      _
    // Predicated region
    $region70: #{icu_model_forward.1} parent=1 // pred_check
      _
    $region71: #{icu_model_forward.1} parent=1 // pred_check_branch
      %108 = sbr.rel (0) target = $region73
    $region72: #{icu_model_forward.1} parent=1 // pred_region
      %s110 = ssub.s32 16, 16
      %111 = vsyncadd [#allocation16], %s110
      %s113 = sshll.u32 [#allocation15], 4
      %s114 = int_to_ptr.vmem [resolvable:$true] %s113
      %116 = dma.hbm_to_vmem [thread:$0]  %s17, 16, %s114, [#allocation16]
    $region73: #{icu_model_forward.1} parent=1 // pred_fallthru
      _
    // Predicated region
    $region74: #{icu_model_forward.1} parent=1 // pred_check
      _
    $region75: #{icu_model_forward.1} parent=1 // pred_check_branch
      %118 = sbr.rel (0) target = $region77
    $region76: #{icu_model_forward.1} parent=1 // pred_region
      %119 = dma.done [#allocation8], 64
    $region77: #{icu_model_forward.1} parent=1 // pred_fallthru
      _
    // Predicated region
    $region78: #{icu_model_forward.1} parent=1 // pred_check
      _
    $region79: #{icu_model_forward.1} parent=1 // pred_check_branch
      %121 = sbr.rel (0) target = $region81
    $region80: #{icu_model_forward.1} parent=1 // pred_region
      %122 = dma.done [#allocation10], 64
    $region81: #{icu_model_forward.1} parent=1 // pred_fallthru
      _
    // Predicated region
    $region82: #{icu_model_forward.1} parent=1 // pred_check
      _
    $region83: #{icu_model_forward.1} parent=1 // pred_check_branch
      %124 = sbr.rel (0) target = $region85
    $region84: #{icu_model_forward.1} parent=1 // pred_region
      %125 = dma.done [#allocation10], 256
    $region85: #{icu_model_forward.1} parent=1 // pred_fallthru
      _
    // Predicated region
    $region86: #{icu_model_forward.1} parent=1 // pred_check
      _
    $region87: #{icu_model_forward.1} parent=1 // pred_check_branch
      %127 = sbr.rel (0) target = $region89
    $region88: #{icu_model_forward.1} parent=1 // pred_region
      %128 = dma.done [#allocation13], 256
    $region89: #{icu_model_forward.1} parent=1 // pred_fallthru
      _
    // Predicated region
    $region90: #{icu_model_forward.1} parent=1 // pred_check
      _
    $region91: #{icu_model_forward.1} parent=1 // pred_check_branch
      %130 = sbr.rel (0) target = $region93
    $region92: #{icu_model_forward.1} parent=1 // pred_region
      %131 = dma.done [#allocation13], 256
    $region93: #{icu_model_forward.1} parent=1 // pred_fallthru
      _
    // Predicated region
    $region94: #{icu_model_forward.1} parent=1 // pred_check
      _
    $region95: #{icu_model_forward.1} parent=1 // pred_check_branch
      %133 = sbr.rel (0) target = $region97
    $region96: #{icu_model_forward.1} parent=1 // pred_region
      %134 = dma.done [#allocation16], 16
    $region97: #{icu_model_forward.1} parent=1 // pred_fallthru
      _
    %v136 = vld [vmem:[%s0] sm:$0xf]
    %v137 = vld [vmem:[%s0 + $0x4] sm:$0xf]
    %v138 = vld [vmem:[%s0 + $0x8] sm:$0xf]
    %v139 = vld [vmem:[%s0 + $0xc] sm:$0xf]
    %v140 = vld [vmem:[%s0 + $0x10] sm:$0xf]
    %v141 = vld [vmem:[%s0 + $0x14] sm:$0xf]
    %v142 = vld [vmem:[%s0 + $0x18] sm:$0xf]
    %v143 = vld [vmem:[%s0 + $0x1c] sm:$0xf]
    %v144 = vld [vmem:[#allocation7] sm:$0xf]
    %v145 = vld [vmem:[%s3] sm:$0x1]
    %v147 = vlaneseq
    %v148 = vshrl.u32 %v147, 7
    %v149 = vsub.s32 0, %v148
    %v150 = vrot.slane %v145, %v149
    %v160 = vunpack.c.l.b16 %v136
    %v161 = vunpack.c.l.b16 %v137
    %v162 = vunpack.c.l.b16 %v138
    %v163 = vunpack.c.l.b16 %v139
    %v164 = vunpack.c.l.b16 %v140
    %v165 = vunpack.c.l.b16 %v141
    %v166 = vunpack.c.l.b16 %v142
    %v167 = vunpack.c.l.b16 %v143
    %v168 = vpack.c.b16 %v161, %v160
    %v169 = vpack.c.b16 %v163, %v162
    %v170 = vpack.c.b16 %v165, %v164
    %v171 = vpack.c.b16 %v167, %v166
    %vm172 = vcmask 64512
    %v174 = vsel %vm172, %v168, 0
    %v177 = vsel %vm172, %v169, 0
    %v180 = vsel %vm172, %v170, 0
    %v183 = vsel %vm172, %v171, 0
    %vm185 = vcmask 1043456
    %v187 = vsel %vm185, %v144, 0
    %189 = vmatprep.subr.bf16.mxu0 0
    %190 = vmatpush1.bf16.msra.mxu0 %v187
    %191 = vmatprep.subr.bf16.mxu0 0
    %192 = vmatpush1.bf16.msra.mxu0 0
    %193 = vmatprep.subr.bf16.mxu0 0
    %194 = vmatpush1.bf16.msra.mxu0 0
    %195 = vmatprep.subr.bf16.mxu0 0
    %196 = vmatpush1.bf16.msra.mxu0 0
    %197 = vmatprep.subr.bf16.mxu0 0
    %198 = vmatpush1.bf16.msra.mxu0 0
    %199 = vmatprep.subr.bf16.mxu0 0
    %200 = vmatpush1.bf16.msra.mxu0 0
    %201 = vmatprep.subr.bf16.mxu0 0
    %202 = vmatpush1.bf16.msra.mxu0 0
    %203 = vmatprep.subr.bf16.mxu0 0
    %204 = vmatpush1.bf16.msra.mxu0 0
    %205 = vmatprep.subr.bf16.mxu0 0
    %206 = vmatpush1.bf16.msra.mxu0 0
    %207 = vmatprep.subr.bf16.mxu0 0
    %208 = vmatpush1.bf16.msra.mxu0 0
    %209 = vmatprep.subr.bf16.mxu0 0
    %210 = vmatpush1.bf16.msra.mxu0 0
    %211 = vmatprep.subr.bf16.mxu0 0
    %212 = vmatpush1.bf16.msra.mxu0 0
    %213 = vmatprep.subr.bf16.mxu0 0
    %214 = vmatpush1.bf16.msra.mxu0 0
    %215 = vmatprep.subr.bf16.mxu0 0
    %216 = vmatpush1.bf16.msra.mxu0 0
    %217 = vmatprep.subr.bf16.mxu0 0
    %218 = vmatpush1.bf16.msra.mxu0 0
    %219 = vmatprep.subr.bf16.mxu0 0
    %220 = vmatpush1.bf16.msra.mxu0 0
    %221 = vmatprep.mubr.bf16.mxu0 0
    %222 = vmatmul.mubr.bf16.gmra.mrb[0].mxu0 %v174
    %v223 = vpop.f32.mrb[0].mxu0
    %v224 = vadd.f32 %v150, %v223
    %v225 = vpop.f32.mrb[0].mxu0
    %v226 = vpop.f32.mrb[0].mxu0
    %v227 = vadd.f32 %v150, %v226
    %v228 = vpop.f32.mrb[0].mxu0
    %229 = vmatprep.mubr.bf16.mxu0 0
    %230 = vmatmul.mubr.bf16.gmra.mrb[0].mxu0 %v177
    %v231 = vpop.f32.mrb[0].mxu0
    %v232 = vadd.f32 %v150, %v231
    %v233 = vpop.f32.mrb[0].mxu0
    %v234 = vpop.f32.mrb[0].mxu0
    %v235 = vadd.f32 %v150, %v234
    %v236 = vpop.f32.mrb[0].mxu0
    %237 = vmatprep.mubr.bf16.mxu0 0
    %238 = vmatmul.mubr.bf16.gmra.mrb[0].mxu0 %v180
    %v239 = vpop.f32.mrb[0].mxu0
    %v240 = vadd.f32 %v150, %v239
    %v241 = vpop.f32.mrb[0].mxu0
    %v242 = vpop.f32.mrb[0].mxu0
    %v243 = vadd.f32 %v150, %v242
    %v244 = vpop.f32.mrb[0].mxu0
    %245 = vmatprep.mubr.bf16.mxu0 0
    %246 = vmatmul.mubr.bf16.gmra.mrb[0].mxu0 %v183
    %v247 = vpop.f32.mrb[0].mxu0
    %v248 = vadd.f32 %v150, %v247
    %v249 = vpop.f32.mrb[0].mxu0
    %v250 = vpop.f32.mrb[0].mxu0
    %v251 = vadd.f32 %v150, %v250
    %v252 = vpop.f32.mrb[0].mxu0
    %253 = vdwg.mxu0
    %254 = vst [vmem:[#allocation2] sm:$0xff] %v224
    %255 = vst [vmem:[#allocation2 + $0x8] sm:$0xff] %v227
    %256 = vst [vmem:[#allocation2 + $0x10] sm:$0xff] %v232
    %257 = vst [vmem:[#allocation2 + $0x18] sm:$0xff] %v235
    %258 = vst [vmem:[#allocation2 + $0x20] sm:$0xff] %v240
    %259 = vst [vmem:[#allocation2 + $0x28] sm:$0xff] %v243
    %260 = vst [vmem:[#allocation2 + $0x30] sm:$0xff] %v248
    %261 = vst [vmem:[#allocation2 + $0x38] sm:$0xff] %v251
    %v262 = vld [vmem:[%s2] sm:$0xf]
    %v263 = vld [vmem:[%s2 + $0x4] sm:$0xf]
    %v264 = vld [vmem:[%s2 + $0x8] sm:$0xf]
    %v265 = vld [vmem:[%s2 + $0xc] sm:$0xf]
    %vm266 = vcmask 261120
    %267 = vst.msk [vmem:[#allocation3] sm:$0xff] %vm266, 0.0
    %268 = vst.msk [vmem:[#allocation4] sm:$0xff] %vm266, 0.0
    %v269 = vld [vmem:[#allocation2] sm:$0xff]
    %v270 = vld [vmem:[#allocation3] sm:$0xff]
    %v271 = vpack.c.bf16 %v270, %v270
    %v276 = vunpack.c.l.b16 %v262
    %v277 = vunpack.c.l.b16 %v263
    %v278 = vunpack.c.l.b16 %v264
    %v279 = vunpack.c.l.b16 %v265
    %v280 = vpack.c.b16 %v277, %v276
    %v281 = vpack.c.b16 %v279, %v278
    %v285 = vsel %vm266, %v271, 0
    %287 = vmatprep.subr.bf16.mxu0 0
    %288 = vmatpush1.bf16.msra.mxu0 %v280
    %289 = vmatprep.subr.bf16.mxu0 0
    %290 = vmatpush1.bf16.msra.mxu0 %v281
    %291 = vmatprep.subr.bf16.mxu0 0
    %292 = vmatpush1.bf16.msra.mxu0 0
    %293 = vmatprep.subr.bf16.mxu0 0
    %294 = vmatpush1.bf16.msra.mxu0 0
    %295 = vmatprep.subr.bf16.mxu0 0
    %296 = vmatpush1.bf16.msra.mxu0 0
    %297 = vmatprep.subr.bf16.mxu0 0
    %298 = vmatpush1.bf16.msra.mxu0 0
    %299 = vmatprep.subr.bf16.mxu0 0
    %300 = vmatpush1.bf16.msra.mxu0 0
    %301 = vmatprep.subr.bf16.mxu0 0
    %302 = vmatpush1.bf16.msra.mxu0 0
    %303 = vmatprep.subr.bf16.mxu0 0
    %304 = vmatpush1.bf16.msra.mxu0 0
    %305 = vmatprep.subr.bf16.mxu0 0
    %306 = vmatpush1.bf16.msra.mxu0 0
    %307 = vmatprep.subr.bf16.mxu0 0
    %308 = vmatpush1.bf16.msra.mxu0 0
    %309 = vmatprep.subr.bf16.mxu0 0
    %310 = vmatpush1.bf16.msra.mxu0 0
    %311 = vmatprep.subr.bf16.mxu0 0
    %312 = vmatpush1.bf16.msra.mxu0 0
    %313 = vmatprep.subr.bf16.mxu0 0
    %314 = vmatpush1.bf16.msra.mxu0 0
    %315 = vmatprep.subr.bf16.mxu0 0
    %316 = vmatpush1.bf16.msra.mxu0 0
    %317 = vmatprep.subr.bf16.mxu0 0
    %318 = vmatpush1.bf16.msra.mxu0 0
    %319 = vmatprep.mubr.bf16.mxu0 0
    %320 = vmatmul.mubr.bf16.gmra.mrb[0].mxu0 %v285
    %v321 = vpop.f32.mrb[0].mxu0
    %v322 = vadd.f32 0.0, %v321
    %v323 = vpop.f32.mrb[0].mxu0
    %v324 = vpop.f32.mrb[0].mxu0
    %v325 = vpop.f32.mrb[0].mxu0
    %326 = vdwg.mxu0
    %v327 = vadd.f32 %v269, %v322
    %v328 = vxor.u32 %v327, 2147483648
    %v329 = vmul.f32 %v328, 1.442695
    %v330 = vpow.pop %v329
    %v331 = vadd.f32 %v330, 1.0
    %v332 = vrcp.pop %v331
    %v333 = vmul.f32 1.0, %v332
    %v334 = vtanh.pop %v327
    %v335 = vld [vmem:[#allocation4] sm:$0xff]
    %337 = vrot.lane.b32.xlu0 %v335, 32
    %v338 = vpop.permute.xlu0 %337
    %v340 = vmul.f32 %v333, %v338
    %342 = vrot.lane.b32.xlu0 %v334, 64
    %v343 = vpop.permute.xlu0 %342
    %v345 = vmul.f32 %v333, %v343
    %347 = vrot.lane.b32.xlu0 %v345, 32
    %v348 = vpop.permute.xlu0 %347
    %v350 = vadd.f32 %v340, %v348
    %v351 = vtanh.pop %v350
    %353 = vrot.lane.b32.xlu0 %v351, 64
    %v354 = vpop.permute.xlu0 %353
    %v356 = vmul.f32 %v333, %v354
    %358 = vrot.lane.b32.xlu0 %v350, 96
    %v359 = vpop.permute.xlu0 %358
    %361 = vst.msk [vmem:[#allocation4] sm:$0xff] %vm266, %v359
    %363 = vrot.lane.b32.xlu0 %v356, 32
    %v364 = vpop.permute.xlu0 %363
    %366 = vst.msk [vmem:[#allocation3] sm:$0xff] %vm266, %v364
    %367 = vst.msk [vmem:[#allocation5] sm:$0xff] %vm266, %v364
    %s368 = scalar_lea.vmem [#allocation2], 8
    %v369 = vld [vmem:[%s368] sm:$0xff]
    %v370 = vld [vmem:[#allocation3] sm:$0xff]
    %v371 = vpack.c.bf16 %v370, %v370
    %v373 = vsel %vm266, %v371, 0
    %375 = vmatprep.subr.bf16.mxu0 0
    %376 = vmatpush1.bf16.msra.mxu0 %v280
    %377 = vmatprep.subr.bf16.mxu0 0
    %378 = vmatpush1.bf16.msra.mxu0 %v281
    %379 = vmatprep.subr.bf16.mxu0 0
    %380 = vmatpush1.bf16.msra.mxu0 0
    %381 = vmatprep.subr.bf16.mxu0 0
    %382 = vmatpush1.bf16.msra.mxu0 0
    %383 = vmatprep.subr.bf16.mxu0 0
    %384 = vmatpush1.bf16.msra.mxu0 0
    %385 = vmatprep.subr.bf16.mxu0 0
    %386 = vmatpush1.bf16.msra.mxu0 0
    %387 = vmatprep.subr.bf16.mxu0 0
    %388 = vmatpush1.bf16.msra.mxu0 0
    %389 = vmatprep.subr.bf16.mxu0 0
    %390 = vmatpush1.bf16.msra.mxu0 0
    %391 = vmatprep.subr.bf16.mxu0 0
    %392 = vmatpush1.bf16.msra.mxu0 0
    %393 = vmatprep.subr.bf16.mxu0 0
    %394 = vmatpush1.bf16.msra.mxu0 0
    %395 = vmatprep.subr.bf16.mxu0 0
    %396 = vmatpush1.bf16.msra.mxu0 0
    %397 = vmatprep.subr.bf16.mxu0 0
    %398 = vmatpush1.bf16.msra.mxu0 0
    %399 = vmatprep.subr.bf16.mxu0 0
    %400 = vmatpush1.bf16.msra.mxu0 0
    %401 = vmatprep.subr.bf16.mxu0 0
    %402 = vmatpush1.bf16.msra.mxu0 0
    %403 = vmatprep.subr.bf16.mxu0 0
    %404 = vmatpush1.bf16.msra.mxu0 0
    %405 = vmatprep.subr.bf16.mxu0 0
    %406 = vmatpush1.bf16.msra.mxu0 0
    %407 = vmatprep.mubr.bf16.mxu0 0
    %408 = vmatmul.mubr.bf16.gmra.mrb[0].mxu0 %v373
    %v409 = vpop.f32.mrb[0].mxu0
    %v410 = vadd.f32 0.0, %v409
    %v411 = vpop.f32.mrb[0].mxu0
    %v412 = vpop.f32.mrb[0].mxu0
    %v413 = vpop.f32.mrb[0].mxu0
    %414 = vdwg.mxu0
    %v415 = vadd.f32 %v369, %v410
    %v416 = vxor.u32 %v415, 2147483648
    %v417 = vmul.f32 %v416, 1.442695
    %v418 = vpow.pop %v417
    %v419 = vadd.f32 %v418, 1.0
    %v420 = vrcp.pop %v419
    %v421 = vmul.f32 1.0, %v420
    %v422 = vtanh.pop %v415
    %v423 = vld [vmem:[#allocation4] sm:$0xff]
    %425 = vrot.lane.b32.xlu0 %v423, 32
    %v426 = vpop.permute.xlu0 %425
    %v428 = vmul.f32 %v421, %v426
    %430 = vrot.lane.b32.xlu0 %v422, 64
    %v431 = vpop.permute.xlu0 %430
    %v433 = vmul.f32 %v421, %v431
    %435 = vrot.lane.b32.xlu0 %v433, 32
    %v436 = vpop.permute.xlu0 %435
    %v438 = vadd.f32 %v428, %v436
    %v439 = vtanh.pop %v438
    %441 = vrot.lane.b32.xlu0 %v439, 64
    %v442 = vpop.permute.xlu0 %441
    %v444 = vmul.f32 %v421, %v442
    %446 = vrot.lane.b32.xlu0 %v438, 96
    %v447 = vpop.permute.xlu0 %446
    %449 = vst.msk [vmem:[#allocation4] sm:$0xff] %vm266, %v447
    %451 = vrot.lane.b32.xlu0 %v444, 32
    %v452 = vpop.permute.xlu0 %451
    %454 = vst.msk [vmem:[#allocation3] sm:$0xff] %vm266, %v452
    %s455 = scalar_lea.vmem [#allocation5], 8
    %456 = vst.msk [vmem:[%s455] sm:$0xff] %vm266, %v452
    %s457 = scalar_lea.vmem [#allocation2], 16
    %v458 = vld [vmem:[%s457] sm:$0xff]
    %v459 = vld [vmem:[#allocation3] sm:$0xff]
    %v460 = vpack.c.bf16 %v459, %v459
    %v462 = vsel %vm266, %v460, 0
    %464 = vmatprep.subr.bf16.mxu0 0
    %465 = vmatpush1.bf16.msra.mxu0 %v280
    %466 = vmatprep.subr.bf16.mxu0 0
    %467 = vmatpush1.bf16.msra.mxu0 %v281
    %468 = vmatprep.subr.bf16.mxu0 0
    %469 = vmatpush1.bf16.msra.mxu0 0
    %470 = vmatprep.subr.bf16.mxu0 0
    %471 = vmatpush1.bf16.msra.mxu0 0
    %472 = vmatprep.subr.bf16.mxu0 0
    %473 = vmatpush1.bf16.msra.mxu0 0
    %474 = vmatprep.subr.bf16.mxu0 0
    %475 = vmatpush1.bf16.msra.mxu0 0
    %476 = vmatprep.subr.bf16.mxu0 0
    %477 = vmatpush1.bf16.msra.mxu0 0
    %478 = vmatprep.subr.bf16.mxu0 0
    %479 = vmatpush1.bf16.msra.mxu0 0
    %480 = vmatprep.subr.bf16.mxu0 0
    %481 = vmatpush1.bf16.msra.mxu0 0
    %482 = vmatprep.subr.bf16.mxu0 0
    %483 = vmatpush1.bf16.msra.mxu0 0
    %484 = vmatprep.subr.bf16.mxu0 0
    %485 = vmatpush1.bf16.msra.mxu0 0
    %486 = vmatprep.subr.bf16.mxu0 0
    %487 = vmatpush1.bf16.msra.mxu0 0
    %488 = vmatprep.subr.bf16.mxu0 0
    %489 = vmatpush1.bf16.msra.mxu0 0
    %490 = vmatprep.subr.bf16.mxu0 0
    %491 = vmatpush1.bf16.msra.mxu0 0
    %492 = vmatprep.subr.bf16.mxu0 0
    %493 = vmatpush1.bf16.msra.mxu0 0
    %494 = vmatprep.subr.bf16.mxu0 0
    %495 = vmatpush1.bf16.msra.mxu0 0
    %496 = vmatprep.mubr.bf16.mxu0 0
    %497 = vmatmul.mubr.bf16.gmra.mrb[0].mxu0 %v462
    %v498 = vpop.f32.mrb[0].mxu0
    %v499 = vadd.f32 0.0, %v498
    %v500 = vpop.f32.mrb[0].mxu0
    %v501 = vpop.f32.mrb[0].mxu0
    %v502 = vpop.f32.mrb[0].mxu0
    %503 = vdwg.mxu0
    %v504 = vadd.f32 %v458, %v499
    %v505 = vxor.u32 %v504, 2147483648
    %v506 = vmul.f32 %v505, 1.442695
    %v507 = vpow.pop %v506
    %v508 = vadd.f32 %v507, 1.0
    %v509 = vrcp.pop %v508
    %v510 = vmul.f32 1.0, %v509
    %v511 = vtanh.pop %v504
    %v512 = vld [vmem:[#allocation4] sm:$0xff]
    %514 = vrot.lane.b32.xlu0 %v512, 32
    %v515 = vpop.permute.xlu0 %514
    %v517 = vmul.f32 %v510, %v515
    %519 = vrot.lane.b32.xlu0 %v511, 64
    %v520 = vpop.permute.xlu0 %519
    %v522 = vmul.f32 %v510, %v520
    %524 = vrot.lane.b32.xlu0 %v522, 32
    %v525 = vpop.permute.xlu0 %524
    %v527 = vadd.f32 %v517, %v525
    %v528 = vtanh.pop %v527
    %530 = vrot.lane.b32.xlu0 %v528, 64
    %v531 = vpop.permute.xlu0 %530
    %v533 = vmul.f32 %v510, %v531
    %535 = vrot.lane.b32.xlu0 %v527, 96
    %v536 = vpop.permute.xlu0 %535
    %538 = vst.msk [vmem:[#allocation4] sm:$0xff] %vm266, %v536
    %540 = vrot.lane.b32.xlu0 %v533, 32
    %v541 = vpop.permute.xlu0 %540
    %543 = vst.msk [vmem:[#allocation3] sm:$0xff] %vm266, %v541
    %s544 = scalar_lea.vmem [#allocation5], 16
    %545 = vst.msk [vmem:[%s544] sm:$0xff] %vm266, %v541
    %s546 = scalar_lea.vmem [#allocation2], 24
    %v547 = vld [vmem:[%s546] sm:$0xff]
    %v548 = vld [vmem:[#allocation3] sm:$0xff]
    %v549 = vpack.c.bf16 %v548, %v548
    %v551 = vsel %vm266, %v549, 0
    %553 = vmatprep.subr.bf16.mxu0 0
    %554 = vmatpush1.bf16.msra.mxu0 %v280
    %555 = vmatprep.subr.bf16.mxu0 0
    %556 = vmatpush1.bf16.msra.mxu0 %v281
    %557 = vmatprep.subr.bf16.mxu0 0
    %558 = vmatpush1.bf16.msra.mxu0 0
    %559 = vmatprep.subr.bf16.mxu0 0
    %560 = vmatpush1.bf16.msra.mxu0 0
    %561 = vmatprep.subr.bf16.mxu0 0
    %562 = vmatpush1.bf16.msra.mxu0 0
    %563 = vmatprep.subr.bf16.mxu0 0
    %564 = vmatpush1.bf16.msra.mxu0 0
    %565 = vmatprep.subr.bf16.mxu0 0
    %566 = vmatpush1.bf16.msra.mxu0 0
    %567 = vmatprep.subr.bf16.mxu0 0
    %568 = vmatpush1.bf16.msra.mxu0 0
    %569 = vmatprep.subr.bf16.mxu0 0
    %570 = vmatpush1.bf16.msra.mxu0 0
    %571 = vmatprep.subr.bf16.mxu0 0
    %572 = vmatpush1.bf16.msra.mxu0 0
    %573 = vmatprep.subr.bf16.mxu0 0
    %574 = vmatpush1.bf16.msra.mxu0 0
    %575 = vmatprep.subr.bf16.mxu0 0
    %576 = vmatpush1.bf16.msra.mxu0 0
    %577 = vmatprep.subr.bf16.mxu0 0
    %578 = vmatpush1.bf16.msra.mxu0 0
    %579 = vmatprep.subr.bf16.mxu0 0
    %580 = vmatpush1.bf16.msra.mxu0 0
    %581 = vmatprep.subr.bf16.mxu0 0
    %582 = vmatpush1.bf16.msra.mxu0 0
    %583 = vmatprep.subr.bf16.mxu0 0
    %584 = vmatpush1.bf16.msra.mxu0 0
    %585 = vmatprep.mubr.bf16.mxu0 0
    %586 = vmatmul.mubr.bf16.gmra.mrb[0].mxu0 %v551
    %v587 = vpop.f32.mrb[0].mxu0
    %v588 = vadd.f32 0.0, %v587
    %v589 = vpop.f32.mrb[0].mxu0
    %v590 = vpop.f32.mrb[0].mxu0
    %v591 = vpop.f32.mrb[0].mxu0
    %592 = vdwg.mxu0
    %v593 = vadd.f32 %v547, %v588
    %v594 = vxor.u32 %v593, 2147483648
    %v595 = vmul.f32 %v594, 1.442695
    %v596 = vpow.pop %v595
    %v597 = vadd.f32 %v596, 1.0
    %v598 = vrcp.pop %v597
    %v599 = vmul.f32 1.0, %v598
    %v600 = vtanh.pop %v593
    %v601 = vld [vmem:[#allocation4] sm:$0xff]
    %603 = vrot.lane.b32.xlu0 %v601, 32
    %v604 = vpop.permute.xlu0 %603
    %v606 = vmul.f32 %v599, %v604
    %608 = vrot.lane.b32.xlu0 %v600, 64
    %v609 = vpop.permute.xlu0 %608
    %v611 = vmul.f32 %v599, %v609
    %613 = vrot.lane.b32.xlu0 %v611, 32
    %v614 = vpop.permute.xlu0 %613
    %v616 = vadd.f32 %v606, %v614
    %v617 = vtanh.pop %v616
    %619 = vrot.lane.b32.xlu0 %v617, 64
    %v620 = vpop.permute.xlu0 %619
    %v622 = vmul.f32 %v599, %v620
    %624 = vrot.lane.b32.xlu0 %v616, 96
    %v625 = vpop.permute.xlu0 %624
    %627 = vst.msk [vmem:[#allocation4] sm:$0xff] %vm266, %v625
    %629 = vrot.lane.b32.xlu0 %v622, 32
    %v630 = vpop.permute.xlu0 %629
    %632 = vst.msk [vmem:[#allocation3] sm:$0xff] %vm266, %v630
    %s633 = scalar_lea.vmem [#allocation5], 24
    %634 = vst.msk [vmem:[%s633] sm:$0xff] %vm266, %v630
    %s635 = scalar_lea.vmem [#allocation2], 32
    %v636 = vld [vmem:[%s635] sm:$0xff]
    %v637 = vld [vmem:[#allocation3] sm:$0xff]
    %v638 = vpack.c.bf16 %v637, %v637
    %v640 = vsel %vm266, %v638, 0
    %642 = vmatprep.subr.bf16.mxu0 0
    %643 = vmatpush1.bf16.msra.mxu0 %v280
    %644 = vmatprep.subr.bf16.mxu0 0
    %645 = vmatpush1.bf16.msra.mxu0 %v281
    %646 = vmatprep.subr.bf16.mxu0 0
    %647 = vmatpush1.bf16.msra.mxu0 0
    %648 = vmatprep.subr.bf16.mxu0 0
    %649 = vmatpush1.bf16.msra.mxu0 0
    %650 = vmatprep.subr.bf16.mxu0 0
    %651 = vmatpush1.bf16.msra.mxu0 0
    %652 = vmatprep.subr.bf16.mxu0 0
    %653 = vmatpush1.bf16.msra.mxu0 0
    %654 = vmatprep.subr.bf16.mxu0 0
    %655 = vmatpush1.bf16.msra.mxu0 0
    %656 = vmatprep.subr.bf16.mxu0 0
    %657 = vmatpush1.bf16.msra.mxu0 0
    %658 = vmatprep.subr.bf16.mxu0 0
    %659 = vmatpush1.bf16.msra.mxu0 0
    %660 = vmatprep.subr.bf16.mxu0 0
    %661 = vmatpush1.bf16.msra.mxu0 0
    %662 = vmatprep.subr.bf16.mxu0 0
    %663 = vmatpush1.bf16.msra.mxu0 0
    %664 = vmatprep.subr.bf16.mxu0 0
    %665 = vmatpush1.bf16.msra.mxu0 0
    %666 = vmatprep.subr.bf16.mxu0 0
    %667 = vmatpush1.bf16.msra.mxu0 0
    %668 = vmatprep.subr.bf16.mxu0 0
    %669 = vmatpush1.bf16.msra.mxu0 0
    %670 = vmatprep.subr.bf16.mxu0 0
    %671 = vmatpush1.bf16.msra.mxu0 0
    %672 = vmatprep.subr.bf16.mxu0 0
    %673 = vmatpush1.bf16.msra.mxu0 0
    %674 = vmatprep.mubr.bf16.mxu0 0
    %675 = vmatmul.mubr.bf16.gmra.mrb[0].mxu0 %v640
    %v676 = vpop.f32.mrb[0].mxu0
    %v677 = vadd.f32 0.0, %v676
    %v678 = vpop.f32.mrb[0].mxu0
    %v679 = vpop.f32.mrb[0].mxu0
    %v680 = vpop.f32.mrb[0].mxu0
    %681 = vdwg.mxu0
    %v682 = vadd.f32 %v636, %v677
    %v683 = vxor.u32 %v682, 2147483648
    %v684 = vmul.f32 %v683, 1.442695
    %v685 = vpow.pop %v684
    %v686 = vadd.f32 %v685, 1.0
    %v687 = vrcp.pop %v686
    %v688 = vmul.f32 1.0, %v687
    %v689 = vtanh.pop %v682
    %v690 = vld [vmem:[#allocation4] sm:$0xff]
    %692 = vrot.lane.b32.xlu0 %v690, 32
    %v693 = vpop.permute.xlu0 %692
    %v695 = vmul.f32 %v688, %v693
    %697 = vrot.lane.b32.xlu0 %v689, 64
    %v698 = vpop.permute.xlu0 %697
    %v700 = vmul.f32 %v688, %v698
    %702 = vrot.lane.b32.xlu0 %v700, 32
    %v703 = vpop.permute.xlu0 %702
    %v705 = vadd.f32 %v695, %v703
    %v706 = vtanh.pop %v705
    %708 = vrot.lane.b32.xlu0 %v706, 64
    %v709 = vpop.permute.xlu0 %708
    %v711 = vmul.f32 %v688, %v709
    %713 = vrot.lane.b32.xlu0 %v705, 96
    %v714 = vpop.permute.xlu0 %713
    %716 = vst.msk [vmem:[#allocation4] sm:$0xff] %vm266, %v714
    %718 = vrot.lane.b32.xlu0 %v711, 32
    %v719 = vpop.permute.xlu0 %718
    %721 = vst.msk [vmem:[#allocation3] sm:$0xff] %vm266, %v719
    %s722 = scalar_lea.vmem [#allocation5], 32
    %723 = vst.msk [vmem:[%s722] sm:$0xff] %vm266, %v719
    %s724 = scalar_lea.vmem [#allocation2], 40
    %v725 = vld [vmem:[%s724] sm:$0xff]
    %v726 = vld [vmem:[#allocation3] sm:$0xff]
    %v727 = vpack.c.bf16 %v726, %v726
    %v729 = vsel %vm266, %v727, 0
    %731 = vmatprep.subr.bf16.mxu0 0
    %732 = vmatpush1.bf16.msra.mxu0 %v280
    %733 = vmatprep.subr.bf16.mxu0 0
    %734 = vmatpush1.bf16.msra.mxu0 %v281
    %735 = vmatprep.subr.bf16.mxu0 0
    %736 = vmatpush1.bf16.msra.mxu0 0
    %737 = vmatprep.subr.bf16.mxu0 0
    %738 = vmatpush1.bf16.msra.mxu0 0
    %739 = vmatprep.subr.bf16.mxu0 0
    %740 = vmatpush1.bf16.msra.mxu0 0
    %741 = vmatprep.subr.bf16.mxu0 0
    %742 = vmatpush1.bf16.msra.mxu0 0
    %743 = vmatprep.subr.bf16.mxu0 0
    %744 = vmatpush1.bf16.msra.mxu0 0
    %745 = vmatprep.subr.bf16.mxu0 0
    %746 = vmatpush1.bf16.msra.mxu0 0
    %747 = vmatprep.subr.bf16.mxu0 0
    %748 = vmatpush1.bf16.msra.mxu0 0
    %749 = vmatprep.subr.bf16.mxu0 0
    %750 = vmatpush1.bf16.msra.mxu0 0
    %751 = vmatprep.subr.bf16.mxu0 0
    %752 = vmatpush1.bf16.msra.mxu0 0
    %753 = vmatprep.subr.bf16.mxu0 0
    %754 = vmatpush1.bf16.msra.mxu0 0
    %755 = vmatprep.subr.bf16.mxu0 0
    %756 = vmatpush1.bf16.msra.mxu0 0
    %757 = vmatprep.subr.bf16.mxu0 0
    %758 = vmatpush1.bf16.msra.mxu0 0
    %759 = vmatprep.subr.bf16.mxu0 0
    %760 = vmatpush1.bf16.msra.mxu0 0
    %761 = vmatprep.subr.bf16.mxu0 0
    %762 = vmatpush1.bf16.msra.mxu0 0
    %763 = vmatprep.mubr.bf16.mxu0 0
    %764 = vmatmul.mubr.bf16.gmra.mrb[0].mxu0 %v729
    %v765 = vpop.f32.mrb[0].mxu0
    %v766 = vadd.f32 0.0, %v765
    %v767 = vpop.f32.mrb[0].mxu0
    %v768 = vpop.f32.mrb[0].mxu0
    %v769 = vpop.f32.mrb[0].mxu0
    %770 = vdwg.mxu0
    %v771 = vadd.f32 %v725, %v766
    %v772 = vxor.u32 %v771, 2147483648
    %v773 = vmul.f32 %v772, 1.442695
    %v774 = vpow.pop %v773
    %v775 = vadd.f32 %v774, 1.0
    %v776 = vrcp.pop %v775
    %v777 = vmul.f32 1.0, %v776
    %v778 = vtanh.pop %v771
    %v779 = vld [vmem:[#allocation4] sm:$0xff]
    %781 = vrot.lane.b32.xlu0 %v779, 32
    %v782 = vpop.permute.xlu0 %781
    %v784 = vmul.f32 %v777, %v782
    %786 = vrot.lane.b32.xlu0 %v778, 64
    %v787 = vpop.permute.xlu0 %786
    %v789 = vmul.f32 %v777, %v787
    %791 = vrot.lane.b32.xlu0 %v789, 32
    %v792 = vpop.permute.xlu0 %791
    %v794 = vadd.f32 %v784, %v792
    %v795 = vtanh.pop %v794
    %797 = vrot.lane.b32.xlu0 %v795, 64
    %v798 = vpop.permute.xlu0 %797
    %v800 = vmul.f32 %v777, %v798
    %802 = vrot.lane.b32.xlu0 %v794, 96
    %v803 = vpop.permute.xlu0 %802
    %805 = vst.msk [vmem:[#allocation4] sm:$0xff] %vm266, %v803
    %807 = vrot.lane.b32.xlu0 %v800, 32
    %v808 = vpop.permute.xlu0 %807
    %810 = vst.msk [vmem:[#allocation3] sm:$0xff] %vm266, %v808
    %s811 = scalar_lea.vmem [#allocation5], 40
    %812 = vst.msk [vmem:[%s811] sm:$0xff] %vm266, %v808
    %s813 = scalar_lea.vmem [#allocation2], 48
    %v814 = vld [vmem:[%s813] sm:$0xff]
    %v815 = vld [vmem:[#allocation3] sm:$0xff]
    %v816 = vpack.c.bf16 %v815, %v815
    %v818 = vsel %vm266, %v816, 0
    %820 = vmatprep.subr.bf16.mxu0 0
    %821 = vmatpush1.bf16.msra.mxu0 %v280
    %822 = vmatprep.subr.bf16.mxu0 0
    %823 = vmatpush1.bf16.msra.mxu0 %v281
    %824 = vmatprep.subr.bf16.mxu0 0
    %825 = vmatpush1.bf16.msra.mxu0 0
    %826 = vmatprep.subr.bf16.mxu0 0
    %827 = vmatpush1.bf16.msra.mxu0 0
    %828 = vmatprep.subr.bf16.mxu0 0
    %829 = vmatpush1.bf16.msra.mxu0 0
    %830 = vmatprep.subr.bf16.mxu0 0
    %831 = vmatpush1.bf16.msra.mxu0 0
    %832 = vmatprep.subr.bf16.mxu0 0
    %833 = vmatpush1.bf16.msra.mxu0 0
    %834 = vmatprep.subr.bf16.mxu0 0
    %835 = vmatpush1.bf16.msra.mxu0 0
    %836 = vmatprep.subr.bf16.mxu0 0
    %837 = vmatpush1.bf16.msra.mxu0 0
    %838 = vmatprep.subr.bf16.mxu0 0
    %839 = vmatpush1.bf16.msra.mxu0 0
    %840 = vmatprep.subr.bf16.mxu0 0
    %841 = vmatpush1.bf16.msra.mxu0 0
    %842 = vmatprep.subr.bf16.mxu0 0
    %843 = vmatpush1.bf16.msra.mxu0 0
    %844 = vmatprep.subr.bf16.mxu0 0
    %845 = vmatpush1.bf16.msra.mxu0 0
    %846 = vmatprep.subr.bf16.mxu0 0
    %847 = vmatpush1.bf16.msra.mxu0 0
    %848 = vmatprep.subr.bf16.mxu0 0
    %849 = vmatpush1.bf16.msra.mxu0 0
    %850 = vmatprep.subr.bf16.mxu0 0
    %851 = vmatpush1.bf16.msra.mxu0 0
    %852 = vmatprep.mubr.bf16.mxu0 0
    %853 = vmatmul.mubr.bf16.gmra.mrb[0].mxu0 %v818
    %v854 = vpop.f32.mrb[0].mxu0
    %v855 = vadd.f32 0.0, %v854
    %v856 = vpop.f32.mrb[0].mxu0
    %v857 = vpop.f32.mrb[0].mxu0
    %v858 = vpop.f32.mrb[0].mxu0
    %859 = vdwg.mxu0
    %v860 = vadd.f32 %v814, %v855
    %v861 = vxor.u32 %v860, 2147483648
    %v862 = vmul.f32 %v861, 1.442695
    %v863 = vpow.pop %v862
    %v864 = vadd.f32 %v863, 1.0
    %v865 = vrcp.pop %v864
    %v866 = vmul.f32 1.0, %v865
    %v867 = vtanh.pop %v860
    %v868 = vld [vmem:[#allocation4] sm:$0xff]
    %870 = vrot.lane.b32.xlu0 %v868, 32
    %v871 = vpop.permute.xlu0 %870
    %v873 = vmul.f32 %v866, %v871
    %875 = vrot.lane.b32.xlu0 %v867, 64
    %v876 = vpop.permute.xlu0 %875
    %v878 = vmul.f32 %v866, %v876
    %880 = vrot.lane.b32.xlu0 %v878, 32
    %v881 = vpop.permute.xlu0 %880
    %v883 = vadd.f32 %v873, %v881
    %v884 = vtanh.pop %v883
    %886 = vrot.lane.b32.xlu0 %v884, 64
    %v887 = vpop.permute.xlu0 %886
    %v889 = vmul.f32 %v866, %v887
    %891 = vrot.lane.b32.xlu0 %v883, 96
    %v892 = vpop.permute.xlu0 %891
    %894 = vst.msk [vmem:[#allocation4] sm:$0xff] %vm266, %v892
    %896 = vrot.lane.b32.xlu0 %v889, 32
    %v897 = vpop.permute.xlu0 %896
    %899 = vst.msk [vmem:[#allocation3] sm:$0xff] %vm266, %v897
    %s900 = scalar_lea.vmem [#allocation5], 48
    %901 = vst.msk [vmem:[%s900] sm:$0xff] %vm266, %v897
    %s902 = scalar_lea.vmem [#allocation2], 56
    %v903 = vld [vmem:[%s902] sm:$0xff]
    %v904 = vld [vmem:[#allocation3] sm:$0xff]
    %v905 = vpack.c.bf16 %v904, %v904
    %v907 = vsel %vm266, %v905, 0
    %909 = vmatprep.subr.bf16.mxu0 0
    %910 = vmatpush1.bf16.msra.mxu0 %v280
    %911 = vmatprep.subr.bf16.mxu0 0
    %912 = vmatpush1.bf16.msra.mxu0 %v281
    %913 = vmatprep.subr.bf16.mxu0 0
    %914 = vmatpush1.bf16.msra.mxu0 0
    %915 = vmatprep.subr.bf16.mxu0 0
    %916 = vmatpush1.bf16.msra.mxu0 0
    %917 = vmatprep.subr.bf16.mxu0 0
    %918 = vmatpush1.bf16.msra.mxu0 0
    %919 = vmatprep.subr.bf16.mxu0 0
    %920 = vmatpush1.bf16.msra.mxu0 0
    %921 = vmatprep.subr.bf16.mxu0 0
    %922 = vmatpush1.bf16.msra.mxu0 0
    %923 = vmatprep.subr.bf16.mxu0 0
    %924 = vmatpush1.bf16.msra.mxu0 0
    %925 = vmatprep.subr.bf16.mxu0 0
    %926 = vmatpush1.bf16.msra.mxu0 0
    %927 = vmatprep.subr.bf16.mxu0 0
    %928 = vmatpush1.bf16.msra.mxu0 0
    %929 = vmatprep.subr.bf16.mxu0 0
    %930 = vmatpush1.bf16.msra.mxu0 0
    %931 = vmatprep.subr.bf16.mxu0 0
    %932 = vmatpush1.bf16.msra.mxu0 0
    %933 = vmatprep.subr.bf16.mxu0 0
    %934 = vmatpush1.bf16.msra.mxu0 0
    %935 = vmatprep.subr.bf16.mxu0 0
    %936 = vmatpush1.bf16.msra.mxu0 0
    %937 = vmatprep.subr.bf16.mxu0 0
    %938 = vmatpush1.bf16.msra.mxu0 0
    %939 = vmatprep.subr.bf16.mxu0 0
    %940 = vmatpush1.bf16.msra.mxu0 0
    %941 = vmatprep.mubr.bf16.mxu0 0
    %942 = vmatmul.mubr.bf16.gmra.mrb[0].mxu0 %v907
    %v943 = vpop.f32.mrb[0].mxu0
    %v944 = vadd.f32 0.0, %v943
    %v945 = vpop.f32.mrb[0].mxu0
    %v946 = vpop.f32.mrb[0].mxu0
    %v947 = vpop.f32.mrb[0].mxu0
    %948 = vdwg.mxu0
    %v949 = vadd.f32 %v903, %v944
    %v950 = vxor.u32 %v949, 2147483648
    %v951 = vmul.f32 %v950, 1.442695
    %v952 = vpow.pop %v951
    %v953 = vadd.f32 %v952, 1.0
    %v954 = vrcp.pop %v953
    %v955 = vmul.f32 1.0, %v954
    %v956 = vtanh.pop %v949
    %v957 = vld [vmem:[#allocation4] sm:$0xff]
    %959 = vrot.lane.b32.xlu0 %v957, 32
    %v960 = vpop.permute.xlu0 %959
    %v962 = vmul.f32 %v955, %v960
    %964 = vrot.lane.b32.xlu0 %v956, 64
    %v965 = vpop.permute.xlu0 %964
    %v967 = vmul.f32 %v955, %v965
    %969 = vrot.lane.b32.xlu0 %v967, 32
    %v970 = vpop.permute.xlu0 %969
    %v972 = vadd.f32 %v962, %v970
    %v973 = vtanh.pop %v972
    %975 = vrot.lane.b32.xlu0 %v973, 64
    %v976 = vpop.permute.xlu0 %975
    %v978 = vmul.f32 %v955, %v976
    %980 = vrot.lane.b32.xlu0 %v972, 96
    %v981 = vpop.permute.xlu0 %980
    %983 = vst.msk [vmem:[#allocation4] sm:$0xff] %vm266, %v981
    %985 = vrot.lane.b32.xlu0 %v978, 32
    %v986 = vpop.permute.xlu0 %985
    %988 = vst.msk [vmem:[#allocation3] sm:$0xff] %vm266, %v986
    %s989 = scalar_lea.vmem [#allocation5], 56
    %990 = vst.msk [vmem:[%s989] sm:$0xff] %vm266, %v986
    %v991 = vld [vmem:[%s0] sm:$0xf]
    %v992 = vld [vmem:[%s0 + $0x4] sm:$0xf]
    %v993 = vld [vmem:[%s0 + $0x8] sm:$0xf]
    %v994 = vld [vmem:[%s0 + $0xc] sm:$0xf]
    %v995 = vld [vmem:[%s0 + $0x10] sm:$0xf]
    %v996 = vld [vmem:[%s0 + $0x14] sm:$0xf]
    %v997 = vld [vmem:[%s0 + $0x18] sm:$0xf]
    %v998 = vld [vmem:[%s0 + $0x1c] sm:$0xf]
    %v999 = vld [vmem:[#allocation9] sm:$0xf]
    %v1000 = vld [vmem:[%s6] sm:$0x1]
    %v1002 = vlaneseq
    %v1003 = vshrl.u32 %v1002, 7
    %v1004 = vsub.s32 0, %v1003
    %v1005 = vrot.slane %v1000, %v1004
    %v1015 = vunpack.c.l.b16 %v991
    %v1016 = vunpack.c.l.b16 %v992
    %v1017 = vunpack.c.l.b16 %v993
    %v1018 = vunpack.c.l.b16 %v994
    %v1019 = vunpack.c.l.b16 %v995
    %v1020 = vunpack.c.l.b16 %v996
    %v1021 = vunpack.c.l.b16 %v997
    %v1022 = vunpack.c.l.b16 %v998
    %v1023 = vpack.c.b16 %v1016, %v1015
    %v1024 = vpack.c.b16 %v1018, %v1017
    %v1025 = vpack.c.b16 %v1020, %v1019
    %v1026 = vpack.c.b16 %v1022, %v1021
    %v1028 = vsel %vm172, %v1023, 0
    %v1031 = vsel %vm172, %v1024, 0
    %v1034 = vsel %vm172, %v1025, 0
    %v1037 = vsel %vm172, %v1026, 0
    %v1040 = vsel %vm185, %v999, 0
    %1042 = vmatprep.subr.bf16.mxu0 0
    %1043 = vmatpush1.bf16.msra.mxu0 %v1040
    %1044 = vmatprep.subr.bf16.mxu0 0
    %1045 = vmatpush1.bf16.msra.mxu0 0
    %1046 = vmatprep.subr.bf16.mxu0 0
    %1047 = vmatpush1.bf16.msra.mxu0 0
    %1048 = vmatprep.subr.bf16.mxu0 0
    %1049 = vmatpush1.bf16.msra.mxu0 0
    %1050 = vmatprep.subr.bf16.mxu0 0
    %1051 = vmatpush1.bf16.msra.mxu0 0
    %1052 = vmatprep.subr.bf16.mxu0 0
    %1053 = vmatpush1.bf16.msra.mxu0 0
    %1054 = vmatprep.subr.bf16.mxu0 0
    %1055 = vmatpush1.bf16.msra.mxu0 0
    %1056 = vmatprep.subr.bf16.mxu0 0
    %1057 = vmatpush1.bf16.msra.mxu0 0
    %1058 = vmatprep.subr.bf16.mxu0 0
    %1059 = vmatpush1.bf16.msra.mxu0 0
    %1060 = vmatprep.subr.bf16.mxu0 0
    %1061 = vmatpush1.bf16.msra.mxu0 0
    %1062 = vmatprep.subr.bf16.mxu0 0
    %1063 = vmatpush1.bf16.msra.mxu0 0
    %1064 = vmatprep.subr.bf16.mxu0 0
    %1065 = vmatpush1.bf16.msra.mxu0 0
    %1066 = vmatprep.subr.bf16.mxu0 0
    %1067 = vmatpush1.bf16.msra.mxu0 0
    %1068 = vmatprep.subr.bf16.mxu0 0
    %1069 = vmatpush1.bf16.msra.mxu0 0
    %1070 = vmatprep.subr.bf16.mxu0 0
    %1071 = vmatpush1.bf16.msra.mxu0 0
    %1072 = vmatprep.subr.bf16.mxu0 0
    %1073 = vmatpush1.bf16.msra.mxu0 0
    %1074 = vmatprep.mubr.bf16.mxu0 0
    %1075 = vmatmul.mubr.bf16.gmra.mrb[0].mxu0 %v1028
    %v1076 = vpop.f32.mrb[0].mxu0
    %v1077 = vadd.f32 %v1005, %v1076
    %v1078 = vpop.f32.mrb[0].mxu0
    %v1079 = vpop.f32.mrb[0].mxu0
    %v1080 = vadd.f32 %v1005, %v1079
    %v1081 = vpop.f32.mrb[0].mxu0
    %1082 = vmatprep.mubr.bf16.mxu0 0
    %1083 = vmatmul.mubr.bf16.gmra.mrb[0].mxu0 %v1031
    %v1084 = vpop.f32.mrb[0].mxu0
    %v1085 = vadd.f32 %v1005, %v1084
    %v1086 = vpop.f32.mrb[0].mxu0
    %v1087 = vpop.f32.mrb[0].mxu0
    %v1088 = vadd.f32 %v1005, %v1087
    %v1089 = vpop.f32.mrb[0].mxu0
    %1090 = vmatprep.mubr.bf16.mxu0 0
    %1091 = vmatmul.mubr.bf16.gmra.mrb[0].mxu0 %v1034
    %v1092 = vpop.f32.mrb[0].mxu0
    %v1093 = vadd.f32 %v1005, %v1092
    %v1094 = vpop.f32.mrb[0].mxu0
    %v1095 = vpop.f32.mrb[0].mxu0
    %v1096 = vadd.f32 %v1005, %v1095
    %v1097 = vpop.f32.mrb[0].mxu0
    %1098 = vmatprep.mubr.bf16.mxu0 0
    %1099 = vmatmul.mubr.bf16.gmra.mrb[0].mxu0 %v1037
    %v1100 = vpop.f32.mrb[0].mxu0
    %v1101 = vadd.f32 %v1005, %v1100
    %v1102 = vpop.f32.mrb[0].mxu0
    %v1103 = vpop.f32.mrb[0].mxu0
    %v1104 = vadd.f32 %v1005, %v1103
    %v1105 = vpop.f32.mrb[0].mxu0
    %1106 = vdwg.mxu0
    %1107 = vst [vmem:[#allocation2] sm:$0xff] %v1077
    %1108 = vst [vmem:[#allocation2 + $0x8] sm:$0xff] %v1080
    %1109 = vst [vmem:[#allocation2 + $0x10] sm:$0xff] %v1085
    %1110 = vst [vmem:[#allocation2 + $0x18] sm:$0xff] %v1088
    %1111 = vst [vmem:[#allocation2 + $0x20] sm:$0xff] %v1093
    %1112 = vst [vmem:[#allocation2 + $0x28] sm:$0xff] %v1096
    %1113 = vst [vmem:[#allocation2 + $0x30] sm:$0xff] %v1101
    %1114 = vst [vmem:[#allocation2 + $0x38] sm:$0xff] %v1104
    %v1115 = vld [vmem:[%s5] sm:$0xf]
    %v1116 = vld [vmem:[%s5 + $0x4] sm:$0xf]
    %v1117 = vld [vmem:[%s5 + $0x8] sm:$0xf]
    %v1118 = vld [vmem:[%s5 + $0xc] sm:$0xf]
    %1119 = vst.msk [vmem:[#allocation3] sm:$0xff] %vm266, 0.0
    %1120 = vst.msk [vmem:[#allocation4] sm:$0xff] %vm266, 0.0
    %v1121 = vld [vmem:[%s902] sm:$0xff]
    %v1122 = vld [vmem:[#allocation3] sm:$0xff]
    %v1123 = vpack.c.bf16 %v1122, %v1122
    %v1128 = vunpack.c.l.b16 %v1115
    %v1129 = vunpack.c.l.b16 %v1116
    %v1130 = vunpack.c.l.b16 %v1117
    %v1131 = vunpack.c.l.b16 %v1118
    %v1132 = vpack.c.b16 %v1129, %v1128
    %v1133 = vpack.c.b16 %v1131, %v1130
    %v1137 = vsel %vm266, %v1123, 0
    %1139 = vmatprep.subr.bf16.mxu0 0
    %1140 = vmatpush1.bf16.msra.mxu0 %v1132
    %1141 = vmatprep.subr.bf16.mxu0 0
    %1142 = vmatpush1.bf16.msra.mxu0 %v1133
    %1143 = vmatprep.subr.bf16.mxu0 0
    %1144 = vmatpush1.bf16.msra.mxu0 0
    %1145 = vmatprep.subr.bf16.mxu0 0
    %1146 = vmatpush1.bf16.msra.mxu0 0
    %1147 = vmatprep.subr.bf16.mxu0 0
    %1148 = vmatpush1.bf16.msra.mxu0 0
    %1149 = vmatprep.subr.bf16.mxu0 0
    %1150 = vmatpush1.bf16.msra.mxu0 0
    %1151 = vmatprep.subr.bf16.mxu0 0
    %1152 = vmatpush1.bf16.msra.mxu0 0
    %1153 = vmatprep.subr.bf16.mxu0 0
    %1154 = vmatpush1.bf16.msra.mxu0 0
    %1155 = vmatprep.subr.bf16.mxu0 0
    %1156 = vmatpush1.bf16.msra.mxu0 0
    %1157 = vmatprep.subr.bf16.mxu0 0
    %1158 = vmatpush1.bf16.msra.mxu0 0
    %1159 = vmatprep.subr.bf16.mxu0 0
    %1160 = vmatpush1.bf16.msra.mxu0 0
    %1161 = vmatprep.subr.bf16.mxu0 0
    %1162 = vmatpush1.bf16.msra.mxu0 0
    %1163 = vmatprep.subr.bf16.mxu0 0
    %1164 = vmatpush1.bf16.msra.mxu0 0
    %1165 = vmatprep.subr.bf16.mxu0 0
    %1166 = vmatpush1.bf16.msra.mxu0 0
    %1167 = vmatprep.subr.bf16.mxu0 0
    %1168 = vmatpush1.bf16.msra.mxu0 0
    %1169 = vmatprep.subr.bf16.mxu0 0
    %1170 = vmatpush1.bf16.msra.mxu0 0
    %1171 = vmatprep.mubr.bf16.mxu0 0
    %1172 = vmatmul.mubr.bf16.gmra.mrb[0].mxu0 %v1137
    %v1173 = vpop.f32.mrb[0].mxu0
    %v1174 = vadd.f32 0.0, %v1173
    %v1175 = vpop.f32.mrb[0].mxu0
    %v1176 = vpop.f32.mrb[0].mxu0
    %v1177 = vpop.f32.mrb[0].mxu0
    %1178 = vdwg.mxu0
    %v1179 = vadd.f32 %v1121, %v1174
    %v1180 = vxor.u32 %v1179, 2147483648
    %v1181 = vmul.f32 %v1180, 1.442695
    %v1182 = vpow.pop %v1181
    %v1183 = vadd.f32 %v1182, 1.0
    %v1184 = vrcp.pop %v1183
    %v1185 = vmul.f32 1.0, %v1184
    %v1186 = vtanh.pop %v1179
    %v1187 = vld [vmem:[#allocation4] sm:$0xff]
    %1189 = vrot.lane.b32.xlu0 %v1187, 32
    %v1190 = vpop.permute.xlu0 %1189
    %v1192 = vmul.f32 %v1185, %v1190
    %1194 = vrot.lane.b32.xlu0 %v1186, 64
    %v1195 = vpop.permute.xlu0 %1194
    %v1197 = vmul.f32 %v1185, %v1195
    %1199 = vrot.lane.b32.xlu0 %v1197, 32
    %v1200 = vpop.permute.xlu0 %1199
    %v1202 = vadd.f32 %v1192, %v1200
    %v1203 = vtanh.pop %v1202
    %1205 = vrot.lane.b32.xlu0 %v1203, 64
    %v1206 = vpop.permute.xlu0 %1205
    %v1208 = vmul.f32 %v1185, %v1206
    %1210 = vrot.lane.b32.xlu0 %v1202, 96
    %v1211 = vpop.permute.xlu0 %1210
    %1213 = vst.msk [vmem:[#allocation4] sm:$0xff] %vm266, %v1211
    %1215 = vrot.lane.b32.xlu0 %v1208, 32
    %v1216 = vpop.permute.xlu0 %1215
    %1218 = vst.msk [vmem:[#allocation3] sm:$0xff] %vm266, %v1216
    %s1219 = scalar_lea.vmem [#allocation6], 56
    %1220 = vst.msk [vmem:[%s1219] sm:$0xff] %vm266, %v1216
    %v1221 = vld [vmem:[%s813] sm:$0xff]
    %v1222 = vld [vmem:[#allocation3] sm:$0xff]
    %v1223 = vpack.c.bf16 %v1222, %v1222
    %v1225 = vsel %vm266, %v1223, 0
    %1227 = vmatprep.subr.bf16.mxu0 0
    %1228 = vmatpush1.bf16.msra.mxu0 %v1132
    %1229 = vmatprep.subr.bf16.mxu0 0
    %1230 = vmatpush1.bf16.msra.mxu0 %v1133
    %1231 = vmatprep.subr.bf16.mxu0 0
    %1232 = vmatpush1.bf16.msra.mxu0 0
    %1233 = vmatprep.subr.bf16.mxu0 0
    %1234 = vmatpush1.bf16.msra.mxu0 0
    %1235 = vmatprep.subr.bf16.mxu0 0
    %1236 = vmatpush1.bf16.msra.mxu0 0
    %1237 = vmatprep.subr.bf16.mxu0 0
    %1238 = vmatpush1.bf16.msra.mxu0 0
    %1239 = vmatprep.subr.bf16.mxu0 0
    %1240 = vmatpush1.bf16.msra.mxu0 0
    %1241 = vmatprep.subr.bf16.mxu0 0
    %1242 = vmatpush1.bf16.msra.mxu0 0
    %1243 = vmatprep.subr.bf16.mxu0 0
    %1244 = vmatpush1.bf16.msra.mxu0 0
    %1245 = vmatprep.subr.bf16.mxu0 0
    %1246 = vmatpush1.bf16.msra.mxu0 0
    %1247 = vmatprep.subr.bf16.mxu0 0
    %1248 = vmatpush1.bf16.msra.mxu0 0
    %1249 = vmatprep.subr.bf16.mxu0 0
    %1250 = vmatpush1.bf16.msra.mxu0 0
    %1251 = vmatprep.subr.bf16.mxu0 0
    %1252 = vmatpush1.bf16.msra.mxu0 0
    %1253 = vmatprep.subr.bf16.mxu0 0
    %1254 = vmatpush1.bf16.msra.mxu0 0
    %1255 = vmatprep.subr.bf16.mxu0 0
    %1256 = vmatpush1.bf16.msra.mxu0 0
    %1257 = vmatprep.subr.bf16.mxu0 0
    %1258 = vmatpush1.bf16.msra.mxu0 0
    %1259 = vmatprep.mubr.bf16.mxu0 0
    %1260 = vmatmul.mubr.bf16.gmra.mrb[0].mxu0 %v1225
    %v1261 = vpop.f32.mrb[0].mxu0
    %v1262 = vadd.f32 0.0, %v1261
    %v1263 = vpop.f32.mrb[0].mxu0
    %v1264 = vpop.f32.mrb[0].mxu0
    %v1265 = vpop.f32.mrb[0].mxu0
    %1266 = vdwg.mxu0
    %v1267 = vadd.f32 %v1221, %v1262
    %v1268 = vxor.u32 %v1267, 2147483648
    %v1269 = vmul.f32 %v1268, 1.442695
    %v1270 = vpow.pop %v1269
    %v1271 = vadd.f32 %v1270, 1.0
    %v1272 = vrcp.pop %v1271
    %v1273 = vmul.f32 1.0, %v1272
    %v1274 = vtanh.pop %v1267
    %v1275 = vld [vmem:[#allocation4] sm:$0xff]
    %1277 = vrot.lane.b32.xlu0 %v1275, 32
    %v1278 = vpop.permute.xlu0 %1277
    %v1280 = vmul.f32 %v1273, %v1278
    %1282 = vrot.lane.b32.xlu0 %v1274, 64
    %v1283 = vpop.permute.xlu0 %1282
    %v1285 = vmul.f32 %v1273, %v1283
    %1287 = vrot.lane.b32.xlu0 %v1285, 32
    %v1288 = vpop.permute.xlu0 %1287
    %v1290 = vadd.f32 %v1280, %v1288
    %v1291 = vtanh.pop %v1290
    %1293 = vrot.lane.b32.xlu0 %v1291, 64
    %v1294 = vpop.permute.xlu0 %1293
    %v1296 = vmul.f32 %v1273, %v1294
    %1298 = vrot.lane.b32.xlu0 %v1290, 96
    %v1299 = vpop.permute.xlu0 %1298
    %1301 = vst.msk [vmem:[#allocation4] sm:$0xff] %vm266, %v1299
    %1303 = vrot.lane.b32.xlu0 %v1296, 32
    %v1304 = vpop.permute.xlu0 %1303
    %1306 = vst.msk [vmem:[#allocation3] sm:$0xff] %vm266, %v1304
    %s1307 = scalar_lea.vmem [#allocation6], 48
    %1308 = vst.msk [vmem:[%s1307] sm:$0xff] %vm266, %v1304
    %v1309 = vld [vmem:[%s724] sm:$0xff]
    %v1310 = vld [vmem:[#allocation3] sm:$0xff]
    %v1311 = vpack.c.bf16 %v1310, %v1310
    %v1313 = vsel %vm266, %v1311, 0
    %1315 = vmatprep.subr.bf16.mxu0 0
    %1316 = vmatpush1.bf16.msra.mxu0 %v1132
    %1317 = vmatprep.subr.bf16.mxu0 0
    %1318 = vmatpush1.bf16.msra.mxu0 %v1133
    %1319 = vmatprep.subr.bf16.mxu0 0
    %1320 = vmatpush1.bf16.msra.mxu0 0
    %1321 = vmatprep.subr.bf16.mxu0 0
    %1322 = vmatpush1.bf16.msra.mxu0 0
    %1323 = vmatprep.subr.bf16.mxu0 0
    %1324 = vmatpush1.bf16.msra.mxu0 0
    %1325 = vmatprep.subr.bf16.mxu0 0
    %1326 = vmatpush1.bf16.msra.mxu0 0
    %1327 = vmatprep.subr.bf16.mxu0 0
    %1328 = vmatpush1.bf16.msra.mxu0 0
    %1329 = vmatprep.subr.bf16.mxu0 0
    %1330 = vmatpush1.bf16.msra.mxu0 0
    %1331 = vmatprep.subr.bf16.mxu0 0
    %1332 = vmatpush1.bf16.msra.mxu0 0
    %1333 = vmatprep.subr.bf16.mxu0 0
    %1334 = vmatpush1.bf16.msra.mxu0 0
    %1335 = vmatprep.subr.bf16.mxu0 0
    %1336 = vmatpush1.bf16.msra.mxu0 0
    %1337 = vmatprep.subr.bf16.mxu0 0
    %1338 = vmatpush1.bf16.msra.mxu0 0
    %1339 = vmatprep.subr.bf16.mxu0 0
    %1340 = vmatpush1.bf16.msra.mxu0 0
    %1341 = vmatprep.subr.bf16.mxu0 0
    %1342 = vmatpush1.bf16.msra.mxu0 0
    %1343 = vmatprep.subr.bf16.mxu0 0
    %1344 = vmatpush1.bf16.msra.mxu0 0
    %1345 = vmatprep.subr.bf16.mxu0 0
    %1346 = vmatpush1.bf16.msra.mxu0 0
    %1347 = vmatprep.mubr.bf16.mxu0 0
    %1348 = vmatmul.mubr.bf16.gmra.mrb[0].mxu0 %v1313
    %v1349 = vpop.f32.mrb[0].mxu0
    %v1350 = vadd.f32 0.0, %v1349
    %v1351 = vpop.f32.mrb[0].mxu0
    %v1352 = vpop.f32.mrb[0].mxu0
    %v1353 = vpop.f32.mrb[0].mxu0
    %1354 = vdwg.mxu0
    %v1355 = vadd.f32 %v1309, %v1350
    %v1356 = vxor.u32 %v1355, 2147483648
    %v1357 = vmul.f32 %v1356, 1.442695
    %v1358 = vpow.pop %v1357
    %v1359 = vadd.f32 %v1358, 1.0
    %v1360 = vrcp.pop %v1359
    %v1361 = vmul.f32 1.0, %v1360
    %v1362 = vtanh.pop %v1355
    %v1363 = vld [vmem:[#allocation4] sm:$0xff]
    %1365 = vrot.lane.b32.xlu0 %v1363, 32
    %v1366 = vpop.permute.xlu0 %1365
    %v1368 = vmul.f32 %v1361, %v1366
    %1370 = vrot.lane.b32.xlu0 %v1362, 64
    %v1371 = vpop.permute.xlu0 %1370
    %v1373 = vmul.f32 %v1361, %v1371
    %1375 = vrot.lane.b32.xlu0 %v1373, 32
    %v1376 = vpop.permute.xlu0 %1375
    %v1378 = vadd.f32 %v1368, %v1376
    %v1379 = vtanh.pop %v1378
    %1381 = vrot.lane.b32.xlu0 %v1379, 64
    %v1382 = vpop.permute.xlu0 %1381
    %v1384 = vmul.f32 %v1361, %v1382
    %1386 = vrot.lane.b32.xlu0 %v1378, 96
    %v1387 = vpop.permute.xlu0 %1386
    %1389 = vst.msk [vmem:[#allocation4] sm:$0xff] %vm266, %v1387
    %1391 = vrot.lane.b32.xlu0 %v1384, 32
    %v1392 = vpop.permute.xlu0 %1391
    %1394 = vst.msk [vmem:[#allocation3] sm:$0xff] %vm266, %v1392
    %s1395 = scalar_lea.vmem [#allocation6], 40
    %1396 = vst.msk [vmem:[%s1395] sm:$0xff] %vm266, %v1392
    %v1397 = vld [vmem:[%s635] sm:$0xff]
    %v1398 = vld [vmem:[#allocation3] sm:$0xff]
    %v1399 = vpack.c.bf16 %v1398, %v1398
    %v1401 = vsel %vm266, %v1399, 0
    %1403 = vmatprep.subr.bf16.mxu0 0
    %1404 = vmatpush1.bf16.msra.mxu0 %v1132
    %1405 = vmatprep.subr.bf16.mxu0 0
    %1406 = vmatpush1.bf16.msra.mxu0 %v1133
    %1407 = vmatprep.subr.bf16.mxu0 0
    %1408 = vmatpush1.bf16.msra.mxu0 0
    %1409 = vmatprep.subr.bf16.mxu0 0
    %1410 = vmatpush1.bf16.msra.mxu0 0
    %1411 = vmatprep.subr.bf16.mxu0 0
    %1412 = vmatpush1.bf16.msra.mxu0 0
    %1413 = vmatprep.subr.bf16.mxu0 0
    %1414 = vmatpush1.bf16.msra.mxu0 0
    %1415 = vmatprep.subr.bf16.mxu0 0
    %1416 = vmatpush1.bf16.msra.mxu0 0
    %1417 = vmatprep.subr.bf16.mxu0 0
    %1418 = vmatpush1.bf16.msra.mxu0 0
    %1419 = vmatprep.subr.bf16.mxu0 0
    %1420 = vmatpush1.bf16.msra.mxu0 0
    %1421 = vmatprep.subr.bf16.mxu0 0
    %1422 = vmatpush1.bf16.msra.mxu0 0
    %1423 = vmatprep.subr.bf16.mxu0 0
    %1424 = vmatpush1.bf16.msra.mxu0 0
    %1425 = vmatprep.subr.bf16.mxu0 0
    %1426 = vmatpush1.bf16.msra.mxu0 0
    %1427 = vmatprep.subr.bf16.mxu0 0
    %1428 = vmatpush1.bf16.msra.mxu0 0
    %1429 = vmatprep.subr.bf16.mxu0 0
    %1430 = vmatpush1.bf16.msra.mxu0 0
    %1431 = vmatprep.subr.bf16.mxu0 0
    %1432 = vmatpush1.bf16.msra.mxu0 0
    %1433 = vmatprep.subr.bf16.mxu0 0
    %1434 = vmatpush1.bf16.msra.mxu0 0
    %1435 = vmatprep.mubr.bf16.mxu0 0
    %1436 = vmatmul.mubr.bf16.gmra.mrb[0].mxu0 %v1401
    %v1437 = vpop.f32.mrb[0].mxu0
    %v1438 = vadd.f32 0.0, %v1437
    %v1439 = vpop.f32.mrb[0].mxu0
    %v1440 = vpop.f32.mrb[0].mxu0
    %v1441 = vpop.f32.mrb[0].mxu0
    %1442 = vdwg.mxu0
    %v1443 = vadd.f32 %v1397, %v1438
    %v1444 = vxor.u32 %v1443, 2147483648
    %v1445 = vmul.f32 %v1444, 1.442695
    %v1446 = vpow.pop %v1445
    %v1447 = vadd.f32 %v1446, 1.0
    %v1448 = vrcp.pop %v1447
    %v1449 = vmul.f32 1.0, %v1448
    %v1450 = vtanh.pop %v1443
    %v1451 = vld [vmem:[#allocation4] sm:$0xff]
    %1453 = vrot.lane.b32.xlu0 %v1451, 32
    %v1454 = vpop.permute.xlu0 %1453
    %v1456 = vmul.f32 %v1449, %v1454
    %1458 = vrot.lane.b32.xlu0 %v1450, 64
    %v1459 = vpop.permute.xlu0 %1458
    %v1461 = vmul.f32 %v1449, %v1459
    %1463 = vrot.lane.b32.xlu0 %v1461, 32
    %v1464 = vpop.permute.xlu0 %1463
    %v1466 = vadd.f32 %v1456, %v1464
    %v1467 = vtanh.pop %v1466
    %1469 = vrot.lane.b32.xlu0 %v1467, 64
    %v1470 = vpop.permute.xlu0 %1469
    %v1472 = vmul.f32 %v1449, %v1470
    %1474 = vrot.lane.b32.xlu0 %v1466, 96
    %v1475 = vpop.permute.xlu0 %1474
    %1477 = vst.msk [vmem:[#allocation4] sm:$0xff] %vm266, %v1475
    %1479 = vrot.lane.b32.xlu0 %v1472, 32
    %v1480 = vpop.permute.xlu0 %1479
    %1482 = vst.msk [vmem:[#allocation3] sm:$0xff] %vm266, %v1480
    %s1483 = scalar_lea.vmem [#allocation6], 32
    %1484 = vst.msk [vmem:[%s1483] sm:$0xff] %vm266, %v1480
    %v1485 = vld [vmem:[%s546] sm:$0xff]
    %v1486 = vld [vmem:[#allocation3] sm:$0xff]
    %v1487 = vpack.c.bf16 %v1486, %v1486
    %v1489 = vsel %vm266, %v1487, 0
    %1491 = vmatprep.subr.bf16.mxu0 0
    %1492 = vmatpush1.bf16.msra.mxu0 %v1132
    %1493 = vmatprep.subr.bf16.mxu0 0
    %1494 = vmatpush1.bf16.msra.mxu0 %v1133
    %1495 = vmatprep.subr.bf16.mxu0 0
    %1496 = vmatpush1.bf16.msra.mxu0 0
    %1497 = vmatprep.subr.bf16.mxu0 0
    %1498 = vmatpush1.bf16.msra.mxu0 0
    %1499 = vmatprep.subr.bf16.mxu0 0
    %1500 = vmatpush1.bf16.msra.mxu0 0
    %1501 = vmatprep.subr.bf16.mxu0 0
    %1502 = vmatpush1.bf16.msra.mxu0 0
    %1503 = vmatprep.subr.bf16.mxu0 0
    %1504 = vmatpush1.bf16.msra.mxu0 0
    %1505 = vmatprep.subr.bf16.mxu0 0
    %1506 = vmatpush1.bf16.msra.mxu0 0
    %1507 = vmatprep.subr.bf16.mxu0 0
    %1508 = vmatpush1.bf16.msra.mxu0 0
    %1509 = vmatprep.subr.bf16.mxu0 0
    %1510 = vmatpush1.bf16.msra.mxu0 0
    %1511 = vmatprep.subr.bf16.mxu0 0
    %1512 = vmatpush1.bf16.msra.mxu0 0
    %1513 = vmatprep.subr.bf16.mxu0 0
    %1514 = vmatpush1.bf16.msra.mxu0 0
    %1515 = vmatprep.subr.bf16.mxu0 0
    %1516 = vmatpush1.bf16.msra.mxu0 0
    %1517 = vmatprep.subr.bf16.mxu0 0
    %1518 = vmatpush1.bf16.msra.mxu0 0
    %1519 = vmatprep.subr.bf16.mxu0 0
    %1520 = vmatpush1.bf16.msra.mxu0 0
    %1521 = vmatprep.subr.bf16.mxu0 0
    %1522 = vmatpush1.bf16.msra.mxu0 0
    %1523 = vmatprep.mubr.bf16.mxu0 0
    %1524 = vmatmul.mubr.bf16.gmra.mrb[0].mxu0 %v1489
    %v1525 = vpop.f32.mrb[0].mxu0
    %v1526 = vadd.f32 0.0, %v1525
    %v1527 = vpop.f32.mrb[0].mxu0
    %v1528 = vpop.f32.mrb[0].mxu0
    %v1529 = vpop.f32.mrb[0].mxu0
    %1530 = vdwg.mxu0
    %v1531 = vadd.f32 %v1485, %v1526
    %v1532 = vxor.u32 %v1531, 2147483648
    %v1533 = vmul.f32 %v1532, 1.442695
    %v1534 = vpow.pop %v1533
    %v1535 = vadd.f32 %v1534, 1.0
    %v1536 = vrcp.pop %v1535
    %v1537 = vmul.f32 1.0, %v1536
    %v1538 = vtanh.pop %v1531
    %v1539 = vld [vmem:[#allocation4] sm:$0xff]
    %1541 = vrot.lane.b32.xlu0 %v1539, 32
    %v1542 = vpop.permute.xlu0 %1541
    %v1544 = vmul.f32 %v1537, %v1542
    %1546 = vrot.lane.b32.xlu0 %v1538, 64
    %v1547 = vpop.permute.xlu0 %1546
    %v1549 = vmul.f32 %v1537, %v1547
    %1551 = vrot.lane.b32.xlu0 %v1549, 32
    %v1552 = vpop.permute.xlu0 %1551
    %v1554 = vadd.f32 %v1544, %v1552
    %v1555 = vtanh.pop %v1554
    %1557 = vrot.lane.b32.xlu0 %v1555, 64
    %v1558 = vpop.permute.xlu0 %1557
    %v1560 = vmul.f32 %v1537, %v1558
    %1562 = vrot.lane.b32.xlu0 %v1554, 96
    %v1563 = vpop.permute.xlu0 %1562
    %1565 = vst.msk [vmem:[#allocation4] sm:$0xff] %vm266, %v1563
    %1567 = vrot.lane.b32.xlu0 %v1560, 32
    %v1568 = vpop.permute.xlu0 %1567
    %1570 = vst.msk [vmem:[#allocation3] sm:$0xff] %vm266, %v1568
    %s1571 = scalar_lea.vmem [#allocation6], 24
    %1572 = vst.msk [vmem:[%s1571] sm:$0xff] %vm266, %v1568
    %v1573 = vld [vmem:[%s457] sm:$0xff]
    %v1574 = vld [vmem:[#allocation3] sm:$0xff]
    %v1575 = vpack.c.bf16 %v1574, %v1574
    %v1577 = vsel %vm266, %v1575, 0
    %1579 = vmatprep.subr.bf16.mxu0 0
    %1580 = vmatpush1.bf16.msra.mxu0 %v1132
    %1581 = vmatprep.subr.bf16.mxu0 0
    %1582 = vmatpush1.bf16.msra.mxu0 %v1133
    %1583 = vmatprep.subr.bf16.mxu0 0
    %1584 = vmatpush1.bf16.msra.mxu0 0
    %1585 = vmatprep.subr.bf16.mxu0 0
    %1586 = vmatpush1.bf16.msra.mxu0 0
    %1587 = vmatprep.subr.bf16.mxu0 0
    %1588 = vmatpush1.bf16.msra.mxu0 0
    %1589 = vmatprep.subr.bf16.mxu0 0
    %1590 = vmatpush1.bf16.msra.mxu0 0
    %1591 = vmatprep.subr.bf16.mxu0 0
    %1592 = vmatpush1.bf16.msra.mxu0 0
    %1593 = vmatprep.subr.bf16.mxu0 0
    %1594 = vmatpush1.bf16.msra.mxu0 0
    %1595 = vmatprep.subr.bf16.mxu0 0
    %1596 = vmatpush1.bf16.msra.mxu0 0
    %1597 = vmatprep.subr.bf16.mxu0 0
    %1598 = vmatpush1.bf16.msra.mxu0 0
    %1599 = vmatprep.subr.bf16.mxu0 0
    %1600 = vmatpush1.bf16.msra.mxu0 0
    %1601 = vmatprep.subr.bf16.mxu0 0
    %1602 = vmatpush1.bf16.msra.mxu0 0
    %1603 = vmatprep.subr.bf16.mxu0 0
    %1604 = vmatpush1.bf16.msra.mxu0 0
    %1605 = vmatprep.subr.bf16.mxu0 0
    %1606 = vmatpush1.bf16.msra.mxu0 0
    %1607 = vmatprep.subr.bf16.mxu0 0
    %1608 = vmatpush1.bf16.msra.mxu0 0
    %1609 = vmatprep.subr.bf16.mxu0 0
    %1610 = vmatpush1.bf16.msra.mxu0 0
    %1611 = vmatprep.mubr.bf16.mxu0 0
    %1612 = vmatmul.mubr.bf16.gmra.mrb[0].mxu0 %v1577
    %v1613 = vpop.f32.mrb[0].mxu0
    %v1614 = vadd.f32 0.0, %v1613
    %v1615 = vpop.f32.mrb[0].mxu0
    %v1616 = vpop.f32.mrb[0].mxu0
    %v1617 = vpop.f32.mrb[0].mxu0
    %1618 = vdwg.mxu0
    %v1619 = vadd.f32 %v1573, %v1614
    %v1620 = vxor.u32 %v1619, 2147483648
    %v1621 = vmul.f32 %v1620, 1.442695
    %v1622 = vpow.pop %v1621
    %v1623 = vadd.f32 %v1622, 1.0
    %v1624 = vrcp.pop %v1623
    %v1625 = vmul.f32 1.0, %v1624
    %v1626 = vtanh.pop %v1619
    %v1627 = vld [vmem:[#allocation4] sm:$0xff]
    %1629 = vrot.lane.b32.xlu0 %v1627, 32
    %v1630 = vpop.permute.xlu0 %1629
    %v1632 = vmul.f32 %v1625, %v1630
    %1634 = vrot.lane.b32.xlu0 %v1626, 64
    %v1635 = vpop.permute.xlu0 %1634
    %v1637 = vmul.f32 %v1625, %v1635
    %1639 = vrot.lane.b32.xlu0 %v1637, 32
    %v1640 = vpop.permute.xlu0 %1639
    %v1642 = vadd.f32 %v1632, %v1640
    %v1643 = vtanh.pop %v1642
    %1645 = vrot.lane.b32.xlu0 %v1643, 64
    %v1646 = vpop.permute.xlu0 %1645
    %v1648 = vmul.f32 %v1625, %v1646
    %1650 = vrot.lane.b32.xlu0 %v1642, 96
    %v1651 = vpop.permute.xlu0 %1650
    %1653 = vst.msk [vmem:[#allocation4] sm:$0xff] %vm266, %v1651
    %1655 = vrot.lane.b32.xlu0 %v1648, 32
    %v1656 = vpop.permute.xlu0 %1655
    %1658 = vst.msk [vmem:[#allocation3] sm:$0xff] %vm266, %v1656
    %s1659 = scalar_lea.vmem [#allocation6], 16
    %1660 = vst.msk [vmem:[%s1659] sm:$0xff] %vm266, %v1656
    %v1661 = vld [vmem:[%s368] sm:$0xff]
    %v1662 = vld [vmem:[#allocation3] sm:$0xff]
    %v1663 = vpack.c.bf16 %v1662, %v1662
    %v1665 = vsel %vm266, %v1663, 0
    %1667 = vmatprep.subr.bf16.mxu0 0
    %1668 = vmatpush1.bf16.msra.mxu0 %v1132
    %1669 = vmatprep.subr.bf16.mxu0 0
    %1670 = vmatpush1.bf16.msra.mxu0 %v1133
    %1671 = vmatprep.subr.bf16.mxu0 0
    %1672 = vmatpush1.bf16.msra.mxu0 0
    %1673 = vmatprep.subr.bf16.mxu0 0
    %1674 = vmatpush1.bf16.msra.mxu0 0
    %1675 = vmatprep.subr.bf16.mxu0 0
    %1676 = vmatpush1.bf16.msra.mxu0 0
    %1677 = vmatprep.subr.bf16.mxu0 0
    %1678 = vmatpush1.bf16.msra.mxu0 0
    %1679 = vmatprep.subr.bf16.mxu0 0
    %1680 = vmatpush1.bf16.msra.mxu0 0
    %1681 = vmatprep.subr.bf16.mxu0 0
    %1682 = vmatpush1.bf16.msra.mxu0 0
    %1683 = vmatprep.subr.bf16.mxu0 0
    %1684 = vmatpush1.bf16.msra.mxu0 0
    %1685 = vmatprep.subr.bf16.mxu0 0
    %1686 = vmatpush1.bf16.msra.mxu0 0
    %1687 = vmatprep.subr.bf16.mxu0 0
    %1688 = vmatpush1.bf16.msra.mxu0 0
    %1689 = vmatprep.subr.bf16.mxu0 0
    %1690 = vmatpush1.bf16.msra.mxu0 0
    %1691 = vmatprep.subr.bf16.mxu0 0
    %1692 = vmatpush1.bf16.msra.mxu0 0
    %1693 = vmatprep.subr.bf16.mxu0 0
    %1694 = vmatpush1.bf16.msra.mxu0 0
    %1695 = vmatprep.subr.bf16.mxu0 0
    %1696 = vmatpush1.bf16.msra.mxu0 0
    %1697 = vmatprep.subr.bf16.mxu0 0
    %1698 = vmatpush1.bf16.msra.mxu0 0
    %1699 = vmatprep.mubr.bf16.mxu0 0
    %1700 = vmatmul.mubr.bf16.gmra.mrb[0].mxu0 %v1665
    %v1701 = vpop.f32.mrb[0].mxu0
    %v1702 = vadd.f32 0.0, %v1701
    %v1703 = vpop.f32.mrb[0].mxu0
    %v1704 = vpop.f32.mrb[0].mxu0
    %v1705 = vpop.f32.mrb[0].mxu0
    %1706 = vdwg.mxu0
    %v1707 = vadd.f32 %v1661, %v1702
    %v1708 = vxor.u32 %v1707, 2147483648
    %v1709 = vmul.f32 %v1708, 1.442695
    %v1710 = vpow.pop %v1709
    %v1711 = vadd.f32 %v1710, 1.0
    %v1712 = vrcp.pop %v1711
    %v1713 = vmul.f32 1.0, %v1712
    %v1714 = vtanh.pop %v1707
    %v1715 = vld [vmem:[#allocation4] sm:$0xff]
    %1717 = vrot.lane.b32.xlu0 %v1715, 32
    %v1718 = vpop.permute.xlu0 %1717
    %v1720 = vmul.f32 %v1713, %v1718
    %1722 = vrot.lane.b32.xlu0 %v1714, 64
    %v1723 = vpop.permute.xlu0 %1722
    %v1725 = vmul.f32 %v1713, %v1723
    %1727 = vrot.lane.b32.xlu0 %v1725, 32
    %v1728 = vpop.permute.xlu0 %1727
    %v1730 = vadd.f32 %v1720, %v1728
    %v1731 = vtanh.pop %v1730
    %1733 = vrot.lane.b32.xlu0 %v1731, 64
    %v1734 = vpop.permute.xlu0 %1733
    %v1736 = vmul.f32 %v1713, %v1734
    %1738 = vrot.lane.b32.xlu0 %v1730, 96
    %v1739 = vpop.permute.xlu0 %1738
    %1741 = vst.msk [vmem:[#allocation4] sm:$0xff] %vm266, %v1739
    %1743 = vrot.lane.b32.xlu0 %v1736, 32
    %v1744 = vpop.permute.xlu0 %1743
    %1746 = vst.msk [vmem:[#allocation3] sm:$0xff] %vm266, %v1744
    %s1747 = scalar_lea.vmem [#allocation6], 8
    %1748 = vst.msk [vmem:[%s1747] sm:$0xff] %vm266, %v1744
    %v1749 = vld [vmem:[#allocation2] sm:$0xff]
    %v1750 = vld [vmem:[#allocation3] sm:$0xff]
    %v1751 = vpack.c.bf16 %v1750, %v1750
    %v1753 = vsel %vm266, %v1751, 0
    %1755 = vmatprep.subr.bf16.mxu0 0
    %1756 = vmatpush1.bf16.msra.mxu0 %v1132
    %1757 = vmatprep.subr.bf16.mxu0 0
    %1758 = vmatpush1.bf16.msra.mxu0 %v1133
    %1759 = vmatprep.subr.bf16.mxu0 0
    %1760 = vmatpush1.bf16.msra.mxu0 0
    %1761 = vmatprep.subr.bf16.mxu0 0
    %1762 = vmatpush1.bf16.msra.mxu0 0
    %1763 = vmatprep.subr.bf16.mxu0 0
    %1764 = vmatpush1.bf16.msra.mxu0 0
    %1765 = vmatprep.subr.bf16.mxu0 0
    %1766 = vmatpush1.bf16.msra.mxu0 0
    %1767 = vmatprep.subr.bf16.mxu0 0
    %1768 = vmatpush1.bf16.msra.mxu0 0
    %1769 = vmatprep.subr.bf16.mxu0 0
    %1770 = vmatpush1.bf16.msra.mxu0 0
    %1771 = vmatprep.subr.bf16.mxu0 0
    %1772 = vmatpush1.bf16.msra.mxu0 0
    %1773 = vmatprep.subr.bf16.mxu0 0
    %1774 = vmatpush1.bf16.msra.mxu0 0
    %1775 = vmatprep.subr.bf16.mxu0 0
    %1776 = vmatpush1.bf16.msra.mxu0 0
    %1777 = vmatprep.subr.bf16.mxu0 0
    %1778 = vmatpush1.bf16.msra.mxu0 0
    %1779 = vmatprep.subr.bf16.mxu0 0
    %1780 = vmatpush1.bf16.msra.mxu0 0
    %1781 = vmatprep.subr.bf16.mxu0 0
    %1782 = vmatpush1.bf16.msra.mxu0 0
    %1783 = vmatprep.subr.bf16.mxu0 0
    %1784 = vmatpush1.bf16.msra.mxu0 0
    %1785 = vmatprep.subr.bf16.mxu0 0
    %1786 = vmatpush1.bf16.msra.mxu0 0
    %1787 = vmatprep.mubr.bf16.mxu0 0
    %1788 = vmatmul.mubr.bf16.gmra.mrb[0].mxu0 %v1753
    %v1789 = vpop.f32.mrb[0].mxu0
    %v1790 = vadd.f32 0.0, %v1789
    %v1791 = vpop.f32.mrb[0].mxu0
    %v1792 = vpop.f32.mrb[0].mxu0
    %v1793 = vpop.f32.mrb[0].mxu0
    %1794 = vdwg.mxu0
    %v1795 = vadd.f32 %v1749, %v1790
    %v1796 = vxor.u32 %v1795, 2147483648
    %v1797 = vmul.f32 %v1796, 1.442695
    %v1798 = vpow.pop %v1797
    %v1799 = vadd.f32 %v1798, 1.0
    %v1800 = vrcp.pop %v1799
    %v1801 = vmul.f32 1.0, %v1800
    %v1802 = vtanh.pop %v1795
    %v1803 = vld [vmem:[#allocation4] sm:$0xff]
    %1805 = vrot.lane.b32.xlu0 %v1803, 32
    %v1806 = vpop.permute.xlu0 %1805
    %v1808 = vmul.f32 %v1801, %v1806
    %1810 = vrot.lane.b32.xlu0 %v1802, 64
    %v1811 = vpop.permute.xlu0 %1810
    %v1813 = vmul.f32 %v1801, %v1811
    %1815 = vrot.lane.b32.xlu0 %v1813, 32
    %v1816 = vpop.permute.xlu0 %1815
    %v1818 = vadd.f32 %v1808, %v1816
    %v1819 = vtanh.pop %v1818
    %1821 = vrot.lane.b32.xlu0 %v1819, 64
    %v1822 = vpop.permute.xlu0 %1821
    %v1824 = vmul.f32 %v1801, %v1822
    %1826 = vrot.lane.b32.xlu0 %v1818, 96
    %v1827 = vpop.permute.xlu0 %1826
    %1829 = vst.msk [vmem:[#allocation4] sm:$0xff] %vm266, %v1827
    %1831 = vrot.lane.b32.xlu0 %v1824, 32
    %v1832 = vpop.permute.xlu0 %1831
    %1834 = vst.msk [vmem:[#allocation3] sm:$0xff] %vm266, %v1832
    %1835 = vst.msk [vmem:[#allocation6] sm:$0xff] %vm266, %v1832
    %v1836 = vld [vmem:[#allocation5] sm:$0xff]
    %v1837 = vld [vmem:[#allocation5 + $0x8] sm:$0xff]
    %v1838 = vld [vmem:[#allocation5 + $0x10] sm:$0xff]
    %v1839 = vld [vmem:[#allocation5 + $0x18] sm:$0xff]
    %v1840 = vld [vmem:[#allocation5 + $0x20] sm:$0xff]
    %v1841 = vld [vmem:[#allocation5 + $0x28] sm:$0xff]
    %v1842 = vld [vmem:[#allocation5 + $0x30] sm:$0xff]
    %v1843 = vld [vmem:[#allocation5 + $0x38] sm:$0xff]
    %v1844 = vpack.c.bf16 %v1837, %v1836
    %v1845 = vpack.c.bf16 %v1839, %v1838
    %v1846 = vpack.c.bf16 %v1841, %v1840
    %v1847 = vpack.c.bf16 %v1843, %v1842
    %v1848 = vld [vmem:[%s7] sm:$0xf]
    %v1849 = vld [vmem:[%s7 + $0x4] sm:$0xf]
    %v1850 = vld [vmem:[%s7 + $0x8] sm:$0xf]
    %v1851 = vld [vmem:[%s7 + $0xc] sm:$0xf]
    %v1852 = vld [vmem:[#allocation6] sm:$0xff]
    %v1853 = vld [vmem:[#allocation6 + $0x8] sm:$0xff]
    %v1854 = vld [vmem:[#allocation6 + $0x10] sm:$0xff]
    %v1855 = vld [vmem:[#allocation6 + $0x18] sm:$0xff]
    %v1856 = vld [vmem:[#allocation6 + $0x20] sm:$0xff]
    %v1857 = vld [vmem:[#allocation6 + $0x28] sm:$0xff]
    %v1858 = vld [vmem:[#allocation6 + $0x30] sm:$0xff]
    %v1859 = vld [vmem:[#allocation6 + $0x38] sm:$0xff]
    %v1860 = vpack.c.bf16 %v1853, %v1852
    %v1861 = vpack.c.bf16 %v1855, %v1854
    %v1862 = vpack.c.bf16 %v1857, %v1856
    %v1863 = vpack.c.bf16 %v1859, %v1858
    %v1864 = vld [vmem:[%s8] sm:$0xf]
    %v1865 = vld [vmem:[%s8 + $0x4] sm:$0xf]
    %v1866 = vld [vmem:[%s8 + $0x8] sm:$0xf]
    %v1867 = vld [vmem:[%s8 + $0xc] sm:$0xf]
    %v1872 = vunpack.c.l.b16 %v1864
    %v1873 = vunpack.c.l.b16 %v1865
    %v1874 = vunpack.c.l.b16 %v1866
    %v1875 = vunpack.c.l.b16 %v1867
    %v1876 = vpack.c.b16 %v1873, %v1872
    %v1877 = vpack.c.b16 %v1875, %v1874
    %v1881 = vsel %vm266, %v1860, 0
    %v1884 = vsel %vm266, %v1861, 0
    %v1887 = vsel %vm266, %v1862, 0
    %v1890 = vsel %vm266, %v1863, 0
    %1892 = vmatprep.subr.bf16.mxu0 0
    %1893 = vmatpush1.bf16.msra.mxu0 %v1876
    %1894 = vmatprep.subr.bf16.mxu0 0
    %1895 = vmatpush1.bf16.msra.mxu0 %v1877
    %1896 = vmatprep.subr.bf16.mxu0 0
    %1897 = vmatpush1.bf16.msra.mxu0 0
    %1898 = vmatprep.subr.bf16.mxu0 0
    %1899 = vmatpush1.bf16.msra.mxu0 0
    %1900 = vmatprep.subr.bf16.mxu0 0
    %1901 = vmatpush1.bf16.msra.mxu0 0
    %1902 = vmatprep.subr.bf16.mxu0 0
    %1903 = vmatpush1.bf16.msra.mxu0 0
    %1904 = vmatprep.subr.bf16.mxu0 0
    %1905 = vmatpush1.bf16.msra.mxu0 0
    %1906 = vmatprep.subr.bf16.mxu0 0
    %1907 = vmatpush1.bf16.msra.mxu0 0
    %1908 = vmatprep.subr.bf16.mxu0 0
    %1909 = vmatpush1.bf16.msra.mxu0 0
    %1910 = vmatprep.subr.bf16.mxu0 0
    %1911 = vmatpush1.bf16.msra.mxu0 0
    %1912 = vmatprep.subr.bf16.mxu0 0
    %1913 = vmatpush1.bf16.msra.mxu0 0
    %1914 = vmatprep.subr.bf16.mxu0 0
    %1915 = vmatpush1.bf16.msra.mxu0 0
    %1916 = vmatprep.subr.bf16.mxu0 0
    %1917 = vmatpush1.bf16.msra.mxu0 0
    %1918 = vmatprep.subr.bf16.mxu0 0
    %1919 = vmatpush1.bf16.msra.mxu0 0
    %1920 = vmatprep.subr.bf16.mxu0 0
    %1921 = vmatpush1.bf16.msra.mxu0 0
    %1922 = vmatprep.subr.bf16.mxu0 0
    %1923 = vmatpush1.bf16.msra.mxu0 0
    %1924 = vmatprep.mubr.bf16.mxu0 0
    %1925 = vmatmul.mubr.bf16.gmra.mrb[0].mxu0 %v1881
    %v1926 = vpop.f32.mrb[0].mxu0
    %v1927 = vadd.f32 0.0, %v1926
    %v1928 = vpop.f32.mrb[0].mxu0
    %v1929 = vpop.f32.mrb[0].mxu0
    %v1930 = vadd.f32 0.0, %v1929
    %v1931 = vpop.f32.mrb[0].mxu0
    %1932 = vmatprep.mubr.bf16.mxu0 0
    %1933 = vmatmul.mubr.bf16.gmra.mrb[0].mxu0 %v1884
    %v1934 = vpop.f32.mrb[0].mxu0
    %v1935 = vadd.f32 0.0, %v1934
    %v1936 = vpop.f32.mrb[0].mxu0
    %v1937 = vpop.f32.mrb[0].mxu0
    %v1938 = vadd.f32 0.0, %v1937
    %v1939 = vpop.f32.mrb[0].mxu0
    %1940 = vmatprep.mubr.bf16.mxu0 0
    %1941 = vmatmul.mubr.bf16.gmra.mrb[0].mxu0 %v1887
    %v1942 = vpop.f32.mrb[0].mxu0
    %v1943 = vadd.f32 0.0, %v1942
    %v1944 = vpop.f32.mrb[0].mxu0
    %v1945 = vpop.f32.mrb[0].mxu0
    %v1946 = vadd.f32 0.0, %v1945
    %v1947 = vpop.f32.mrb[0].mxu0
    %1948 = vmatprep.mubr.bf16.mxu0 0
    %1949 = vmatmul.mubr.bf16.gmra.mrb[0].mxu0 %v1890
    %v1950 = vpop.f32.mrb[0].mxu0
    %v1951 = vadd.f32 0.0, %v1950
    %v1952 = vpop.f32.mrb[0].mxu0
    %v1953 = vpop.f32.mrb[0].mxu0
    %v1954 = vadd.f32 0.0, %v1953
    %v1955 = vpop.f32.mrb[0].mxu0
    %1956 = vdwg.mxu0
    %v1961 = vunpack.c.l.b16 %v1848
    %v1962 = vunpack.c.l.b16 %v1849
    %v1963 = vunpack.c.l.b16 %v1850
    %v1964 = vunpack.c.l.b16 %v1851
    %v1965 = vpack.c.b16 %v1962, %v1961
    %v1966 = vpack.c.b16 %v1964, %v1963
    %v1970 = vsel %vm266, %v1844, 0
    %v1973 = vsel %vm266, %v1845, 0
    %v1976 = vsel %vm266, %v1846, 0
    %v1979 = vsel %vm266, %v1847, 0
    %1981 = vmatprep.subr.bf16.mxu0 0
    %1982 = vmatpush1.bf16.msra.mxu0 %v1965
    %1983 = vmatprep.subr.bf16.mxu0 0
    %1984 = vmatpush1.bf16.msra.mxu0 %v1966
    %1985 = vmatprep.subr.bf16.mxu0 0
    %1986 = vmatpush1.bf16.msra.mxu0 0
    %1987 = vmatprep.subr.bf16.mxu0 0
    %1988 = vmatpush1.bf16.msra.mxu0 0
    %1989 = vmatprep.subr.bf16.mxu0 0
    %1990 = vmatpush1.bf16.msra.mxu0 0
    %1991 = vmatprep.subr.bf16.mxu0 0
    %1992 = vmatpush1.bf16.msra.mxu0 0
    %1993 = vmatprep.subr.bf16.mxu0 0
    %1994 = vmatpush1.bf16.msra.mxu0 0
    %1995 = vmatprep.subr.bf16.mxu0 0
    %1996 = vmatpush1.bf16.msra.mxu0 0
    %1997 = vmatprep.subr.bf16.mxu0 0
    %1998 = vmatpush1.bf16.msra.mxu0 0
    %1999 = vmatprep.subr.bf16.mxu0 0
    %2000 = vmatpush1.bf16.msra.mxu0 0
    %2001 = vmatprep.subr.bf16.mxu0 0
    %2002 = vmatpush1.bf16.msra.mxu0 0
    %2003 = vmatprep.subr.bf16.mxu0 0
    %2004 = vmatpush1.bf16.msra.mxu0 0
    %2005 = vmatprep.subr.bf16.mxu0 0
    %2006 = vmatpush1.bf16.msra.mxu0 0
    %2007 = vmatprep.subr.bf16.mxu0 0
    %2008 = vmatpush1.bf16.msra.mxu0 0
    %2009 = vmatprep.subr.bf16.mxu0 0
    %2010 = vmatpush1.bf16.msra.mxu0 0
    %2011 = vmatprep.subr.bf16.mxu0 0
    %2012 = vmatpush1.bf16.msra.mxu0 0
    %2013 = vmatprep.mubr.bf16.mxu0 0
    %2014 = vmatmul.mubr.bf16.gmra.mrb[0].mxu0 %v1970
    %v2015 = vpop.f32.mrb[0].mxu0
    %v2016 = vadd.f32 %v1927, %v2015
    %v2017 = vpop.f32.mrb[0].mxu0
    %v2018 = vpop.f32.mrb[0].mxu0
    %v2019 = vadd.f32 %v1930, %v2018
    %v2020 = vpop.f32.mrb[0].mxu0
    %2021 = vmatprep.mubr.bf16.mxu0 0
    %2022 = vmatmul.mubr.bf16.gmra.mrb[0].mxu0 %v1973
    %v2023 = vpop.f32.mrb[0].mxu0
    %v2024 = vadd.f32 %v1935, %v2023
    %v2025 = vpop.f32.mrb[0].mxu0
    %v2026 = vpop.f32.mrb[0].mxu0
    %v2027 = vadd.f32 %v1938, %v2026
    %v2028 = vpop.f32.mrb[0].mxu0
    %2029 = vmatprep.mubr.bf16.mxu0 0
    %2030 = vmatmul.mubr.bf16.gmra.mrb[0].mxu0 %v1976
    %v2031 = vpop.f32.mrb[0].mxu0
    %v2032 = vadd.f32 %v1943, %v2031
    %v2033 = vpop.f32.mrb[0].mxu0
    %v2034 = vpop.f32.mrb[0].mxu0
    %v2035 = vadd.f32 %v1946, %v2034
    %v2036 = vpop.f32.mrb[0].mxu0
    %2037 = vmatprep.mubr.bf16.mxu0 0
    %2038 = vmatmul.mubr.bf16.gmra.mrb[0].mxu0 %v1979
    %v2039 = vpop.f32.mrb[0].mxu0
    %v2040 = vadd.f32 %v1951, %v2039
    %v2041 = vpop.f32.mrb[0].mxu0
    %v2042 = vpop.f32.mrb[0].mxu0
    %v2043 = vadd.f32 %v1954, %v2042
    %v2044 = vpop.f32.mrb[0].mxu0
    %2045 = vdwg.mxu0
    %v2046 = vld [vmem:[%s10] sm:$0x1]
    %v2048 = vlaneseq
    %v2049 = vshrl.u32 %v2048, 7
    %v2050 = vsub.s32 0, %v2049
    %v2051 = vrot.slane %v2046, %v2050
    %v2053 = vadd.f32 %v2016, %v2051
    %v2054 = vadd.f32 %v2019, %v2051
    %v2055 = vadd.f32 %v2024, %v2051
    %v2056 = vadd.f32 %v2027, %v2051
    %v2057 = vadd.f32 %v2032, %v2051
    %v2058 = vadd.f32 %v2035, %v2051
    %v2059 = vadd.f32 %v2040, %v2051
    %v2060 = vadd.f32 %v2043, %v2051
    %2061 = vst [vmem:[#allocation2] sm:$0xff] %v2053
    %2062 = vst [vmem:[#allocation2 + $0x8] sm:$0xff] %v2054
    %2063 = vst [vmem:[#allocation2 + $0x10] sm:$0xff] %v2055
    %2064 = vst [vmem:[#allocation2 + $0x18] sm:$0xff] %v2056
    %2065 = vst [vmem:[#allocation2 + $0x20] sm:$0xff] %v2057
    %2066 = vst [vmem:[#allocation2 + $0x28] sm:$0xff] %v2058
    %2067 = vst [vmem:[#allocation2 + $0x30] sm:$0xff] %v2059
    %2068 = vst [vmem:[#allocation2 + $0x38] sm:$0xff] %v2060
    %v2069 = vld [vmem:[%s9] sm:$0xf]
    %v2070 = vld [vmem:[%s9 + $0x4] sm:$0xf]
    %v2071 = vld [vmem:[%s9 + $0x8] sm:$0xf]
    %v2072 = vld [vmem:[%s9 + $0xc] sm:$0xf]
    %2073 = vst.msk [vmem:[#allocation3] sm:$0xff] %vm266, 0.0
    %2074 = vst.msk [vmem:[#allocation4] sm:$0xff] %vm266, 0.0
    %v2075 = vld [vmem:[#allocation2] sm:$0xff]
    %v2076 = vld [vmem:[#allocation3] sm:$0xff]
    %v2077 = vpack.c.bf16 %v2076, %v2076
    %v2082 = vunpack.c.l.b16 %v2069
    %v2083 = vunpack.c.l.b16 %v2070
    %v2084 = vunpack.c.l.b16 %v2071
    %v2085 = vunpack.c.l.b16 %v2072
    %v2086 = vpack.c.b16 %v2083, %v2082
    %v2087 = vpack.c.b16 %v2085, %v2084
    %v2091 = vsel %vm266, %v2077, 0
    %2093 = vmatprep.subr.bf16.mxu0 0
    %2094 = vmatpush1.bf16.msra.mxu0 %v2086
    %2095 = vmatprep.subr.bf16.mxu0 0
    %2096 = vmatpush1.bf16.msra.mxu0 %v2087
    %2097 = vmatprep.subr.bf16.mxu0 0
    %2098 = vmatpush1.bf16.msra.mxu0 0
    %2099 = vmatprep.subr.bf16.mxu0 0
    %2100 = vmatpush1.bf16.msra.mxu0 0
    %2101 = vmatprep.subr.bf16.mxu0 0
    %2102 = vmatpush1.bf16.msra.mxu0 0
    %2103 = vmatprep.subr.bf16.mxu0 0
    %2104 = vmatpush1.bf16.msra.mxu0 0
    %2105 = vmatprep.subr.bf16.mxu0 0
    %2106 = vmatpush1.bf16.msra.mxu0 0
    %2107 = vmatprep.subr.bf16.mxu0 0
    %2108 = vmatpush1.bf16.msra.mxu0 0
    %2109 = vmatprep.subr.bf16.mxu0 0
    %2110 = vmatpush1.bf16.msra.mxu0 0
    %2111 = vmatprep.subr.bf16.mxu0 0
    %2112 = vmatpush1.bf16.msra.mxu0 0
    %2113 = vmatprep.subr.bf16.mxu0 0
    %2114 = vmatpush1.bf16.msra.mxu0 0
    %2115 = vmatprep.subr.bf16.mxu0 0
    %2116 = vmatpush1.bf16.msra.mxu0 0
    %2117 = vmatprep.subr.bf16.mxu0 0
    %2118 = vmatpush1.bf16.msra.mxu0 0
    %2119 = vmatprep.subr.bf16.mxu0 0
    %2120 = vmatpush1.bf16.msra.mxu0 0
    %2121 = vmatprep.subr.bf16.mxu0 0
    %2122 = vmatpush1.bf16.msra.mxu0 0
    %2123 = vmatprep.subr.bf16.mxu0 0
    %2124 = vmatpush1.bf16.msra.mxu0 0
    %2125 = vmatprep.mubr.bf16.mxu0 0
    %2126 = vmatmul.mubr.bf16.gmra.mrb[0].mxu0 %v2091
    %v2127 = vpop.f32.mrb[0].mxu0
    %v2128 = vadd.f32 0.0, %v2127
    %v2129 = vpop.f32.mrb[0].mxu0
    %v2130 = vpop.f32.mrb[0].mxu0
    %v2131 = vpop.f32.mrb[0].mxu0
    %2132 = vdwg.mxu0
    %v2133 = vadd.f32 %v2075, %v2128
    %v2134 = vxor.u32 %v2133, 2147483648
    %v2135 = vmul.f32 %v2134, 1.442695
    %v2136 = vpow.pop %v2135
    %v2137 = vadd.f32 %v2136, 1.0
    %v2138 = vrcp.pop %v2137
    %v2139 = vmul.f32 1.0, %v2138
    %v2140 = vtanh.pop %v2133
    %v2141 = vld [vmem:[#allocation4] sm:$0xff]
    %2143 = vrot.lane.b32.xlu0 %v2141, 32
    %v2144 = vpop.permute.xlu0 %2143
    %v2146 = vmul.f32 %v2139, %v2144
    %2148 = vrot.lane.b32.xlu0 %v2140, 64
    %v2149 = vpop.permute.xlu0 %2148
    %v2151 = vmul.f32 %v2139, %v2149
    %2153 = vrot.lane.b32.xlu0 %v2151, 32
    %v2154 = vpop.permute.xlu0 %2153
    %v2156 = vadd.f32 %v2146, %v2154
    %v2157 = vtanh.pop %v2156
    %2159 = vrot.lane.b32.xlu0 %v2157, 64
    %v2160 = vpop.permute.xlu0 %2159
    %v2162 = vmul.f32 %v2139, %v2160
    %2164 = vrot.lane.b32.xlu0 %v2156, 96
    %v2165 = vpop.permute.xlu0 %2164
    %2167 = vst.msk [vmem:[#allocation4] sm:$0xff] %vm266, %v2165
    %2169 = vrot.lane.b32.xlu0 %v2162, 32
    %v2170 = vpop.permute.xlu0 %2169
    %2172 = vst.msk [vmem:[#allocation3] sm:$0xff] %vm266, %v2170
    %v2173 = vld [vmem:[%s368] sm:$0xff]
    %v2174 = vld [vmem:[#allocation3] sm:$0xff]
    %v2175 = vpack.c.bf16 %v2174, %v2174
    %v2177 = vsel %vm266, %v2175, 0
    %2179 = vmatprep.subr.bf16.mxu0 0
    %2180 = vmatpush1.bf16.msra.mxu0 %v2086
    %2181 = vmatprep.subr.bf16.mxu0 0
    %2182 = vmatpush1.bf16.msra.mxu0 %v2087
    %2183 = vmatprep.subr.bf16.mxu0 0
    %2184 = vmatpush1.bf16.msra.mxu0 0
    %2185 = vmatprep.subr.bf16.mxu0 0
    %2186 = vmatpush1.bf16.msra.mxu0 0
    %2187 = vmatprep.subr.bf16.mxu0 0
    %2188 = vmatpush1.bf16.msra.mxu0 0
    %2189 = vmatprep.subr.bf16.mxu0 0
    %2190 = vmatpush1.bf16.msra.mxu0 0
    %2191 = vmatprep.subr.bf16.mxu0 0
    %2192 = vmatpush1.bf16.msra.mxu0 0
    %2193 = vmatprep.subr.bf16.mxu0 0
    %2194 = vmatpush1.bf16.msra.mxu0 0
    %2195 = vmatprep.subr.bf16.mxu0 0
    %2196 = vmatpush1.bf16.msra.mxu0 0
    %2197 = vmatprep.subr.bf16.mxu0 0
    %2198 = vmatpush1.bf16.msra.mxu0 0
    %2199 = vmatprep.subr.bf16.mxu0 0
    %2200 = vmatpush1.bf16.msra.mxu0 0
    %2201 = vmatprep.subr.bf16.mxu0 0
    %2202 = vmatpush1.bf16.msra.mxu0 0
    %2203 = vmatprep.subr.bf16.mxu0 0
    %2204 = vmatpush1.bf16.msra.mxu0 0
    %2205 = vmatprep.subr.bf16.mxu0 0
    %2206 = vmatpush1.bf16.msra.mxu0 0
    %2207 = vmatprep.subr.bf16.mxu0 0
    %2208 = vmatpush1.bf16.msra.mxu0 0
    %2209 = vmatprep.subr.bf16.mxu0 0
    %2210 = vmatpush1.bf16.msra.mxu0 0
    %2211 = vmatprep.mubr.bf16.mxu0 0
    %2212 = vmatmul.mubr.bf16.gmra.mrb[0].mxu0 %v2177
    %v2213 = vpop.f32.mrb[0].mxu0
    %v2214 = vadd.f32 0.0, %v2213
    %v2215 = vpop.f32.mrb[0].mxu0
    %v2216 = vpop.f32.mrb[0].mxu0
    %v2217 = vpop.f32.mrb[0].mxu0
    %2218 = vdwg.mxu0
    %v2219 = vadd.f32 %v2173, %v2214
    %v2220 = vxor.u32 %v2219, 2147483648
    %v2221 = vmul.f32 %v2220, 1.442695
    %v2222 = vpow.pop %v2221
    %v2223 = vadd.f32 %v2222, 1.0
    %v2224 = vrcp.pop %v2223
    %v2225 = vmul.f32 1.0, %v2224
    %v2226 = vtanh.pop %v2219
    %v2227 = vld [vmem:[#allocation4] sm:$0xff]
    %2229 = vrot.lane.b32.xlu0 %v2227, 32
    %v2230 = vpop.permute.xlu0 %2229
    %v2232 = vmul.f32 %v2225, %v2230
    %2234 = vrot.lane.b32.xlu0 %v2226, 64
    %v2235 = vpop.permute.xlu0 %2234
    %v2237 = vmul.f32 %v2225, %v2235
    %2239 = vrot.lane.b32.xlu0 %v2237, 32
    %v2240 = vpop.permute.xlu0 %2239
    %v2242 = vadd.f32 %v2232, %v2240
    %v2243 = vtanh.pop %v2242
    %2245 = vrot.lane.b32.xlu0 %v2243, 64
    %v2246 = vpop.permute.xlu0 %2245
    %v2248 = vmul.f32 %v2225, %v2246
    %2250 = vrot.lane.b32.xlu0 %v2242, 96
    %v2251 = vpop.permute.xlu0 %2250
    %2253 = vst.msk [vmem:[#allocation4] sm:$0xff] %vm266, %v2251
    %2255 = vrot.lane.b32.xlu0 %v2248, 32
    %v2256 = vpop.permute.xlu0 %2255
    %2258 = vst.msk [vmem:[#allocation3] sm:$0xff] %vm266, %v2256
    %v2259 = vld [vmem:[%s457] sm:$0xff]
    %v2260 = vld [vmem:[#allocation3] sm:$0xff]
    %v2261 = vpack.c.bf16 %v2260, %v2260
    %v2263 = vsel %vm266, %v2261, 0
    %2265 = vmatprep.subr.bf16.mxu0 0
    %2266 = vmatpush1.bf16.msra.mxu0 %v2086
    %2267 = vmatprep.subr.bf16.mxu0 0
    %2268 = vmatpush1.bf16.msra.mxu0 %v2087
    %2269 = vmatprep.subr.bf16.mxu0 0
    %2270 = vmatpush1.bf16.msra.mxu0 0
    %2271 = vmatprep.subr.bf16.mxu0 0
    %2272 = vmatpush1.bf16.msra.mxu0 0
    %2273 = vmatprep.subr.bf16.mxu0 0
    %2274 = vmatpush1.bf16.msra.mxu0 0
    %2275 = vmatprep.subr.bf16.mxu0 0
    %2276 = vmatpush1.bf16.msra.mxu0 0
    %2277 = vmatprep.subr.bf16.mxu0 0
    %2278 = vmatpush1.bf16.msra.mxu0 0
    %2279 = vmatprep.subr.bf16.mxu0 0
    %2280 = vmatpush1.bf16.msra.mxu0 0
    %2281 = vmatprep.subr.bf16.mxu0 0
    %2282 = vmatpush1.bf16.msra.mxu0 0
    %2283 = vmatprep.subr.bf16.mxu0 0
    %2284 = vmatpush1.bf16.msra.mxu0 0
    %2285 = vmatprep.subr.bf16.mxu0 0
    %2286 = vmatpush1.bf16.msra.mxu0 0
    %2287 = vmatprep.subr.bf16.mxu0 0
    %2288 = vmatpush1.bf16.msra.mxu0 0
    %2289 = vmatprep.subr.bf16.mxu0 0
    %2290 = vmatpush1.bf16.msra.mxu0 0
    %2291 = vmatprep.subr.bf16.mxu0 0
    %2292 = vmatpush1.bf16.msra.mxu0 0
    %2293 = vmatprep.subr.bf16.mxu0 0
    %2294 = vmatpush1.bf16.msra.mxu0 0
    %2295 = vmatprep.subr.bf16.mxu0 0
    %2296 = vmatpush1.bf16.msra.mxu0 0
    %2297 = vmatprep.mubr.bf16.mxu0 0
    %2298 = vmatmul.mubr.bf16.gmra.mrb[0].mxu0 %v2263
    %v2299 = vpop.f32.mrb[0].mxu0
    %v2300 = vadd.f32 0.0, %v2299
    %v2301 = vpop.f32.mrb[0].mxu0
    %v2302 = vpop.f32.mrb[0].mxu0
    %v2303 = vpop.f32.mrb[0].mxu0
    %2304 = vdwg.mxu0
    %v2305 = vadd.f32 %v2259, %v2300
    %v2306 = vxor.u32 %v2305, 2147483648
    %v2307 = vmul.f32 %v2306, 1.442695
    %v2308 = vpow.pop %v2307
    %v2309 = vadd.f32 %v2308, 1.0
    %v2310 = vrcp.pop %v2309
    %v2311 = vmul.f32 1.0, %v2310
    %v2312 = vtanh.pop %v2305
    %v2313 = vld [vmem:[#allocation4] sm:$0xff]
    %2315 = vrot.lane.b32.xlu0 %v2313, 32
    %v2316 = vpop.permute.xlu0 %2315
    %v2318 = vmul.f32 %v2311, %v2316
    %2320 = vrot.lane.b32.xlu0 %v2312, 64
    %v2321 = vpop.permute.xlu0 %2320
    %v2323 = vmul.f32 %v2311, %v2321
    %2325 = vrot.lane.b32.xlu0 %v2323, 32
    %v2326 = vpop.permute.xlu0 %2325
    %v2328 = vadd.f32 %v2318, %v2326
    %v2329 = vtanh.pop %v2328
    %2331 = vrot.lane.b32.xlu0 %v2329, 64
    %v2332 = vpop.permute.xlu0 %2331
    %v2334 = vmul.f32 %v2311, %v2332
    %2336 = vrot.lane.b32.xlu0 %v2328, 96
    %v2337 = vpop.permute.xlu0 %2336
    %2339 = vst.msk [vmem:[#allocation4] sm:$0xff] %vm266, %v2337
    %2341 = vrot.lane.b32.xlu0 %v2334, 32
    %v2342 = vpop.permute.xlu0 %2341
    %2344 = vst.msk [vmem:[#allocation3] sm:$0xff] %vm266, %v2342
    %v2345 = vld [vmem:[%s546] sm:$0xff]
    %v2346 = vld [vmem:[#allocation3] sm:$0xff]
    %v2347 = vpack.c.bf16 %v2346, %v2346
    %v2349 = vsel %vm266, %v2347, 0
    %2351 = vmatprep.subr.bf16.mxu0 0
    %2352 = vmatpush1.bf16.msra.mxu0 %v2086
    %2353 = vmatprep.subr.bf16.mxu0 0
    %2354 = vmatpush1.bf16.msra.mxu0 %v2087
    %2355 = vmatprep.subr.bf16.mxu0 0
    %2356 = vmatpush1.bf16.msra.mxu0 0
    %2357 = vmatprep.subr.bf16.mxu0 0
    %2358 = vmatpush1.bf16.msra.mxu0 0
    %2359 = vmatprep.subr.bf16.mxu0 0
    %2360 = vmatpush1.bf16.msra.mxu0 0
    %2361 = vmatprep.subr.bf16.mxu0 0
    %2362 = vmatpush1.bf16.msra.mxu0 0
    %2363 = vmatprep.subr.bf16.mxu0 0
    %2364 = vmatpush1.bf16.msra.mxu0 0
    %2365 = vmatprep.subr.bf16.mxu0 0
    %2366 = vmatpush1.bf16.msra.mxu0 0
    %2367 = vmatprep.subr.bf16.mxu0 0
    %2368 = vmatpush1.bf16.msra.mxu0 0
    %2369 = vmatprep.subr.bf16.mxu0 0
    %2370 = vmatpush1.bf16.msra.mxu0 0
    %2371 = vmatprep.subr.bf16.mxu0 0
    %2372 = vmatpush1.bf16.msra.mxu0 0
    %2373 = vmatprep.subr.bf16.mxu0 0
    %2374 = vmatpush1.bf16.msra.mxu0 0
    %2375 = vmatprep.subr.bf16.mxu0 0
    %2376 = vmatpush1.bf16.msra.mxu0 0
    %2377 = vmatprep.subr.bf16.mxu0 0
    %2378 = vmatpush1.bf16.msra.mxu0 0
    %2379 = vmatprep.subr.bf16.mxu0 0
    %2380 = vmatpush1.bf16.msra.mxu0 0
    %2381 = vmatprep.subr.bf16.mxu0 0
    %2382 = vmatpush1.bf16.msra.mxu0 0
    %2383 = vmatprep.mubr.bf16.mxu0 0
    %2384 = vmatmul.mubr.bf16.gmra.mrb[0].mxu0 %v2349
    %v2385 = vpop.f32.mrb[0].mxu0
    %v2386 = vadd.f32 0.0, %v2385
    %v2387 = vpop.f32.mrb[0].mxu0
    %v2388 = vpop.f32.mrb[0].mxu0
    %v2389 = vpop.f32.mrb[0].mxu0
    %2390 = vdwg.mxu0
    %v2391 = vadd.f32 %v2345, %v2386
    %v2392 = vxor.u32 %v2391, 2147483648
    %v2393 = vmul.f32 %v2392, 1.442695
    %v2394 = vpow.pop %v2393
    %v2395 = vadd.f32 %v2394, 1.0
    %v2396 = vrcp.pop %v2395
    %v2397 = vmul.f32 1.0, %v2396
    %v2398 = vtanh.pop %v2391
    %v2399 = vld [vmem:[#allocation4] sm:$0xff]
    %2401 = vrot.lane.b32.xlu0 %v2399, 32
    %v2402 = vpop.permute.xlu0 %2401
    %v2404 = vmul.f32 %v2397, %v2402
    %2406 = vrot.lane.b32.xlu0 %v2398, 64
    %v2407 = vpop.permute.xlu0 %2406
    %v2409 = vmul.f32 %v2397, %v2407
    %2411 = vrot.lane.b32.xlu0 %v2409, 32
    %v2412 = vpop.permute.xlu0 %2411
    %v2414 = vadd.f32 %v2404, %v2412
    %v2415 = vtanh.pop %v2414
    %2417 = vrot.lane.b32.xlu0 %v2415, 64
    %v2418 = vpop.permute.xlu0 %2417
    %v2420 = vmul.f32 %v2397, %v2418
    %2422 = vrot.lane.b32.xlu0 %v2414, 96
    %v2423 = vpop.permute.xlu0 %2422
    %2425 = vst.msk [vmem:[#allocation4] sm:$0xff] %vm266, %v2423
    %2427 = vrot.lane.b32.xlu0 %v2420, 32
    %v2428 = vpop.permute.xlu0 %2427
    %2430 = vst.msk [vmem:[#allocation3] sm:$0xff] %vm266, %v2428
    %v2431 = vld [vmem:[%s635] sm:$0xff]
    %v2432 = vld [vmem:[#allocation3] sm:$0xff]
    %v2433 = vpack.c.bf16 %v2432, %v2432
    %v2435 = vsel %vm266, %v2433, 0
    %2437 = vmatprep.subr.bf16.mxu0 0
    %2438 = vmatpush1.bf16.msra.mxu0 %v2086
    %2439 = vmatprep.subr.bf16.mxu0 0
    %2440 = vmatpush1.bf16.msra.mxu0 %v2087
    %2441 = vmatprep.subr.bf16.mxu0 0
    %2442 = vmatpush1.bf16.msra.mxu0 0
    %2443 = vmatprep.subr.bf16.mxu0 0
    %2444 = vmatpush1.bf16.msra.mxu0 0
    %2445 = vmatprep.subr.bf16.mxu0 0
    %2446 = vmatpush1.bf16.msra.mxu0 0
    %2447 = vmatprep.subr.bf16.mxu0 0
    %2448 = vmatpush1.bf16.msra.mxu0 0
    %2449 = vmatprep.subr.bf16.mxu0 0
    %2450 = vmatpush1.bf16.msra.mxu0 0
    %2451 = vmatprep.subr.bf16.mxu0 0
    %2452 = vmatpush1.bf16.msra.mxu0 0
    %2453 = vmatprep.subr.bf16.mxu0 0
    %2454 = vmatpush1.bf16.msra.mxu0 0
    %2455 = vmatprep.subr.bf16.mxu0 0
    %2456 = vmatpush1.bf16.msra.mxu0 0
    %2457 = vmatprep.subr.bf16.mxu0 0
    %2458 = vmatpush1.bf16.msra.mxu0 0
    %2459 = vmatprep.subr.bf16.mxu0 0
    %2460 = vmatpush1.bf16.msra.mxu0 0
    %2461 = vmatprep.subr.bf16.mxu0 0
    %2462 = vmatpush1.bf16.msra.mxu0 0
    %2463 = vmatprep.subr.bf16.mxu0 0
    %2464 = vmatpush1.bf16.msra.mxu0 0
    %2465 = vmatprep.subr.bf16.mxu0 0
    %2466 = vmatpush1.bf16.msra.mxu0 0
    %2467 = vmatprep.subr.bf16.mxu0 0
    %2468 = vmatpush1.bf16.msra.mxu0 0
    %2469 = vmatprep.mubr.bf16.mxu0 0
    %2470 = vmatmul.mubr.bf16.gmra.mrb[0].mxu0 %v2435
    %v2471 = vpop.f32.mrb[0].mxu0
    %v2472 = vadd.f32 0.0, %v2471
    %v2473 = vpop.f32.mrb[0].mxu0
    %v2474 = vpop.f32.mrb[0].mxu0
    %v2475 = vpop.f32.mrb[0].mxu0
    %2476 = vdwg.mxu0
    %v2477 = vadd.f32 %v2431, %v2472
    %v2478 = vxor.u32 %v2477, 2147483648
    %v2479 = vmul.f32 %v2478, 1.442695
    %v2480 = vpow.pop %v2479
    %v2481 = vadd.f32 %v2480, 1.0
    %v2482 = vrcp.pop %v2481
    %v2483 = vmul.f32 1.0, %v2482
    %v2484 = vtanh.pop %v2477
    %v2485 = vld [vmem:[#allocation4] sm:$0xff]
    %2487 = vrot.lane.b32.xlu0 %v2485, 32
    %v2488 = vpop.permute.xlu0 %2487
    %v2490 = vmul.f32 %v2483, %v2488
    %2492 = vrot.lane.b32.xlu0 %v2484, 64
    %v2493 = vpop.permute.xlu0 %2492
    %v2495 = vmul.f32 %v2483, %v2493
    %2497 = vrot.lane.b32.xlu0 %v2495, 32
    %v2498 = vpop.permute.xlu0 %2497
    %v2500 = vadd.f32 %v2490, %v2498
    %v2501 = vtanh.pop %v2500
    %2503 = vrot.lane.b32.xlu0 %v2501, 64
    %v2504 = vpop.permute.xlu0 %2503
    %v2506 = vmul.f32 %v2483, %v2504
    %2508 = vrot.lane.b32.xlu0 %v2500, 96
    %v2509 = vpop.permute.xlu0 %2508
    %2511 = vst.msk [vmem:[#allocation4] sm:$0xff] %vm266, %v2509
    %2513 = vrot.lane.b32.xlu0 %v2506, 32
    %v2514 = vpop.permute.xlu0 %2513
    %2516 = vst.msk [vmem:[#allocation3] sm:$0xff] %vm266, %v2514
    %v2517 = vld [vmem:[%s724] sm:$0xff]
    %v2518 = vld [vmem:[#allocation3] sm:$0xff]
    %v2519 = vpack.c.bf16 %v2518, %v2518
    %v2521 = vsel %vm266, %v2519, 0
    %2523 = vmatprep.subr.bf16.mxu0 0
    %2524 = vmatpush1.bf16.msra.mxu0 %v2086
    %2525 = vmatprep.subr.bf16.mxu0 0
    %2526 = vmatpush1.bf16.msra.mxu0 %v2087
    %2527 = vmatprep.subr.bf16.mxu0 0
    %2528 = vmatpush1.bf16.msra.mxu0 0
    %2529 = vmatprep.subr.bf16.mxu0 0
    %2530 = vmatpush1.bf16.msra.mxu0 0
    %2531 = vmatprep.subr.bf16.mxu0 0
    %2532 = vmatpush1.bf16.msra.mxu0 0
    %2533 = vmatprep.subr.bf16.mxu0 0
    %2534 = vmatpush1.bf16.msra.mxu0 0
    %2535 = vmatprep.subr.bf16.mxu0 0
    %2536 = vmatpush1.bf16.msra.mxu0 0
    %2537 = vmatprep.subr.bf16.mxu0 0
    %2538 = vmatpush1.bf16.msra.mxu0 0
    %2539 = vmatprep.subr.bf16.mxu0 0
    %2540 = vmatpush1.bf16.msra.mxu0 0
    %2541 = vmatprep.subr.bf16.mxu0 0
    %2542 = vmatpush1.bf16.msra.mxu0 0
    %2543 = vmatprep.subr.bf16.mxu0 0
    %2544 = vmatpush1.bf16.msra.mxu0 0
    %2545 = vmatprep.subr.bf16.mxu0 0
    %2546 = vmatpush1.bf16.msra.mxu0 0
    %2547 = vmatprep.subr.bf16.mxu0 0
    %2548 = vmatpush1.bf16.msra.mxu0 0
    %2549 = vmatprep.subr.bf16.mxu0 0
    %2550 = vmatpush1.bf16.msra.mxu0 0
    %2551 = vmatprep.subr.bf16.mxu0 0
    %2552 = vmatpush1.bf16.msra.mxu0 0
    %2553 = vmatprep.subr.bf16.mxu0 0
    %2554 = vmatpush1.bf16.msra.mxu0 0
    %2555 = vmatprep.mubr.bf16.mxu0 0
    %2556 = vmatmul.mubr.bf16.gmra.mrb[0].mxu0 %v2521
    %v2557 = vpop.f32.mrb[0].mxu0
    %v2558 = vadd.f32 0.0, %v2557
    %v2559 = vpop.f32.mrb[0].mxu0
    %v2560 = vpop.f32.mrb[0].mxu0
    %v2561 = vpop.f32.mrb[0].mxu0
    %2562 = vdwg.mxu0
    %v2563 = vadd.f32 %v2517, %v2558
    %v2564 = vxor.u32 %v2563, 2147483648
    %v2565 = vmul.f32 %v2564, 1.442695
    %v2566 = vpow.pop %v2565
    %v2567 = vadd.f32 %v2566, 1.0
    %v2568 = vrcp.pop %v2567
    %v2569 = vmul.f32 1.0, %v2568
    %v2570 = vtanh.pop %v2563
    %v2571 = vld [vmem:[#allocation4] sm:$0xff]
    %2573 = vrot.lane.b32.xlu0 %v2571, 32
    %v2574 = vpop.permute.xlu0 %2573
    %v2576 = vmul.f32 %v2569, %v2574
    %2578 = vrot.lane.b32.xlu0 %v2570, 64
    %v2579 = vpop.permute.xlu0 %2578
    %v2581 = vmul.f32 %v2569, %v2579
    %2583 = vrot.lane.b32.xlu0 %v2581, 32
    %v2584 = vpop.permute.xlu0 %2583
    %v2586 = vadd.f32 %v2576, %v2584
    %v2587 = vtanh.pop %v2586
    %2589 = vrot.lane.b32.xlu0 %v2587, 64
    %v2590 = vpop.permute.xlu0 %2589
    %v2592 = vmul.f32 %v2569, %v2590
    %2594 = vrot.lane.b32.xlu0 %v2586, 96
    %v2595 = vpop.permute.xlu0 %2594
    %2597 = vst.msk [vmem:[#allocation4] sm:$0xff] %vm266, %v2595
    %2599 = vrot.lane.b32.xlu0 %v2592, 32
    %v2600 = vpop.permute.xlu0 %2599
    %2602 = vst.msk [vmem:[#allocation3] sm:$0xff] %vm266, %v2600
    %v2603 = vld [vmem:[%s813] sm:$0xff]
    %v2604 = vld [vmem:[#allocation3] sm:$0xff]
    %v2605 = vpack.c.bf16 %v2604, %v2604
    %v2607 = vsel %vm266, %v2605, 0
    %2609 = vmatprep.subr.bf16.mxu0 0
    %2610 = vmatpush1.bf16.msra.mxu0 %v2086
    %2611 = vmatprep.subr.bf16.mxu0 0
    %2612 = vmatpush1.bf16.msra.mxu0 %v2087
    %2613 = vmatprep.subr.bf16.mxu0 0
    %2614 = vmatpush1.bf16.msra.mxu0 0
    %2615 = vmatprep.subr.bf16.mxu0 0
    %2616 = vmatpush1.bf16.msra.mxu0 0
    %2617 = vmatprep.subr.bf16.mxu0 0
    %2618 = vmatpush1.bf16.msra.mxu0 0
    %2619 = vmatprep.subr.bf16.mxu0 0
    %2620 = vmatpush1.bf16.msra.mxu0 0
    %2621 = vmatprep.subr.bf16.mxu0 0
    %2622 = vmatpush1.bf16.msra.mxu0 0
    %2623 = vmatprep.subr.bf16.mxu0 0
    %2624 = vmatpush1.bf16.msra.mxu0 0
    %2625 = vmatprep.subr.bf16.mxu0 0
    %2626 = vmatpush1.bf16.msra.mxu0 0
    %2627 = vmatprep.subr.bf16.mxu0 0
    %2628 = vmatpush1.bf16.msra.mxu0 0
    %2629 = vmatprep.subr.bf16.mxu0 0
    %2630 = vmatpush1.bf16.msra.mxu0 0
    %2631 = vmatprep.subr.bf16.mxu0 0
    %2632 = vmatpush1.bf16.msra.mxu0 0
    %2633 = vmatprep.subr.bf16.mxu0 0
    %2634 = vmatpush1.bf16.msra.mxu0 0
    %2635 = vmatprep.subr.bf16.mxu0 0
    %2636 = vmatpush1.bf16.msra.mxu0 0
    %2637 = vmatprep.subr.bf16.mxu0 0
    %2638 = vmatpush1.bf16.msra.mxu0 0
    %2639 = vmatprep.subr.bf16.mxu0 0
    %2640 = vmatpush1.bf16.msra.mxu0 0
    %2641 = vmatprep.mubr.bf16.mxu0 0
    %2642 = vmatmul.mubr.bf16.gmra.mrb[0].mxu0 %v2607
    %v2643 = vpop.f32.mrb[0].mxu0
    %v2644 = vadd.f32 0.0, %v2643
    %v2645 = vpop.f32.mrb[0].mxu0
    %v2646 = vpop.f32.mrb[0].mxu0
    %v2647 = vpop.f32.mrb[0].mxu0
    %2648 = vdwg.mxu0
    %v2649 = vadd.f32 %v2603, %v2644
    %v2650 = vxor.u32 %v2649, 2147483648
    %v2651 = vmul.f32 %v2650, 1.442695
    %v2652 = vpow.pop %v2651
    %v2653 = vadd.f32 %v2652, 1.0
    %v2654 = vrcp.pop %v2653
    %v2655 = vmul.f32 1.0, %v2654
    %v2656 = vtanh.pop %v2649
    %v2657 = vld [vmem:[#allocation4] sm:$0xff]
    %2659 = vrot.lane.b32.xlu0 %v2657, 32
    %v2660 = vpop.permute.xlu0 %2659
    %v2662 = vmul.f32 %v2655, %v2660
    %2664 = vrot.lane.b32.xlu0 %v2656, 64
    %v2665 = vpop.permute.xlu0 %2664
    %v2667 = vmul.f32 %v2655, %v2665
    %2669 = vrot.lane.b32.xlu0 %v2667, 32
    %v2670 = vpop.permute.xlu0 %2669
    %v2672 = vadd.f32 %v2662, %v2670
    %v2673 = vtanh.pop %v2672
    %2675 = vrot.lane.b32.xlu0 %v2673, 64
    %v2676 = vpop.permute.xlu0 %2675
    %v2678 = vmul.f32 %v2655, %v2676
    %2680 = vrot.lane.b32.xlu0 %v2672, 96
    %v2681 = vpop.permute.xlu0 %2680
    %2683 = vst.msk [vmem:[#allocation4] sm:$0xff] %vm266, %v2681
    %2685 = vrot.lane.b32.xlu0 %v2678, 32
    %v2686 = vpop.permute.xlu0 %2685
    %2688 = vst.msk [vmem:[#allocation3] sm:$0xff] %vm266, %v2686
    %v2689 = vld [vmem:[%s902] sm:$0xff]
    %v2690 = vld [vmem:[#allocation3] sm:$0xff]
    %v2691 = vpack.c.bf16 %v2690, %v2690
    %v2693 = vsel %vm266, %v2691, 0
    %2695 = vmatprep.subr.bf16.mxu0 0
    %2696 = vmatpush1.bf16.msra.mxu0 %v2086
    %2697 = vmatprep.subr.bf16.mxu0 0
    %2698 = vmatpush1.bf16.msra.mxu0 %v2087
    %2699 = vmatprep.subr.bf16.mxu0 0
    %2700 = vmatpush1.bf16.msra.mxu0 0
    %2701 = vmatprep.subr.bf16.mxu0 0
    %2702 = vmatpush1.bf16.msra.mxu0 0
    %2703 = vmatprep.subr.bf16.mxu0 0
    %2704 = vmatpush1.bf16.msra.mxu0 0
    %2705 = vmatprep.subr.bf16.mxu0 0
    %2706 = vmatpush1.bf16.msra.mxu0 0
    %2707 = vmatprep.subr.bf16.mxu0 0
    %2708 = vmatpush1.bf16.msra.mxu0 0
    %2709 = vmatprep.subr.bf16.mxu0 0
    %2710 = vmatpush1.bf16.msra.mxu0 0
    %2711 = vmatprep.subr.bf16.mxu0 0
    %2712 = vmatpush1.bf16.msra.mxu0 0
    %2713 = vmatprep.subr.bf16.mxu0 0
    %2714 = vmatpush1.bf16.msra.mxu0 0
    %2715 = vmatprep.subr.bf16.mxu0 0
    %2716 = vmatpush1.bf16.msra.mxu0 0
    %2717 = vmatprep.subr.bf16.mxu0 0
    %2718 = vmatpush1.bf16.msra.mxu0 0
    %2719 = vmatprep.subr.bf16.mxu0 0
    %2720 = vmatpush1.bf16.msra.mxu0 0
    %2721 = vmatprep.subr.bf16.mxu0 0
    %2722 = vmatpush1.bf16.msra.mxu0 0
    %2723 = vmatprep.subr.bf16.mxu0 0
    %2724 = vmatpush1.bf16.msra.mxu0 0
    %2725 = vmatprep.subr.bf16.mxu0 0
    %2726 = vmatpush1.bf16.msra.mxu0 0
    %2727 = vmatprep.mubr.bf16.mxu0 0
    %2728 = vmatmul.mubr.bf16.gmra.mrb[0].mxu0 %v2693
    %v2729 = vpop.f32.mrb[0].mxu0
    %v2730 = vadd.f32 0.0, %v2729
    %v2731 = vpop.f32.mrb[0].mxu0
    %v2732 = vpop.f32.mrb[0].mxu0
    %v2733 = vpop.f32.mrb[0].mxu0
    %2734 = vdwg.mxu0
    %v2735 = vadd.f32 %v2689, %v2730
    %v2736 = vxor.u32 %v2735, 2147483648
    %v2737 = vmul.f32 %v2736, 1.442695
    %v2738 = vpow.pop %v2737
    %v2739 = vadd.f32 %v2738, 1.0
    %v2740 = vrcp.pop %v2739
    %v2741 = vmul.f32 1.0, %v2740
    %v2742 = vtanh.pop %v2735
    %v2743 = vld [vmem:[#allocation4] sm:$0xff]
    %2745 = vrot.lane.b32.xlu0 %v2743, 32
    %v2746 = vpop.permute.xlu0 %2745
    %v2748 = vmul.f32 %v2741, %v2746
    %2750 = vrot.lane.b32.xlu0 %v2742, 64
    %v2751 = vpop.permute.xlu0 %2750
    %v2753 = vmul.f32 %v2741, %v2751
    %2755 = vrot.lane.b32.xlu0 %v2753, 32
    %v2756 = vpop.permute.xlu0 %2755
    %v2758 = vadd.f32 %v2748, %v2756
    %v2759 = vtanh.pop %v2758
    %2761 = vrot.lane.b32.xlu0 %v2759, 64
    %v2762 = vpop.permute.xlu0 %2761
    %v2764 = vmul.f32 %v2741, %v2762
    %2766 = vrot.lane.b32.xlu0 %v2758, 96
    %v2767 = vpop.permute.xlu0 %2766
    %2769 = vst.msk [vmem:[#allocation4] sm:$0xff] %vm266, %v2767
    %2771 = vrot.lane.b32.xlu0 %v2764, 32
    %v2772 = vpop.permute.xlu0 %2771
    %2774 = vst.msk [vmem:[#allocation3] sm:$0xff] %vm266, %v2772
    %v2775 = vld [vmem:[#allocation3] sm:$0xff]
    %v2776 = vld [vmem:[#allocation5] sm:$0xff]
    %v2777 = vld [vmem:[#allocation5 + $0x8] sm:$0xff]
    %v2778 = vld [vmem:[#allocation5 + $0x10] sm:$0xff]
    %v2779 = vld [vmem:[#allocation5 + $0x18] sm:$0xff]
    %v2780 = vld [vmem:[#allocation5 + $0x20] sm:$0xff]
    %v2781 = vld [vmem:[#allocation5 + $0x28] sm:$0xff]
    %v2782 = vld [vmem:[#allocation5 + $0x30] sm:$0xff]
    %v2783 = vld [vmem:[#allocation5 + $0x38] sm:$0xff]
    %v2784 = vpack.c.bf16 %v2777, %v2776
    %v2785 = vpack.c.bf16 %v2779, %v2778
    %v2786 = vpack.c.bf16 %v2781, %v2780
    %v2787 = vpack.c.bf16 %v2783, %v2782
    %v2788 = vld [vmem:[%s11] sm:$0xf]
    %v2789 = vld [vmem:[%s11 + $0x4] sm:$0xf]
    %v2790 = vld [vmem:[%s11 + $0x8] sm:$0xf]
    %v2791 = vld [vmem:[%s11 + $0xc] sm:$0xf]
    %v2792 = vld [vmem:[#allocation6] sm:$0xff]
    %v2793 = vld [vmem:[#allocation6 + $0x8] sm:$0xff]
    %v2794 = vld [vmem:[#allocation6 + $0x10] sm:$0xff]
    %v2795 = vld [vmem:[#allocation6 + $0x18] sm:$0xff]
    %v2796 = vld [vmem:[#allocation6 + $0x20] sm:$0xff]
    %v2797 = vld [vmem:[#allocation6 + $0x28] sm:$0xff]
    %v2798 = vld [vmem:[#allocation6 + $0x30] sm:$0xff]
    %v2799 = vld [vmem:[#allocation6 + $0x38] sm:$0xff]
    %v2800 = vpack.c.bf16 %v2793, %v2792
    %v2801 = vpack.c.bf16 %v2795, %v2794
    %v2802 = vpack.c.bf16 %v2797, %v2796
    %v2803 = vpack.c.bf16 %v2799, %v2798
    %v2804 = vld [vmem:[%s12] sm:$0xf]
    %v2805 = vld [vmem:[%s12 + $0x4] sm:$0xf]
    %v2806 = vld [vmem:[%s12 + $0x8] sm:$0xf]
    %v2807 = vld [vmem:[%s12 + $0xc] sm:$0xf]
    %v2812 = vunpack.c.l.b16 %v2804
    %v2813 = vunpack.c.l.b16 %v2805
    %v2814 = vunpack.c.l.b16 %v2806
    %v2815 = vunpack.c.l.b16 %v2807
    %v2816 = vpack.c.b16 %v2813, %v2812
    %v2817 = vpack.c.b16 %v2815, %v2814
    %v2821 = vsel %vm266, %v2800, 0
    %v2824 = vsel %vm266, %v2801, 0
    %v2827 = vsel %vm266, %v2802, 0
    %v2830 = vsel %vm266, %v2803, 0
    %2832 = vmatprep.subr.bf16.mxu0 0
    %2833 = vmatpush1.bf16.msra.mxu0 %v2816
    %2834 = vmatprep.subr.bf16.mxu0 0
    %2835 = vmatpush1.bf16.msra.mxu0 %v2817
    %2836 = vmatprep.subr.bf16.mxu0 0
    %2837 = vmatpush1.bf16.msra.mxu0 0
    %2838 = vmatprep.subr.bf16.mxu0 0
    %2839 = vmatpush1.bf16.msra.mxu0 0
    %2840 = vmatprep.subr.bf16.mxu0 0
    %2841 = vmatpush1.bf16.msra.mxu0 0
    %2842 = vmatprep.subr.bf16.mxu0 0
    %2843 = vmatpush1.bf16.msra.mxu0 0
    %2844 = vmatprep.subr.bf16.mxu0 0
    %2845 = vmatpush1.bf16.msra.mxu0 0
    %2846 = vmatprep.subr.bf16.mxu0 0
    %2847 = vmatpush1.bf16.msra.mxu0 0
    %2848 = vmatprep.subr.bf16.mxu0 0
    %2849 = vmatpush1.bf16.msra.mxu0 0
    %2850 = vmatprep.subr.bf16.mxu0 0
    %2851 = vmatpush1.bf16.msra.mxu0 0
    %2852 = vmatprep.subr.bf16.mxu0 0
    %2853 = vmatpush1.bf16.msra.mxu0 0
    %2854 = vmatprep.subr.bf16.mxu0 0
    %2855 = vmatpush1.bf16.msra.mxu0 0
    %2856 = vmatprep.subr.bf16.mxu0 0
    %2857 = vmatpush1.bf16.msra.mxu0 0
    %2858 = vmatprep.subr.bf16.mxu0 0
    %2859 = vmatpush1.bf16.msra.mxu0 0
    %2860 = vmatprep.subr.bf16.mxu0 0
    %2861 = vmatpush1.bf16.msra.mxu0 0
    %2862 = vmatprep.subr.bf16.mxu0 0
    %2863 = vmatpush1.bf16.msra.mxu0 0
    %2864 = vmatprep.mubr.bf16.mxu0 0
    %2865 = vmatmul.mubr.bf16.gmra.mrb[0].mxu0 %v2821
    %v2866 = vpop.f32.mrb[0].mxu0
    %v2867 = vadd.f32 0.0, %v2866
    %v2868 = vpop.f32.mrb[0].mxu0
    %v2869 = vpop.f32.mrb[0].mxu0
    %v2870 = vadd.f32 0.0, %v2869
    %v2871 = vpop.f32.mrb[0].mxu0
    %2872 = vmatprep.mubr.bf16.mxu0 0
    %2873 = vmatmul.mubr.bf16.gmra.mrb[0].mxu0 %v2824
    %v2874 = vpop.f32.mrb[0].mxu0
    %v2875 = vadd.f32 0.0, %v2874
    %v2876 = vpop.f32.mrb[0].mxu0
    %v2877 = vpop.f32.mrb[0].mxu0
    %v2878 = vadd.f32 0.0, %v2877
    %v2879 = vpop.f32.mrb[0].mxu0
    %2880 = vmatprep.mubr.bf16.mxu0 0
    %2881 = vmatmul.mubr.bf16.gmra.mrb[0].mxu0 %v2827
    %v2882 = vpop.f32.mrb[0].mxu0
    %v2883 = vadd.f32 0.0, %v2882
    %v2884 = vpop.f32.mrb[0].mxu0
    %v2885 = vpop.f32.mrb[0].mxu0
    %v2886 = vadd.f32 0.0, %v2885
    %v2887 = vpop.f32.mrb[0].mxu0
    %2888 = vmatprep.mubr.bf16.mxu0 0
    %2889 = vmatmul.mubr.bf16.gmra.mrb[0].mxu0 %v2830
    %v2890 = vpop.f32.mrb[0].mxu0
    %v2891 = vadd.f32 0.0, %v2890
    %v2892 = vpop.f32.mrb[0].mxu0
    %v2893 = vpop.f32.mrb[0].mxu0
    %v2894 = vadd.f32 0.0, %v2893
    %v2895 = vpop.f32.mrb[0].mxu0
    %2896 = vdwg.mxu0
    %v2901 = vunpack.c.l.b16 %v2788
    %v2902 = vunpack.c.l.b16 %v2789
    %v2903 = vunpack.c.l.b16 %v2790
    %v2904 = vunpack.c.l.b16 %v2791
    %v2905 = vpack.c.b16 %v2902, %v2901
    %v2906 = vpack.c.b16 %v2904, %v2903
    %v2910 = vsel %vm266, %v2784, 0
    %v2913 = vsel %vm266, %v2785, 0
    %v2916 = vsel %vm266, %v2786, 0
    %v2919 = vsel %vm266, %v2787, 0
    %2921 = vmatprep.subr.bf16.mxu0 0
    %2922 = vmatpush1.bf16.msra.mxu0 %v2905
    %2923 = vmatprep.subr.bf16.mxu0 0
    %2924 = vmatpush1.bf16.msra.mxu0 %v2906
    %2925 = vmatprep.subr.bf16.mxu0 0
    %2926 = vmatpush1.bf16.msra.mxu0 0
    %2927 = vmatprep.subr.bf16.mxu0 0
    %2928 = vmatpush1.bf16.msra.mxu0 0
    %2929 = vmatprep.subr.bf16.mxu0 0
    %2930 = vmatpush1.bf16.msra.mxu0 0
    %2931 = vmatprep.subr.bf16.mxu0 0
    %2932 = vmatpush1.bf16.msra.mxu0 0
    %2933 = vmatprep.subr.bf16.mxu0 0
    %2934 = vmatpush1.bf16.msra.mxu0 0
    %2935 = vmatprep.subr.bf16.mxu0 0
    %2936 = vmatpush1.bf16.msra.mxu0 0
    %2937 = vmatprep.subr.bf16.mxu0 0
    %2938 = vmatpush1.bf16.msra.mxu0 0
    %2939 = vmatprep.subr.bf16.mxu0 0
    %2940 = vmatpush1.bf16.msra.mxu0 0
    %2941 = vmatprep.subr.bf16.mxu0 0
    %2942 = vmatpush1.bf16.msra.mxu0 0
    %2943 = vmatprep.subr.bf16.mxu0 0
    %2944 = vmatpush1.bf16.msra.mxu0 0
    %2945 = vmatprep.subr.bf16.mxu0 0
    %2946 = vmatpush1.bf16.msra.mxu0 0
    %2947 = vmatprep.subr.bf16.mxu0 0
    %2948 = vmatpush1.bf16.msra.mxu0 0
    %2949 = vmatprep.subr.bf16.mxu0 0
    %2950 = vmatpush1.bf16.msra.mxu0 0
    %2951 = vmatprep.subr.bf16.mxu0 0
    %2952 = vmatpush1.bf16.msra.mxu0 0
    %2953 = vmatprep.mubr.bf16.mxu0 0
    %2954 = vmatmul.mubr.bf16.gmra.mrb[0].mxu0 %v2910
    %v2955 = vpop.f32.mrb[0].mxu0
    %v2956 = vadd.f32 %v2867, %v2955
    %v2957 = vpop.f32.mrb[0].mxu0
    %v2958 = vpop.f32.mrb[0].mxu0
    %v2959 = vadd.f32 %v2870, %v2958
    %v2960 = vpop.f32.mrb[0].mxu0
    %2961 = vmatprep.mubr.bf16.mxu0 0
    %2962 = vmatmul.mubr.bf16.gmra.mrb[0].mxu0 %v2913
    %v2963 = vpop.f32.mrb[0].mxu0
    %v2964 = vadd.f32 %v2875, %v2963
    %v2965 = vpop.f32.mrb[0].mxu0
    %v2966 = vpop.f32.mrb[0].mxu0
    %v2967 = vadd.f32 %v2878, %v2966
    %v2968 = vpop.f32.mrb[0].mxu0
    %2969 = vmatprep.mubr.bf16.mxu0 0
    %2970 = vmatmul.mubr.bf16.gmra.mrb[0].mxu0 %v2916
    %v2971 = vpop.f32.mrb[0].mxu0
    %v2972 = vadd.f32 %v2883, %v2971
    %v2973 = vpop.f32.mrb[0].mxu0
    %v2974 = vpop.f32.mrb[0].mxu0
    %v2975 = vadd.f32 %v2886, %v2974
    %v2976 = vpop.f32.mrb[0].mxu0
    %2977 = vmatprep.mubr.bf16.mxu0 0
    %2978 = vmatmul.mubr.bf16.gmra.mrb[0].mxu0 %v2919
    %v2979 = vpop.f32.mrb[0].mxu0
    %v2980 = vadd.f32 %v2891, %v2979
    %v2981 = vpop.f32.mrb[0].mxu0
    %v2982 = vpop.f32.mrb[0].mxu0
    %v2983 = vadd.f32 %v2894, %v2982
    %v2984 = vpop.f32.mrb[0].mxu0
    %2985 = vdwg.mxu0
    %v2986 = vld [vmem:[%s14] sm:$0x1]
    %v2988 = vlaneseq
    %v2989 = vshrl.u32 %v2988, 7
    %v2990 = vsub.s32 0, %v2989
    %v2991 = vrot.slane %v2986, %v2990
    %v2993 = vadd.f32 %v2956, %v2991
    %v2994 = vadd.f32 %v2959, %v2991
    %v2995 = vadd.f32 %v2964, %v2991
    %v2996 = vadd.f32 %v2967, %v2991
    %v2997 = vadd.f32 %v2972, %v2991
    %v2998 = vadd.f32 %v2975, %v2991
    %v2999 = vadd.f32 %v2980, %v2991
    %v3000 = vadd.f32 %v2983, %v2991
    %3001 = vst [vmem:[#allocation2] sm:$0xff] %v2993
    %3002 = vst [vmem:[#allocation2 + $0x8] sm:$0xff] %v2994
    %3003 = vst [vmem:[#allocation2 + $0x10] sm:$0xff] %v2995
    %3004 = vst [vmem:[#allocation2 + $0x18] sm:$0xff] %v2996
    %3005 = vst [vmem:[#allocation2 + $0x20] sm:$0xff] %v2997
    %3006 = vst [vmem:[#allocation2 + $0x28] sm:$0xff] %v2998
    %3007 = vst [vmem:[#allocation2 + $0x30] sm:$0xff] %v2999
    %3008 = vst [vmem:[#allocation2 + $0x38] sm:$0xff] %v3000
    %v3009 = vld [vmem:[#allocation11] sm:$0xf]
    %v3010 = vld [vmem:[#allocation11 + $0x4] sm:$0xf]
    %v3011 = vld [vmem:[#allocation11 + $0x8] sm:$0xf]
    %v3012 = vld [vmem:[#allocation11 + $0xc] sm:$0xf]
    %3013 = vst.msk [vmem:[#allocation3] sm:$0xff] %vm266, 0.0
    %3014 = vst.msk [vmem:[#allocation4] sm:$0xff] %vm266, 0.0
    %v3015 = vld [vmem:[%s902] sm:$0xff]
    %v3016 = vld [vmem:[#allocation3] sm:$0xff]
    %v3017 = vpack.c.bf16 %v3016, %v3016
    %v3022 = vunpack.c.l.b16 %v3009
    %v3023 = vunpack.c.l.b16 %v3010
    %v3024 = vunpack.c.l.b16 %v3011
    %v3025 = vunpack.c.l.b16 %v3012
    %v3026 = vpack.c.b16 %v3023, %v3022
    %v3027 = vpack.c.b16 %v3025, %v3024
    %v3031 = vsel %vm266, %v3017, 0
    %3033 = vmatprep.subr.bf16.mxu0 0
    %3034 = vmatpush1.bf16.msra.mxu0 %v3026
    %3035 = vmatprep.subr.bf16.mxu0 0
    %3036 = vmatpush1.bf16.msra.mxu0 %v3027
    %3037 = vmatprep.subr.bf16.mxu0 0
    %3038 = vmatpush1.bf16.msra.mxu0 0
    %3039 = vmatprep.subr.bf16.mxu0 0
    %3040 = vmatpush1.bf16.msra.mxu0 0
    %3041 = vmatprep.subr.bf16.mxu0 0
    %3042 = vmatpush1.bf16.msra.mxu0 0
    %3043 = vmatprep.subr.bf16.mxu0 0
    %3044 = vmatpush1.bf16.msra.mxu0 0
    %3045 = vmatprep.subr.bf16.mxu0 0
    %3046 = vmatpush1.bf16.msra.mxu0 0
    %3047 = vmatprep.subr.bf16.mxu0 0
    %3048 = vmatpush1.bf16.msra.mxu0 0
    %3049 = vmatprep.subr.bf16.mxu0 0
    %3050 = vmatpush1.bf16.msra.mxu0 0
    %3051 = vmatprep.subr.bf16.mxu0 0
    %3052 = vmatpush1.bf16.msra.mxu0 0
    %3053 = vmatprep.subr.bf16.mxu0 0
    %3054 = vmatpush1.bf16.msra.mxu0 0
    %3055 = vmatprep.subr.bf16.mxu0 0
    %3056 = vmatpush1.bf16.msra.mxu0 0
    %3057 = vmatprep.subr.bf16.mxu0 0
    %3058 = vmatpush1.bf16.msra.mxu0 0
    %3059 = vmatprep.subr.bf16.mxu0 0
    %3060 = vmatpush1.bf16.msra.mxu0 0
    %3061 = vmatprep.subr.bf16.mxu0 0
    %3062 = vmatpush1.bf16.msra.mxu0 0
    %3063 = vmatprep.subr.bf16.mxu0 0
    %3064 = vmatpush1.bf16.msra.mxu0 0
    %3065 = vmatprep.mubr.bf16.mxu0 0
    %3066 = vmatmul.mubr.bf16.gmra.mrb[0].mxu0 %v3031
    %v3067 = vpop.f32.mrb[0].mxu0
    %v3068 = vadd.f32 0.0, %v3067
    %v3069 = vpop.f32.mrb[0].mxu0
    %v3070 = vpop.f32.mrb[0].mxu0
    %v3071 = vpop.f32.mrb[0].mxu0
    %3072 = vdwg.mxu0
    %v3073 = vadd.f32 %v3015, %v3068
    %v3074 = vxor.u32 %v3073, 2147483648
    %v3075 = vmul.f32 %v3074, 1.442695
    %v3076 = vpow.pop %v3075
    %v3077 = vadd.f32 %v3076, 1.0
    %v3078 = vrcp.pop %v3077
    %v3079 = vmul.f32 1.0, %v3078
    %v3080 = vtanh.pop %v3073
    %v3081 = vld [vmem:[#allocation4] sm:$0xff]
    %3083 = vrot.lane.b32.xlu0 %v3081, 32
    %v3084 = vpop.permute.xlu0 %3083
    %v3086 = vmul.f32 %v3079, %v3084
    %3088 = vrot.lane.b32.xlu0 %v3080, 64
    %v3089 = vpop.permute.xlu0 %3088
    %v3091 = vmul.f32 %v3079, %v3089
    %3093 = vrot.lane.b32.xlu0 %v3091, 32
    %v3094 = vpop.permute.xlu0 %3093
    %v3096 = vadd.f32 %v3086, %v3094
    %v3097 = vtanh.pop %v3096
    %3099 = vrot.lane.b32.xlu0 %v3097, 64
    %v3100 = vpop.permute.xlu0 %3099
    %v3102 = vmul.f32 %v3079, %v3100
    %3104 = vrot.lane.b32.xlu0 %v3096, 96
    %v3105 = vpop.permute.xlu0 %3104
    %3107 = vst.msk [vmem:[#allocation4] sm:$0xff] %vm266, %v3105
    %3109 = vrot.lane.b32.xlu0 %v3102, 32
    %v3110 = vpop.permute.xlu0 %3109
    %3112 = vst.msk [vmem:[#allocation3] sm:$0xff] %vm266, %v3110
    %v3113 = vld [vmem:[%s813] sm:$0xff]
    %v3114 = vld [vmem:[#allocation3] sm:$0xff]
    %v3115 = vpack.c.bf16 %v3114, %v3114
    %v3117 = vsel %vm266, %v3115, 0
    %3119 = vmatprep.subr.bf16.mxu0 0
    %3120 = vmatpush1.bf16.msra.mxu0 %v3026
    %3121 = vmatprep.subr.bf16.mxu0 0
    %3122 = vmatpush1.bf16.msra.mxu0 %v3027
    %3123 = vmatprep.subr.bf16.mxu0 0
    %3124 = vmatpush1.bf16.msra.mxu0 0
    %3125 = vmatprep.subr.bf16.mxu0 0
    %3126 = vmatpush1.bf16.msra.mxu0 0
    %3127 = vmatprep.subr.bf16.mxu0 0
    %3128 = vmatpush1.bf16.msra.mxu0 0
    %3129 = vmatprep.subr.bf16.mxu0 0
    %3130 = vmatpush1.bf16.msra.mxu0 0
    %3131 = vmatprep.subr.bf16.mxu0 0
    %3132 = vmatpush1.bf16.msra.mxu0 0
    %3133 = vmatprep.subr.bf16.mxu0 0
    %3134 = vmatpush1.bf16.msra.mxu0 0
    %3135 = vmatprep.subr.bf16.mxu0 0
    %3136 = vmatpush1.bf16.msra.mxu0 0
    %3137 = vmatprep.subr.bf16.mxu0 0
    %3138 = vmatpush1.bf16.msra.mxu0 0
    %3139 = vmatprep.subr.bf16.mxu0 0
    %3140 = vmatpush1.bf16.msra.mxu0 0
    %3141 = vmatprep.subr.bf16.mxu0 0
    %3142 = vmatpush1.bf16.msra.mxu0 0
    %3143 = vmatprep.subr.bf16.mxu0 0
    %3144 = vmatpush1.bf16.msra.mxu0 0
    %3145 = vmatprep.subr.bf16.mxu0 0
    %3146 = vmatpush1.bf16.msra.mxu0 0
    %3147 = vmatprep.subr.bf16.mxu0 0
    %3148 = vmatpush1.bf16.msra.mxu0 0
    %3149 = vmatprep.subr.bf16.mxu0 0
    %3150 = vmatpush1.bf16.msra.mxu0 0
    %3151 = vmatprep.mubr.bf16.mxu0 0
    %3152 = vmatmul.mubr.bf16.gmra.mrb[0].mxu0 %v3117
    %v3153 = vpop.f32.mrb[0].mxu0
    %v3154 = vadd.f32 0.0, %v3153
    %v3155 = vpop.f32.mrb[0].mxu0
    %v3156 = vpop.f32.mrb[0].mxu0
    %v3157 = vpop.f32.mrb[0].mxu0
    %3158 = vdwg.mxu0
    %v3159 = vadd.f32 %v3113, %v3154
    %v3160 = vxor.u32 %v3159, 2147483648
    %v3161 = vmul.f32 %v3160, 1.442695
    %v3162 = vpow.pop %v3161
    %v3163 = vadd.f32 %v3162, 1.0
    %v3164 = vrcp.pop %v3163
    %v3165 = vmul.f32 1.0, %v3164
    %v3166 = vtanh.pop %v3159
    %v3167 = vld [vmem:[#allocation4] sm:$0xff]
    %3169 = vrot.lane.b32.xlu0 %v3167, 32
    %v3170 = vpop.permute.xlu0 %3169
    %v3172 = vmul.f32 %v3165, %v3170
    %3174 = vrot.lane.b32.xlu0 %v3166, 64
    %v3175 = vpop.permute.xlu0 %3174
    %v3177 = vmul.f32 %v3165, %v3175
    %3179 = vrot.lane.b32.xlu0 %v3177, 32
    %v3180 = vpop.permute.xlu0 %3179
    %v3182 = vadd.f32 %v3172, %v3180
    %v3183 = vtanh.pop %v3182
    %3185 = vrot.lane.b32.xlu0 %v3183, 64
    %v3186 = vpop.permute.xlu0 %3185
    %v3188 = vmul.f32 %v3165, %v3186
    %3190 = vrot.lane.b32.xlu0 %v3182, 96
    %v3191 = vpop.permute.xlu0 %3190
    %3193 = vst.msk [vmem:[#allocation4] sm:$0xff] %vm266, %v3191
    %3195 = vrot.lane.b32.xlu0 %v3188, 32
    %v3196 = vpop.permute.xlu0 %3195
    %3198 = vst.msk [vmem:[#allocation3] sm:$0xff] %vm266, %v3196
    %v3199 = vld [vmem:[%s724] sm:$0xff]
    %v3200 = vld [vmem:[#allocation3] sm:$0xff]
    %v3201 = vpack.c.bf16 %v3200, %v3200
    %v3203 = vsel %vm266, %v3201, 0
    %3205 = vmatprep.subr.bf16.mxu0 0
    %3206 = vmatpush1.bf16.msra.mxu0 %v3026
    %3207 = vmatprep.subr.bf16.mxu0 0
    %3208 = vmatpush1.bf16.msra.mxu0 %v3027
    %3209 = vmatprep.subr.bf16.mxu0 0
    %3210 = vmatpush1.bf16.msra.mxu0 0
    %3211 = vmatprep.subr.bf16.mxu0 0
    %3212 = vmatpush1.bf16.msra.mxu0 0
    %3213 = vmatprep.subr.bf16.mxu0 0
    %3214 = vmatpush1.bf16.msra.mxu0 0
    %3215 = vmatprep.subr.bf16.mxu0 0
    %3216 = vmatpush1.bf16.msra.mxu0 0
    %3217 = vmatprep.subr.bf16.mxu0 0
    %3218 = vmatpush1.bf16.msra.mxu0 0
    %3219 = vmatprep.subr.bf16.mxu0 0
    %3220 = vmatpush1.bf16.msra.mxu0 0
    %3221 = vmatprep.subr.bf16.mxu0 0
    %3222 = vmatpush1.bf16.msra.mxu0 0
    %3223 = vmatprep.subr.bf16.mxu0 0
    %3224 = vmatpush1.bf16.msra.mxu0 0
    %3225 = vmatprep.subr.bf16.mxu0 0
    %3226 = vmatpush1.bf16.msra.mxu0 0
    %3227 = vmatprep.subr.bf16.mxu0 0
    %3228 = vmatpush1.bf16.msra.mxu0 0
    %3229 = vmatprep.subr.bf16.mxu0 0
    %3230 = vmatpush1.bf16.msra.mxu0 0
    %3231 = vmatprep.subr.bf16.mxu0 0
    %3232 = vmatpush1.bf16.msra.mxu0 0
    %3233 = vmatprep.subr.bf16.mxu0 0
    %3234 = vmatpush1.bf16.msra.mxu0 0
    %3235 = vmatprep.subr.bf16.mxu0 0
    %3236 = vmatpush1.bf16.msra.mxu0 0
    %3237 = vmatprep.mubr.bf16.mxu0 0
    %3238 = vmatmul.mubr.bf16.gmra.mrb[0].mxu0 %v3203
    %v3239 = vpop.f32.mrb[0].mxu0
    %v3240 = vadd.f32 0.0, %v3239
    %v3241 = vpop.f32.mrb[0].mxu0
    %v3242 = vpop.f32.mrb[0].mxu0
    %v3243 = vpop.f32.mrb[0].mxu0
    %3244 = vdwg.mxu0
    %v3245 = vadd.f32 %v3199, %v3240
    %v3246 = vxor.u32 %v3245, 2147483648
    %v3247 = vmul.f32 %v3246, 1.442695
    %v3248 = vpow.pop %v3247
    %v3249 = vadd.f32 %v3248, 1.0
    %v3250 = vrcp.pop %v3249
    %v3251 = vmul.f32 1.0, %v3250
    %v3252 = vtanh.pop %v3245
    %v3253 = vld [vmem:[#allocation4] sm:$0xff]
    %3255 = vrot.lane.b32.xlu0 %v3253, 32
    %v3256 = vpop.permute.xlu0 %3255
    %v3258 = vmul.f32 %v3251, %v3256
    %3260 = vrot.lane.b32.xlu0 %v3252, 64
    %v3261 = vpop.permute.xlu0 %3260
    %v3263 = vmul.f32 %v3251, %v3261
    %3265 = vrot.lane.b32.xlu0 %v3263, 32
    %v3266 = vpop.permute.xlu0 %3265
    %v3268 = vadd.f32 %v3258, %v3266
    %v3269 = vtanh.pop %v3268
    %3271 = vrot.lane.b32.xlu0 %v3269, 64
    %v3272 = vpop.permute.xlu0 %3271
    %v3274 = vmul.f32 %v3251, %v3272
    %3276 = vrot.lane.b32.xlu0 %v3268, 96
    %v3277 = vpop.permute.xlu0 %3276
    %3279 = vst.msk [vmem:[#allocation4] sm:$0xff] %vm266, %v3277
    %3281 = vrot.lane.b32.xlu0 %v3274, 32
    %v3282 = vpop.permute.xlu0 %3281
    %3284 = vst.msk [vmem:[#allocation3] sm:$0xff] %vm266, %v3282
    %v3285 = vld [vmem:[%s635] sm:$0xff]
    %v3286 = vld [vmem:[#allocation3] sm:$0xff]
    %v3287 = vpack.c.bf16 %v3286, %v3286
    %v3289 = vsel %vm266, %v3287, 0
    %3291 = vmatprep.subr.bf16.mxu0 0
    %3292 = vmatpush1.bf16.msra.mxu0 %v3026
    %3293 = vmatprep.subr.bf16.mxu0 0
    %3294 = vmatpush1.bf16.msra.mxu0 %v3027
    %3295 = vmatprep.subr.bf16.mxu0 0
    %3296 = vmatpush1.bf16.msra.mxu0 0
    %3297 = vmatprep.subr.bf16.mxu0 0
    %3298 = vmatpush1.bf16.msra.mxu0 0
    %3299 = vmatprep.subr.bf16.mxu0 0
    %3300 = vmatpush1.bf16.msra.mxu0 0
    %3301 = vmatprep.subr.bf16.mxu0 0
    %3302 = vmatpush1.bf16.msra.mxu0 0
    %3303 = vmatprep.subr.bf16.mxu0 0
    %3304 = vmatpush1.bf16.msra.mxu0 0
    %3305 = vmatprep.subr.bf16.mxu0 0
    %3306 = vmatpush1.bf16.msra.mxu0 0
    %3307 = vmatprep.subr.bf16.mxu0 0
    %3308 = vmatpush1.bf16.msra.mxu0 0
    %3309 = vmatprep.subr.bf16.mxu0 0
    %3310 = vmatpush1.bf16.msra.mxu0 0
    %3311 = vmatprep.subr.bf16.mxu0 0
    %3312 = vmatpush1.bf16.msra.mxu0 0
    %3313 = vmatprep.subr.bf16.mxu0 0
    %3314 = vmatpush1.bf16.msra.mxu0 0
    %3315 = vmatprep.subr.bf16.mxu0 0
    %3316 = vmatpush1.bf16.msra.mxu0 0
    %3317 = vmatprep.subr.bf16.mxu0 0
    %3318 = vmatpush1.bf16.msra.mxu0 0
    %3319 = vmatprep.subr.bf16.mxu0 0
    %3320 = vmatpush1.bf16.msra.mxu0 0
    %3321 = vmatprep.subr.bf16.mxu0 0
    %3322 = vmatpush1.bf16.msra.mxu0 0
    %3323 = vmatprep.mubr.bf16.mxu0 0
    %3324 = vmatmul.mubr.bf16.gmra.mrb[0].mxu0 %v3289
    %v3325 = vpop.f32.mrb[0].mxu0
    %v3326 = vadd.f32 0.0, %v3325
    %v3327 = vpop.f32.mrb[0].mxu0
    %v3328 = vpop.f32.mrb[0].mxu0
    %v3329 = vpop.f32.mrb[0].mxu0
    %3330 = vdwg.mxu0
    %v3331 = vadd.f32 %v3285, %v3326
    %v3332 = vxor.u32 %v3331, 2147483648
    %v3333 = vmul.f32 %v3332, 1.442695
    %v3334 = vpow.pop %v3333
    %v3335 = vadd.f32 %v3334, 1.0
    %v3336 = vrcp.pop %v3335
    %v3337 = vmul.f32 1.0, %v3336
    %v3338 = vtanh.pop %v3331
    %v3339 = vld [vmem:[#allocation4] sm:$0xff]
    %3341 = vrot.lane.b32.xlu0 %v3339, 32
    %v3342 = vpop.permute.xlu0 %3341
    %v3344 = vmul.f32 %v3337, %v3342
    %3346 = vrot.lane.b32.xlu0 %v3338, 64
    %v3347 = vpop.permute.xlu0 %3346
    %v3349 = vmul.f32 %v3337, %v3347
    %3351 = vrot.lane.b32.xlu0 %v3349, 32
    %v3352 = vpop.permute.xlu0 %3351
    %v3354 = vadd.f32 %v3344, %v3352
    %v3355 = vtanh.pop %v3354
    %3357 = vrot.lane.b32.xlu0 %v3355, 64
    %v3358 = vpop.permute.xlu0 %3357
    %v3360 = vmul.f32 %v3337, %v3358
    %3362 = vrot.lane.b32.xlu0 %v3354, 96
    %v3363 = vpop.permute.xlu0 %3362
    %3365 = vst.msk [vmem:[#allocation4] sm:$0xff] %vm266, %v3363
    %3367 = vrot.lane.b32.xlu0 %v3360, 32
    %v3368 = vpop.permute.xlu0 %3367
    %3370 = vst.msk [vmem:[#allocation3] sm:$0xff] %vm266, %v3368
    %v3371 = vld [vmem:[%s546] sm:$0xff]
    %v3372 = vld [vmem:[#allocation3] sm:$0xff]
    %v3373 = vpack.c.bf16 %v3372, %v3372
    %v3375 = vsel %vm266, %v3373, 0
    %3377 = vmatprep.subr.bf16.mxu0 0
    %3378 = vmatpush1.bf16.msra.mxu0 %v3026
    %3379 = vmatprep.subr.bf16.mxu0 0
    %3380 = vmatpush1.bf16.msra.mxu0 %v3027
    %3381 = vmatprep.subr.bf16.mxu0 0
    %3382 = vmatpush1.bf16.msra.mxu0 0
    %3383 = vmatprep.subr.bf16.mxu0 0
    %3384 = vmatpush1.bf16.msra.mxu0 0
    %3385 = vmatprep.subr.bf16.mxu0 0
    %3386 = vmatpush1.bf16.msra.mxu0 0
    %3387 = vmatprep.subr.bf16.mxu0 0
    %3388 = vmatpush1.bf16.msra.mxu0 0
    %3389 = vmatprep.subr.bf16.mxu0 0
    %3390 = vmatpush1.bf16.msra.mxu0 0
    %3391 = vmatprep.subr.bf16.mxu0 0
    %3392 = vmatpush1.bf16.msra.mxu0 0
    %3393 = vmatprep.subr.bf16.mxu0 0
    %3394 = vmatpush1.bf16.msra.mxu0 0
    %3395 = vmatprep.subr.bf16.mxu0 0
    %3396 = vmatpush1.bf16.msra.mxu0 0
    %3397 = vmatprep.subr.bf16.mxu0 0
    %3398 = vmatpush1.bf16.msra.mxu0 0
    %3399 = vmatprep.subr.bf16.mxu0 0
    %3400 = vmatpush1.bf16.msra.mxu0 0
    %3401 = vmatprep.subr.bf16.mxu0 0
    %3402 = vmatpush1.bf16.msra.mxu0 0
    %3403 = vmatprep.subr.bf16.mxu0 0
    %3404 = vmatpush1.bf16.msra.mxu0 0
    %3405 = vmatprep.subr.bf16.mxu0 0
    %3406 = vmatpush1.bf16.msra.mxu0 0
    %3407 = vmatprep.subr.bf16.mxu0 0
    %3408 = vmatpush1.bf16.msra.mxu0 0
    %3409 = vmatprep.mubr.bf16.mxu0 0
    %3410 = vmatmul.mubr.bf16.gmra.mrb[0].mxu0 %v3375
    %v3411 = vpop.f32.mrb[0].mxu0
    %v3412 = vadd.f32 0.0, %v3411
    %v3413 = vpop.f32.mrb[0].mxu0
    %v3414 = vpop.f32.mrb[0].mxu0
    %v3415 = vpop.f32.mrb[0].mxu0
    %3416 = vdwg.mxu0
    %v3417 = vadd.f32 %v3371, %v3412
    %v3418 = vxor.u32 %v3417, 2147483648
    %v3419 = vmul.f32 %v3418, 1.442695
    %v3420 = vpow.pop %v3419
    %v3421 = vadd.f32 %v3420, 1.0
    %v3422 = vrcp.pop %v3421
    %v3423 = vmul.f32 1.0, %v3422
    %v3424 = vtanh.pop %v3417
    %v3425 = vld [vmem:[#allocation4] sm:$0xff]
    %3427 = vrot.lane.b32.xlu0 %v3425, 32
    %v3428 = vpop.permute.xlu0 %3427
    %v3430 = vmul.f32 %v3423, %v3428
    %3432 = vrot.lane.b32.xlu0 %v3424, 64
    %v3433 = vpop.permute.xlu0 %3432
    %v3435 = vmul.f32 %v3423, %v3433
    %3437 = vrot.lane.b32.xlu0 %v3435, 32
    %v3438 = vpop.permute.xlu0 %3437
    %v3440 = vadd.f32 %v3430, %v3438
    %v3441 = vtanh.pop %v3440
    %3443 = vrot.lane.b32.xlu0 %v3441, 64
    %v3444 = vpop.permute.xlu0 %3443
    %v3446 = vmul.f32 %v3423, %v3444
    %3448 = vrot.lane.b32.xlu0 %v3440, 96
    %v3449 = vpop.permute.xlu0 %3448
    %3451 = vst.msk [vmem:[#allocation4] sm:$0xff] %vm266, %v3449
    %3453 = vrot.lane.b32.xlu0 %v3446, 32
    %v3454 = vpop.permute.xlu0 %3453
    %3456 = vst.msk [vmem:[#allocation3] sm:$0xff] %vm266, %v3454
    %v3457 = vld [vmem:[%s457] sm:$0xff]
    %v3458 = vld [vmem:[#allocation3] sm:$0xff]
    %v3459 = vpack.c.bf16 %v3458, %v3458
    %v3461 = vsel %vm266, %v3459, 0
    %3463 = vmatprep.subr.bf16.mxu0 0
    %3464 = vmatpush1.bf16.msra.mxu0 %v3026
    %3465 = vmatprep.subr.bf16.mxu0 0
    %3466 = vmatpush1.bf16.msra.mxu0 %v3027
    %3467 = vmatprep.subr.bf16.mxu0 0
    %3468 = vmatpush1.bf16.msra.mxu0 0
    %3469 = vmatprep.subr.bf16.mxu0 0
    %3470 = vmatpush1.bf16.msra.mxu0 0
    %3471 = vmatprep.subr.bf16.mxu0 0
    %3472 = vmatpush1.bf16.msra.mxu0 0
    %3473 = vmatprep.subr.bf16.mxu0 0
    %3474 = vmatpush1.bf16.msra.mxu0 0
    %3475 = vmatprep.subr.bf16.mxu0 0
    %3476 = vmatpush1.bf16.msra.mxu0 0
    %3477 = vmatprep.subr.bf16.mxu0 0
    %3478 = vmatpush1.bf16.msra.mxu0 0
    %3479 = vmatprep.subr.bf16.mxu0 0
    %3480 = vmatpush1.bf16.msra.mxu0 0
    %3481 = vmatprep.subr.bf16.mxu0 0
    %3482 = vmatpush1.bf16.msra.mxu0 0
    %3483 = vmatprep.subr.bf16.mxu0 0
    %3484 = vmatpush1.bf16.msra.mxu0 0
    %3485 = vmatprep.subr.bf16.mxu0 0
    %3486 = vmatpush1.bf16.msra.mxu0 0
    %3487 = vmatprep.subr.bf16.mxu0 0
    %3488 = vmatpush1.bf16.msra.mxu0 0
    %3489 = vmatprep.subr.bf16.mxu0 0
    %3490 = vmatpush1.bf16.msra.mxu0 0
    %3491 = vmatprep.subr.bf16.mxu0 0
    %3492 = vmatpush1.bf16.msra.mxu0 0
    %3493 = vmatprep.subr.bf16.mxu0 0
    %3494 = vmatpush1.bf16.msra.mxu0 0
    %3495 = vmatprep.mubr.bf16.mxu0 0
    %3496 = vmatmul.mubr.bf16.gmra.mrb[0].mxu0 %v3461
    %v3497 = vpop.f32.mrb[0].mxu0
    %v3498 = vadd.f32 0.0, %v3497
    %v3499 = vpop.f32.mrb[0].mxu0
    %v3500 = vpop.f32.mrb[0].mxu0
    %v3501 = vpop.f32.mrb[0].mxu0
    %3502 = vdwg.mxu0
    %v3503 = vadd.f32 %v3457, %v3498
    %v3504 = vxor.u32 %v3503, 2147483648
    %v3505 = vmul.f32 %v3504, 1.442695
    %v3506 = vpow.pop %v3505
    %v3507 = vadd.f32 %v3506, 1.0
    %v3508 = vrcp.pop %v3507
    %v3509 = vmul.f32 1.0, %v3508
    %v3510 = vtanh.pop %v3503
    %v3511 = vld [vmem:[#allocation4] sm:$0xff]
    %3513 = vrot.lane.b32.xlu0 %v3511, 32
    %v3514 = vpop.permute.xlu0 %3513
    %v3516 = vmul.f32 %v3509, %v3514
    %3518 = vrot.lane.b32.xlu0 %v3510, 64
    %v3519 = vpop.permute.xlu0 %3518
    %v3521 = vmul.f32 %v3509, %v3519
    %3523 = vrot.lane.b32.xlu0 %v3521, 32
    %v3524 = vpop.permute.xlu0 %3523
    %v3526 = vadd.f32 %v3516, %v3524
    %v3527 = vtanh.pop %v3526
    %3529 = vrot.lane.b32.xlu0 %v3527, 64
    %v3530 = vpop.permute.xlu0 %3529
    %v3532 = vmul.f32 %v3509, %v3530
    %3534 = vrot.lane.b32.xlu0 %v3526, 96
    %v3535 = vpop.permute.xlu0 %3534
    %3537 = vst.msk [vmem:[#allocation4] sm:$0xff] %vm266, %v3535
    %3539 = vrot.lane.b32.xlu0 %v3532, 32
    %v3540 = vpop.permute.xlu0 %3539
    %3542 = vst.msk [vmem:[#allocation3] sm:$0xff] %vm266, %v3540
    %v3543 = vld [vmem:[%s368] sm:$0xff]
    %v3544 = vld [vmem:[#allocation3] sm:$0xff]
    %v3545 = vpack.c.bf16 %v3544, %v3544
    %v3547 = vsel %vm266, %v3545, 0
    %3549 = vmatprep.subr.bf16.mxu0 0
    %3550 = vmatpush1.bf16.msra.mxu0 %v3026
    %3551 = vmatprep.subr.bf16.mxu0 0
    %3552 = vmatpush1.bf16.msra.mxu0 %v3027
    %3553 = vmatprep.subr.bf16.mxu0 0
    %3554 = vmatpush1.bf16.msra.mxu0 0
    %3555 = vmatprep.subr.bf16.mxu0 0
    %3556 = vmatpush1.bf16.msra.mxu0 0
    %3557 = vmatprep.subr.bf16.mxu0 0
    %3558 = vmatpush1.bf16.msra.mxu0 0
    %3559 = vmatprep.subr.bf16.mxu0 0
    %3560 = vmatpush1.bf16.msra.mxu0 0
    %3561 = vmatprep.subr.bf16.mxu0 0
    %3562 = vmatpush1.bf16.msra.mxu0 0
    %3563 = vmatprep.subr.bf16.mxu0 0
    %3564 = vmatpush1.bf16.msra.mxu0 0
    %3565 = vmatprep.subr.bf16.mxu0 0
    %3566 = vmatpush1.bf16.msra.mxu0 0
    %3567 = vmatprep.subr.bf16.mxu0 0
    %3568 = vmatpush1.bf16.msra.mxu0 0
    %3569 = vmatprep.subr.bf16.mxu0 0
    %3570 = vmatpush1.bf16.msra.mxu0 0
    %3571 = vmatprep.subr.bf16.mxu0 0
    %3572 = vmatpush1.bf16.msra.mxu0 0
    %3573 = vmatprep.subr.bf16.mxu0 0
    %3574 = vmatpush1.bf16.msra.mxu0 0
    %3575 = vmatprep.subr.bf16.mxu0 0
    %3576 = vmatpush1.bf16.msra.mxu0 0
    %3577 = vmatprep.subr.bf16.mxu0 0
    %3578 = vmatpush1.bf16.msra.mxu0 0
    %3579 = vmatprep.subr.bf16.mxu0 0
    %3580 = vmatpush1.bf16.msra.mxu0 0
    %3581 = vmatprep.mubr.bf16.mxu0 0
    %3582 = vmatmul.mubr.bf16.gmra.mrb[0].mxu0 %v3547
    %v3583 = vpop.f32.mrb[0].mxu0
    %v3584 = vadd.f32 0.0, %v3583
    %v3585 = vpop.f32.mrb[0].mxu0
    %v3586 = vpop.f32.mrb[0].mxu0
    %v3587 = vpop.f32.mrb[0].mxu0
    %3588 = vdwg.mxu0
    %v3589 = vadd.f32 %v3543, %v3584
    %v3590 = vxor.u32 %v3589, 2147483648
    %v3591 = vmul.f32 %v3590, 1.442695
    %v3592 = vpow.pop %v3591
    %v3593 = vadd.f32 %v3592, 1.0
    %v3594 = vrcp.pop %v3593
    %v3595 = vmul.f32 1.0, %v3594
    %v3596 = vtanh.pop %v3589
    %v3597 = vld [vmem:[#allocation4] sm:$0xff]
    %3599 = vrot.lane.b32.xlu0 %v3597, 32
    %v3600 = vpop.permute.xlu0 %3599
    %v3602 = vmul.f32 %v3595, %v3600
    %3604 = vrot.lane.b32.xlu0 %v3596, 64
    %v3605 = vpop.permute.xlu0 %3604
    %v3607 = vmul.f32 %v3595, %v3605
    %3609 = vrot.lane.b32.xlu0 %v3607, 32
    %v3610 = vpop.permute.xlu0 %3609
    %v3612 = vadd.f32 %v3602, %v3610
    %v3613 = vtanh.pop %v3612
    %3615 = vrot.lane.b32.xlu0 %v3613, 64
    %v3616 = vpop.permute.xlu0 %3615
    %v3618 = vmul.f32 %v3595, %v3616
    %3620 = vrot.lane.b32.xlu0 %v3612, 96
    %v3621 = vpop.permute.xlu0 %3620
    %3623 = vst.msk [vmem:[#allocation4] sm:$0xff] %vm266, %v3621
    %3625 = vrot.lane.b32.xlu0 %v3618, 32
    %v3626 = vpop.permute.xlu0 %3625
    %3628 = vst.msk [vmem:[#allocation3] sm:$0xff] %vm266, %v3626
    %v3629 = vld [vmem:[#allocation2] sm:$0xff]
    %v3630 = vld [vmem:[#allocation3] sm:$0xff]
    %v3631 = vpack.c.bf16 %v3630, %v3630
    %v3633 = vsel %vm266, %v3631, 0
    %3635 = vmatprep.subr.bf16.mxu0 0
    %3636 = vmatpush1.bf16.msra.mxu0 %v3026
    %3637 = vmatprep.subr.bf16.mxu0 0
    %3638 = vmatpush1.bf16.msra.mxu0 %v3027
    %3639 = vmatprep.subr.bf16.mxu0 0
    %3640 = vmatpush1.bf16.msra.mxu0 0
    %3641 = vmatprep.subr.bf16.mxu0 0
    %3642 = vmatpush1.bf16.msra.mxu0 0
    %3643 = vmatprep.subr.bf16.mxu0 0
    %3644 = vmatpush1.bf16.msra.mxu0 0
    %3645 = vmatprep.subr.bf16.mxu0 0
    %3646 = vmatpush1.bf16.msra.mxu0 0
    %3647 = vmatprep.subr.bf16.mxu0 0
    %3648 = vmatpush1.bf16.msra.mxu0 0
    %3649 = vmatprep.subr.bf16.mxu0 0
    %3650 = vmatpush1.bf16.msra.mxu0 0
    %3651 = vmatprep.subr.bf16.mxu0 0
    %3652 = vmatpush1.bf16.msra.mxu0 0
    %3653 = vmatprep.subr.bf16.mxu0 0
    %3654 = vmatpush1.bf16.msra.mxu0 0
    %3655 = vmatprep.subr.bf16.mxu0 0
    %3656 = vmatpush1.bf16.msra.mxu0 0
    %3657 = vmatprep.subr.bf16.mxu0 0
    %3658 = vmatpush1.bf16.msra.mxu0 0
    %3659 = vmatprep.subr.bf16.mxu0 0
    %3660 = vmatpush1.bf16.msra.mxu0 0
    %3661 = vmatprep.subr.bf16.mxu0 0
    %3662 = vmatpush1.bf16.msra.mxu0 0
    %3663 = vmatprep.subr.bf16.mxu0 0
    %3664 = vmatpush1.bf16.msra.mxu0 0
    %3665 = vmatprep.subr.bf16.mxu0 0
    %3666 = vmatpush1.bf16.msra.mxu0 0
    %3667 = vmatprep.mubr.bf16.mxu0 0
    %3668 = vmatmul.mubr.bf16.gmra.mrb[0].mxu0 %v3633
    %v3669 = vpop.f32.mrb[0].mxu0
    %v3670 = vadd.f32 0.0, %v3669
    %v3671 = vpop.f32.mrb[0].mxu0
    %v3672 = vpop.f32.mrb[0].mxu0
    %v3673 = vpop.f32.mrb[0].mxu0
    %3674 = vdwg.mxu0
    %v3675 = vadd.f32 %v3629, %v3670
    %v3676 = vxor.u32 %v3675, 2147483648
    %v3677 = vmul.f32 %v3676, 1.442695
    %v3678 = vpow.pop %v3677
    %v3679 = vadd.f32 %v3678, 1.0
    %v3680 = vrcp.pop %v3679
    %v3681 = vmul.f32 1.0, %v3680
    %v3682 = vtanh.pop %v3675
    %v3683 = vld [vmem:[#allocation4] sm:$0xff]
    %3685 = vrot.lane.b32.xlu0 %v3683, 32
    %v3686 = vpop.permute.xlu0 %3685
    %v3688 = vmul.f32 %v3681, %v3686
    %3690 = vrot.lane.b32.xlu0 %v3682, 64
    %v3691 = vpop.permute.xlu0 %3690
    %v3693 = vmul.f32 %v3681, %v3691
    %3695 = vrot.lane.b32.xlu0 %v3693, 32
    %v3696 = vpop.permute.xlu0 %3695
    %v3698 = vadd.f32 %v3688, %v3696
    %v3699 = vtanh.pop %v3698
    %3701 = vrot.lane.b32.xlu0 %v3699, 64
    %v3702 = vpop.permute.xlu0 %3701
    %v3704 = vmul.f32 %v3681, %v3702
    %3706 = vrot.lane.b32.xlu0 %v3698, 96
    %v3707 = vpop.permute.xlu0 %3706
    %3709 = vst.msk [vmem:[#allocation4] sm:$0xff] %vm266, %v3707
    %3711 = vrot.lane.b32.xlu0 %v3704, 32
    %v3712 = vpop.permute.xlu0 %3711
    %3714 = vst.msk [vmem:[#allocation3] sm:$0xff] %vm266, %v3712
    %v3715 = vld [vmem:[#allocation3] sm:$0xff]
    %v3716 = vpack.c.bf16 %v2775, %v2775
    %v3717 = vld [vmem:[#allocation12] sm:$0xf]
    %v3718 = vld [vmem:[#allocation12 + $0x4] sm:$0xf]
    %v3719 = vld [vmem:[#allocation12 + $0x8] sm:$0xf]
    %v3720 = vld [vmem:[#allocation12 + $0xc] sm:$0xf]
    %v3721 = vpack.c.bf16 %v3715, %v3715
    %v3722 = vld [vmem:[#allocation14] sm:$0xf]
    %v3723 = vld [vmem:[#allocation14 + $0x4] sm:$0xf]
    %v3724 = vld [vmem:[#allocation14 + $0x8] sm:$0xf]
    %v3725 = vld [vmem:[#allocation14 + $0xc] sm:$0xf]
    %v3730 = vunpack.c.l.b16 %v3722
    %v3731 = vunpack.c.l.b16 %v3723
    %v3732 = vunpack.c.l.b16 %v3724
    %v3733 = vunpack.c.l.b16 %v3725
    %v3734 = vpack.c.b16 %v3731, %v3730
    %v3735 = vpack.c.b16 %v3733, %v3732
    %v3739 = vsel %vm266, %v3721, 0
    %3741 = vmatprep.subr.bf16.mxu0 0
    %3742 = vmatpush1.bf16.msra.mxu0 %v3734
    %3743 = vmatprep.subr.bf16.mxu0 0
    %3744 = vmatpush1.bf16.msra.mxu0 %v3735
    %3745 = vmatprep.subr.bf16.mxu0 0
    %3746 = vmatpush1.bf16.msra.mxu0 0
    %3747 = vmatprep.subr.bf16.mxu0 0
    %3748 = vmatpush1.bf16.msra.mxu0 0
    %3749 = vmatprep.subr.bf16.mxu0 0
    %3750 = vmatpush1.bf16.msra.mxu0 0
    %3751 = vmatprep.subr.bf16.mxu0 0
    %3752 = vmatpush1.bf16.msra.mxu0 0
    %3753 = vmatprep.subr.bf16.mxu0 0
    %3754 = vmatpush1.bf16.msra.mxu0 0
    %3755 = vmatprep.subr.bf16.mxu0 0
    %3756 = vmatpush1.bf16.msra.mxu0 0
    %3757 = vmatprep.subr.bf16.mxu0 0
    %3758 = vmatpush1.bf16.msra.mxu0 0
    %3759 = vmatprep.subr.bf16.mxu0 0
    %3760 = vmatpush1.bf16.msra.mxu0 0
    %3761 = vmatprep.subr.bf16.mxu0 0
    %3762 = vmatpush1.bf16.msra.mxu0 0
    %3763 = vmatprep.subr.bf16.mxu0 0
    %3764 = vmatpush1.bf16.msra.mxu0 0
    %3765 = vmatprep.subr.bf16.mxu0 0
    %3766 = vmatpush1.bf16.msra.mxu0 0
    %3767 = vmatprep.subr.bf16.mxu0 0
    %3768 = vmatpush1.bf16.msra.mxu0 0
    %3769 = vmatprep.subr.bf16.mxu0 0
    %3770 = vmatpush1.bf16.msra.mxu0 0
    %3771 = vmatprep.subr.bf16.mxu0 0
    %3772 = vmatpush1.bf16.msra.mxu0 0
    %3773 = vmatprep.mubr.bf16.mxu0 0
    %3774 = vmatmul.mubr.bf16.gmra.mrb[0].mxu0 %v3739
    %v3775 = vpop.f32.mrb[0].mxu0
    %v3776 = vadd.f32 0.0, %v3775
    %v3777 = vpop.f32.mrb[0].mxu0
    %v3778 = vpop.f32.mrb[0].mxu0
    %v3779 = vpop.f32.mrb[0].mxu0
    %3780 = vdwg.mxu0
    %v3785 = vunpack.c.l.b16 %v3717
    %v3786 = vunpack.c.l.b16 %v3718
    %v3787 = vunpack.c.l.b16 %v3719
    %v3788 = vunpack.c.l.b16 %v3720
    %v3789 = vpack.c.b16 %v3786, %v3785
    %v3790 = vpack.c.b16 %v3788, %v3787
    %v3794 = vsel %vm266, %v3716, 0
    %3796 = vmatprep.subr.bf16.mxu0 0
    %3797 = vmatpush1.bf16.msra.mxu0 %v3789
    %3798 = vmatprep.subr.bf16.mxu0 0
    %3799 = vmatpush1.bf16.msra.mxu0 %v3790
    %3800 = vmatprep.subr.bf16.mxu0 0
    %3801 = vmatpush1.bf16.msra.mxu0 0
    %3802 = vmatprep.subr.bf16.mxu0 0
    %3803 = vmatpush1.bf16.msra.mxu0 0
    %3804 = vmatprep.subr.bf16.mxu0 0
    %3805 = vmatpush1.bf16.msra.mxu0 0
    %3806 = vmatprep.subr.bf16.mxu0 0
    %3807 = vmatpush1.bf16.msra.mxu0 0
    %3808 = vmatprep.subr.bf16.mxu0 0
    %3809 = vmatpush1.bf16.msra.mxu0 0
    %3810 = vmatprep.subr.bf16.mxu0 0
    %3811 = vmatpush1.bf16.msra.mxu0 0
    %3812 = vmatprep.subr.bf16.mxu0 0
    %3813 = vmatpush1.bf16.msra.mxu0 0
    %3814 = vmatprep.subr.bf16.mxu0 0
    %3815 = vmatpush1.bf16.msra.mxu0 0
    %3816 = vmatprep.subr.bf16.mxu0 0
    %3817 = vmatpush1.bf16.msra.mxu0 0
    %3818 = vmatprep.subr.bf16.mxu0 0
    %3819 = vmatpush1.bf16.msra.mxu0 0
    %3820 = vmatprep.subr.bf16.mxu0 0
    %3821 = vmatpush1.bf16.msra.mxu0 0
    %3822 = vmatprep.subr.bf16.mxu0 0
    %3823 = vmatpush1.bf16.msra.mxu0 0
    %3824 = vmatprep.subr.bf16.mxu0 0
    %3825 = vmatpush1.bf16.msra.mxu0 0
    %3826 = vmatprep.subr.bf16.mxu0 0
    %3827 = vmatpush1.bf16.msra.mxu0 0
    %3828 = vmatprep.mubr.bf16.mxu0 0
    %3829 = vmatmul.mubr.bf16.gmra.mrb[0].mxu0 %v3794
    %v3830 = vpop.f32.mrb[0].mxu0
    %v3831 = vadd.f32 %v3776, %v3830
    %v3832 = vpop.f32.mrb[0].mxu0
    %v3833 = vpop.f32.mrb[0].mxu0
    %v3834 = vpop.f32.mrb[0].mxu0
    %3835 = vdwg.mxu0
    %v3836 = vld [vmem:[#allocation15] sm:$0x1]
    %v3838 = vlaneseq
    %v3839 = vshrl.u32 %v3838, 7
    %v3840 = vsub.s32 0, %v3839
    %v3841 = vrot.slane %v3836, %v3840
    %v3843 = vadd.f32 %v3831, %v3841
    %3844 = vst [vmem:[%s18] sm:$0xff] %v3843
    // Predicated region
    $region98: #{icu_model_forward.1} parent=1 // pred_check
      _
    $region99: #{icu_model_forward.1} parent=1 // pred_check_branch
      %3846 = sbr.rel (0) target = $region101
    $region100: #{icu_model_forward.1} parent=1 // pred_region
      _
    $region101: #{icu_model_forward.1} parent=1 // pred_fallthru
      _
    // Predicated region
    $region102: #{icu_model_forward.1} parent=1 // pred_check
      _
    $region103: #{icu_model_forward.1} parent=1 // pred_check_branch
      %3848 = sbr.rel (0) target = $region105
    $region104: #{icu_model_forward.1} parent=1 // pred_region
      _
    $region105: #{icu_model_forward.1} parent=1 // pred_fallthru
      _
    %3849 = vsyncpa [#allocation8], 1
    %3850 = vsyncpa [#allocation10], 1
    %3851 = vsyncpa [#allocation13], 1
    %3852 = vsyncpa [#allocation16], 1

</llo_original>
